<compile_context>
chip_gen: v6e
topology: v6e:2x2x1
jax: 0.10.0
libtpu: 0.0.40
codegen_flags: <defaults>
</compile_context>

<pallas_src>
import jax
import jax.numpy as jnp
from jax.experimental import pallas as pl
from jax.experimental.pallas import tpu as pltpu


def _linear_t_kernel(x_ref, wt_ref, b_ref, o_ref):
    # x_ref : (M, K)   f32   (all tokens, resident across grid steps)
    # wt_ref: (TC, K)  f32   (this step's slice of the transposed weight)
    # b_ref : (TC, 1)  f32
    # o_ref : (TC, M)  f32   (output already in channel-major order)
    x_bf = x_ref[...].astype(jnp.bfloat16)
    w_bf = wt_ref[...].astype(jnp.bfloat16)
    # out[c, m] = sum_k wt[c, k] * x[m, k]   (rhs-transposed contraction, MXU)
    acc = jax.lax.dot_general(
        w_bf,
        x_bf,
        dimension_numbers=(((1,), (1,)), ((), ())),
        preferred_element_type=jnp.float32,
    )
    o_ref[...] = (acc + b_ref[...]).astype(o_ref.dtype)


def linear_permute(x, w, b):
    """x: (N, H, W, Cin) f32, w: (Cin, Cout), b: (Cout,). Returns (N, Cout, H, W)."""
    n, h, wd, cin = x.shape
    cout = w.shape[1]
    m = n * h * wd

    x2d = x.reshape(m, cin)          # (M, Cin)
    wt = w.T                         # (Cout, Cin) — one-time layout prep of the weight
    b2d = b.reshape(cout, 1)         # (Cout, 1)

    tc = min(128, cout)
    assert cout % tc == 0, "Cout must be a multiple of the Cout tile"
    grid = (cout // tc,)

    out_t = pl.pallas_call(
        _linear_t_kernel,
        out_shape=jax.ShapeDtypeStruct((cout, m), x.dtype),
        grid=grid,
        in_specs=[
            pl.BlockSpec((m, cin), lambda i: (0, 0)),    # x: full block, fetched once
            pl.BlockSpec((tc, cin), lambda i: (i, 0)),   # weight row-tile per step
            pl.BlockSpec((tc, 1), lambda i: (i, 0)),     # bias tile per step
        ],
        out_specs=pl.BlockSpec((tc, m), lambda i: (i, 0)),
        compiler_params=pltpu.CompilerParams(
            dimension_semantics=("parallel",),           # v7x: split Cout tiles across TCs
        ),
    )(x2d, wt, b2d)

    # (Cout, N*H*W) -> (N, Cout, H, W).  For N == 1 this is a pure metadata
    # reshape (the transpose only moves a degenerate axis).
    return jnp.transpose(out_t.reshape(cout, n, h, wd), (1, 0, 2, 3))


if __name__ == "__main__":
    # Shapes fixed by the PyTorch module: x62: [1, 28, 28, 1024], Linear(1024 -> 256)
    N, H, W, CIN, COUT = 1, 28, 28, 1024, 256

    key = jax.random.PRNGKey(0)
    kx, kw, kb = jax.random.split(key, 3)

    x = jax.random.normal(kx, (N, H, W, CIN), dtype=jnp.float32)
    # Deterministic parameter init (synthetic; not a checkpoint load).
    weight = jax.random.normal(kw, (CIN, COUT), dtype=jnp.float32) * (1.0 / CIN**0.5)
    bias = jax.random.normal(kb, (COUT,), dtype=jnp.float32) * 0.01

    out = linear_permute(x, weight, bias)
    out = jax.block_until_ready(out)

    # Pure-JAX f32 reference check (bf16 MXU operands => loosened tolerance).
    ref = jnp.transpose(jnp.einsum("nhwc,cd->nhwd", x, weight) + bias, (0, 3, 1, 2))
    assert out.shape == (N, COUT, H, W), out.shape
    assert jnp.allclose(out, ref, atol=2e-2, rtol=2e-2)

    print("KERNEL_OK")
</pallas_src>

<mosaic_0001>
module attributes {stable_mosaic.version = 11 : i64} {
  func.func @_linear_t_kernel(%arg0: i32, %arg1: memref<784x1024xf32, #tpu.memory_space<vmem>>, %arg2: memref<128x1024xf32, #tpu.memory_space<vmem>>, %arg3: memref<128x1xf32, #tpu.memory_space<vmem>>, %arg4: memref<128x784xf32, #tpu.memory_space<vmem>>) attributes {dimension_semantics = [#tpu.dimension_semantics<parallel>], iteration_bounds = array<i64: 2>, scalar_prefetch = 0 : i64, scratch_operands = 0 : i64, tpu.core_type = #tpu.core_type<tc>, window_params = [{pipeline_mode = #tpu.pipeline_mode<synchronous>, transform_indices = @transform_0, window_bounds = array<i64: 784, 1024>}, {transform_indices = @transform_1, window_bounds = array<i64: 128, 1024>}, {transform_indices = @transform_2, window_bounds = array<i64: 128, 1>}, {transform_indices = @transform_3, window_bounds = array<i64: 128, 784>}]} {
    %c0 = arith.constant 0 : index
    %c0_0 = arith.constant 0 : index
    %0 = vector.load %arg1[%c0, %c0_0] : memref<784x1024xf32, #tpu.memory_space<vmem>>, vector<784x1024xf32>
    %1 = arith.truncf %0 : vector<784x1024xf32> to vector<784x1024xbf16>
    %c0_1 = arith.constant 0 : index
    %c0_2 = arith.constant 0 : index
    %2 = vector.load %arg2[%c0_1, %c0_2] : memref<128x1024xf32, #tpu.memory_space<vmem>>, vector<128x1024xf32>
    %3 = arith.truncf %2 : vector<128x1024xf32> to vector<128x1024xbf16>
    %cst = arith.constant dense<0.000000e+00> : vector<128x784xf32>
    %4 = tpu.matmul %3, %1, %cst {dimension_numbers = #tpu.dot_dimension_numbers<[1], [1], [0], [0], [0, 0, 1, 0], [], []>} : vector<128x1024xbf16>, vector<784x1024xbf16>, vector<128x784xf32> -> vector<128x784xf32>
    %c0_3 = arith.constant 0 : index
    %c0_4 = arith.constant 0 : index
    %5 = vector.load %arg3[%c0_3, %c0_4] : memref<128x1xf32, #tpu.memory_space<vmem>>, vector<128x1xf32>
    %6 = vector.broadcast %5 : vector<128x1xf32> to vector<128x784xf32>
    %7 = arith.addf %4, %6 : vector<128x784xf32>
    %c0_5 = arith.constant 0 : index
    %c0_6 = arith.constant 0 : index
    %8 = vector.load %arg4[%c0_5, %c0_6] : memref<128x784xf32, #tpu.memory_space<vmem>>, vector<128x784xf32>
    tpu.vector_store %arg4[%c0_5, %c0_6], %7 {strides = array<i32>} : memref<128x784xf32, #tpu.memory_space<vmem>>, vector<128x784xf32>,
    return
  }
  func.func @transform_0(%arg0: i32) -> (i32, i32) {
    %c0_i32 = arith.constant 0 : i32
    %c0_i32_0 = arith.constant 0 : i32
    %c0_i32_1 = arith.constant 0 : i32
    return %c0_i32, %c0_i32_0 : i32, i32
  }
  func.func @transform_1(%arg0: i32) -> (i32, i32) {
    %c0_i32 = arith.constant 0 : i32
    %c0_i32_0 = arith.constant 0 : i32
    return %arg0, %c0_i32 : i32, i32
  }
  func.func @transform_2(%arg0: i32) -> (i32, i32) {
    %c0_i32 = arith.constant 0 : i32
    %c0_i32_0 = arith.constant 0 : i32
    return %arg0, %c0_i32 : i32, i32
  }
  func.func @transform_3(%arg0: i32) -> (i32, i32) {
    %c0_i32 = arith.constant 0 : i32
    %c0_i32_0 = arith.constant 0 : i32
    return %arg0, %c0_i32 : i32, i32
  }
}

</mosaic_0001>

<llo_original>
// kernel: tpu_custom_call.1
$region0: #{tpu_custom_call.1}
  #allocation0 [shape = 'u32[]', space=smem, size = 0x4, offset = 0x4, fixed_abs, tag = 'smem constant byte address 0x4 - core index']
  #allocation1 [shape = 'u32[144,128]{1,0:T(1,128)}', space=vmem, size = 0x12000, scoped, tag = 'internal scratch']
  %s0 = inlined_call_operand.hbm [shape: f32[784,1024], index: 0, kind: input, shape index: {}]
  %s1 = inlined_call_operand.hbm [shape: f32[256,1024], index: 1, kind: input, shape index: {}]
  %s2 = inlined_call_operand.vmem [shape: f32[256,1], index: 2, kind: input, shape index: {}]
  %s3 = inlined_call_operand.vmem [shape: f32[256,784], index: 3, kind: output, shape index: {}]
  %s4 = sld [smem:[#allocation0]]
  $region53: #{tpu_custom_call.1} parent=0
    _
  %s6 = ssub.s32 1, %s4
  %s7 = scalar_select 0, %s6, %s4
  $region1: #{tpu_custom_call.1} parent=0
    #allocation2 [shape = 'u8[3211264]{0}', space=vmem, size = 0x310000, scoped, tag = 'input window, operand 0, single buffered']
    #allocation3 [shape = 's32[2]{0}', space=sflag, size = 0x8, scoped, tag = 'scoped memory for tpu_custom_call.1']
    #allocation4 [shape = 'u8[1048576]{0}', space=vmem, size = 0x100000, scoped, tag = 'input window, operand 1']
    #allocation5 [shape = 's32[2]{0}', space=sflag, size = 0x8, scoped, tag = 'scoped memory for tpu_custom_call.1']
    %8 = vsyncpa [#allocation3], 0
    %9 = vsyncpa [#allocation5], 0
    %s10 = scalar_lea.sflag [#allocation5], 1
    %11 = vsyncpa %s10, 0
    loop: start=0, step=1, limit=4
    $region2: #{tpu_custom_call.1} parent=1 // loop_pre_header
      _
    $region3: #{tpu_custom_call.1} parent=1 // loop_header
      %s13 = sphi 0, %s17
      %p14 = scmp.ge.s32.totalorder %s13, 4
      %s21 = sphi 0, %s21
      %s23 = sphi 0, %s21
      %s24 = sphi 0, %s23
      %s38 = sphi 0, %s24
      %s44 = sphi 0, %s46
      %s47 = sphi 0, %s44
      %s48 = sphi 0, %s47
      %s64 = sphi 0, %s48
      %s70 = sphi 0, %s72
      %s73 = sphi 0, %s70
      %s74 = sphi 0, %s73
      %s90 = sphi 0, %s74
      %s96 = sphi 0, %s98
      %s99 = sphi 0, %s96
      %s100 = sphi 0, %s99
      %s116 = sphi 0, %s100
    $region4: #{tpu_custom_call.1} parent=1 // loop_header_branch
      %16 = sbr.rel (%p14) target = $region8
    $region5: #{tpu_custom_call.1} parent=1 // loop_body
      %s18 = ssub.s32 %s13, 1
      %s19 = ssub.s32 %s13, 2
      %s20 = sadd.s32 %s13, 1
      %s22 = sadd.s32 %s21, 1
      %p25 = scmp.eq.s32.totalorder %s13, 1
      %p26 = scmp.ne.s32.totalorder %s21, %s23
      %p27 = scmp.eq.s32.totalorder %s13, 0
      %p28 = por %p26, %p27
      %p29 = scmp.ne.s32.totalorder %s21, %s23
      %p30 = scmp.eq.s32.totalorder %s18, 1
      %p31 = por %p29, %p30
      %p32 = scmp.ne.s32.totalorder %s23, %s24
      %p33 = scmp.eq.s32.totalorder %s18, 0
      %p34 = por %p32, %p33
      %p35 = scmp.ne.s32.totalorder %s23, %s24
      %p36 = scmp.eq.s32.totalorder %s19, 1
      %p37 = por %p35, %p36
      %p39 = scmp.ne.s32.totalorder %s24, %s38
      %p40 = scmp.eq.s32.totalorder %s19, 0
      %p41 = por %p39, %p40
      %s42 = ssub.s32 %s13, %s20
      %p43 = scmp.eq.s32.totalorder %s42, 0
      %s45 = sadd.s32 %s44, 1
      %s46 = scalar_select %p43, %s44, %s45
      %p49 = pneg %p43
      %p50 = scmp.eq.s32.totalorder %s13, 1
      %p51 = por %p49, %p50
      %p52 = scmp.ne.s32.totalorder %s44, %s47
      %p53 = scmp.eq.s32.totalorder %s13, 0
      %p54 = por %p52, %p53
      %p55 = scmp.ne.s32.totalorder %s44, %s47
      %p56 = scmp.eq.s32.totalorder %s18, 1
      %p57 = por %p55, %p56
      %p58 = scmp.ne.s32.totalorder %s47, %s48
      %p59 = scmp.eq.s32.totalorder %s18, 0
      %p60 = por %p58, %p59
      %p61 = scmp.ne.s32.totalorder %s47, %s48
      %p62 = scmp.eq.s32.totalorder %s19, 1
      %p63 = por %p61, %p62
      %p65 = scmp.ne.s32.totalorder %s48, %s64
      %p66 = scmp.eq.s32.totalorder %s19, 0
      %p67 = por %p65, %p66
      %s68 = ssub.s32 %s13, %s20
      %p69 = scmp.eq.s32.totalorder %s68, 0
      %s71 = sadd.s32 %s70, 1
      %s72 = scalar_select %p69, %s70, %s71
      %p75 = pneg %p69
      %p76 = scmp.eq.s32.totalorder %s13, 1
      %p77 = por %p75, %p76
      %p78 = scmp.ne.s32.totalorder %s70, %s73
      %p79 = scmp.eq.s32.totalorder %s13, 0
      %p80 = por %p78, %p79
      %p81 = scmp.ne.s32.totalorder %s70, %s73
      %p82 = scmp.eq.s32.totalorder %s18, 1
      %p83 = por %p81, %p82
      %p84 = scmp.ne.s32.totalorder %s73, %s74
      %p85 = scmp.eq.s32.totalorder %s18, 0
      %p86 = por %p84, %p85
      %p87 = scmp.ne.s32.totalorder %s73, %s74
      %p88 = scmp.eq.s32.totalorder %s19, 1
      %p89 = por %p87, %p88
      %p91 = scmp.ne.s32.totalorder %s74, %s90
      %p92 = scmp.eq.s32.totalorder %s19, 0
      %p93 = por %p91, %p92
      %s94 = ssub.s32 %s13, %s20
      %p95 = scmp.eq.s32.totalorder %s94, 0
      %s97 = sadd.s32 %s96, 1
      %s98 = scalar_select %p95, %s96, %s97
      %p101 = pneg %p95
      %p102 = scmp.eq.s32.totalorder %s13, 1
      %p103 = por %p101, %p102
      %p104 = scmp.ne.s32.totalorder %s96, %s99
      %p105 = scmp.eq.s32.totalorder %s13, 0
      %p106 = por %p104, %p105
      %p107 = scmp.ne.s32.totalorder %s96, %s99
      %p108 = scmp.eq.s32.totalorder %s18, 1
      %p109 = por %p107, %p108
      %p110 = scmp.ne.s32.totalorder %s99, %s100
      %p111 = scmp.eq.s32.totalorder %s18, 0
      %p112 = por %p110, %p111
      %p113 = scmp.ne.s32.totalorder %s99, %s100
      %p114 = scmp.eq.s32.totalorder %s19, 1
      %p115 = por %p113, %p114
      %p117 = scmp.ne.s32.totalorder %s100, %s116
      %p118 = scmp.eq.s32.totalorder %s19, 0
      %p119 = por %p117, %p118
      %p120 = scmp.le.s32.totalorder 1, %s13
      %p121 = scmp.lt.s32.totalorder %s13, 3
      %p122 = pnand %p120, %p121
      %p123 = pneg %p122
      // Predicated region
      $region9: #{tpu_custom_call.1} parent=5 // pred_check
        _
      $region10: #{tpu_custom_call.1} parent=5 // pred_check_branch
        %125 = sbr.rel (%p122) target = $region12
      $region11: #{tpu_custom_call.1} parent=5 // pred_region
        %s126 = ssub.s32 %s13, 1
        // Predicated region
        $region13: #{tpu_custom_call.1} parent=11 // pred_check
          %p127 = pneg %p34
        $region14: #{tpu_custom_call.1} parent=11 // pred_check_branch
          %129 = sbr.rel (%p127) target = $region16
        $region15: #{tpu_custom_call.1} parent=11 // pred_region
          %s131 = ssub.s32 100352, 100352
          %132 = vsyncadd [#allocation3], %s131
          %s133 = sshll.u32 [#allocation2], 4
          %s134 = int_to_ptr.vmem [resolvable:$true] %s133
          %139 = dma.hbm_to_vmem [thread:$0]  %s0, 100352, %s134, [#allocation3], 1024, 1024, 64
        $region16: #{tpu_custom_call.1} parent=11 // pred_fallthru
          _
      $region12: #{tpu_custom_call.1} parent=5 // pred_fallthru
        _
      %p140 = scmp.lt.s32.totalorder %s13, 2
      // Predicated region
      $region17: #{tpu_custom_call.1} parent=5 // pred_check
        %p141 = pneg %p140
      $region18: #{tpu_custom_call.1} parent=5 // pred_check_branch
        %143 = sbr.rel (%p141) target = $region20
      $region19: #{tpu_custom_call.1} parent=5 // pred_region
        // Predicated region
        $region21: #{tpu_custom_call.1} parent=19 // pred_check
          %p144 = pneg %p54
        $region22: #{tpu_custom_call.1} parent=19 // pred_check_branch
          %146 = sbr.rel (%p144) target = $region24
        $region23: #{tpu_custom_call.1} parent=19 // pred_region
          %s147 = sand.u32 %s44, 1
          %s148 = scalar_lea.sflag [#allocation5], %s147
          %s149 = sand.u32 %s44, 1
          %s150 = smul.addr %s149, 1024
          %s151 = scalar_lea.vmem [#allocation4], %s150
          %s152 = smul.u32 16, %s13
          %s154 = ssub.s32 16384, 16384
          %155 = vsyncadd %s148, %s154
          %s156 = smul.addr %s152, 8
          %s157 = smul.addr %s156, 128
          %s158 = scalar_lea.hbm %s1, %s157
          %s159 = sshll.u32 %s151, 4
          %s160 = int_to_ptr.vmem [resolvable:$true] %s159
          %165 = dma.hbm_to_vmem [thread:$0]  %s158, 16384, %s160, %s148, 1024, 1024, 64
        $region24: #{tpu_custom_call.1} parent=19 // pred_fallthru
          _
        // Predicated region
        $region25: #{tpu_custom_call.1} parent=19 // pred_check
          %p166 = pneg %p80
        $region26: #{tpu_custom_call.1} parent=19 // pred_check_branch
          %168 = sbr.rel (%p166) target = $region28
        $region27: #{tpu_custom_call.1} parent=19 // pred_region
          %s169 = smul.u32 16, %s13
          %p170 = scmp.lt.s32.totalorder %s169, 31
          %s171 = scalar_select %p170, %s169, 31
          %s172 = smul.addr %s171, 8
          %s173 = scalar_lea.vmem %s2, %s172
          %s174 = smul.u32 16, %s13
        $region28: #{tpu_custom_call.1} parent=19 // pred_fallthru
          _
      $region20: #{tpu_custom_call.1} parent=5 // pred_fallthru
        _
      %p175 = scmp.le.s32.totalorder 1, %s13
      %p176 = scmp.lt.s32.totalorder %s13, 3
      %p177 = pnand %p175, %p176
      %p178 = pneg %p177
      // Predicated region
      $region29: #{tpu_custom_call.1} parent=5 // pred_check
        _
      $region30: #{tpu_custom_call.1} parent=5 // pred_check_branch
        %180 = sbr.rel (%p177) target = $region32
      $region31: #{tpu_custom_call.1} parent=5 // pred_region
        %s181 = ssub.s32 %s13, 1
        // Predicated region
        $region33: #{tpu_custom_call.1} parent=31 // pred_check
          %p182 = pneg %p34
        $region34: #{tpu_custom_call.1} parent=31 // pred_check_branch
          %184 = sbr.rel (%p182) target = $region36
        $region35: #{tpu_custom_call.1} parent=31 // pred_region
          %185 = dma.done [#allocation3], 100352
        $region36: #{tpu_custom_call.1} parent=31 // pred_fallthru
          _
        %s186 = sand.u32 %s47, 1
        %s187 = scalar_lea.sflag [#allocation5], %s186
        %s188 = sand.u32 %s47, 1
        %s189 = smul.addr %s188, 1024
        %s190 = scalar_lea.vmem [#allocation4], %s189
        // Predicated region
        $region37: #{tpu_custom_call.1} parent=31 // pred_check
          %p191 = pneg %p60
        $region38: #{tpu_custom_call.1} parent=31 // pred_check_branch
          %193 = sbr.rel (%p191) target = $region40
        $region39: #{tpu_custom_call.1} parent=31 // pred_region
          %194 = dma.done %s187, 16384
        $region40: #{tpu_custom_call.1} parent=31 // pred_fallthru
          _
        %p195 = pneg %p34
        %p196 = pneg %p31
        %s197 = sand.u32 %s47, 1
        %s198 = scalar_lea.sflag [#allocation5], %s197
        %s199 = sand.u32 %s47, 1
        %s200 = smul.addr %s199, 1024
        %s201 = scalar_lea.vmem [#allocation4], %s200
        %p202 = pneg %p60
        %p203 = pneg %p57
        %s204 = smul.u32 16, %s18
        %p205 = scmp.lt.s32.totalorder %s204, 31
        %s206 = scalar_select %p205, %s204, 31
        %s207 = smul.addr %s206, 8
        %s208 = scalar_lea.vmem %s2, %s207
        %p209 = pneg %p86
        %p210 = pneg %p83
        %p211 = pneg %p112
        %p212 = pneg %p109
        %s213 = smul.u32 16, %s18
        %p214 = scmp.lt.s32.totalorder %s213, 31
        %s215 = scalar_select %p214, %s213, 31
        %s216 = smul.addr %s215, 7
        %s217 = smul.addr %s216, 8
        %s218 = scalar_lea.vmem %s3, %s217
        %s219 = smul.u32 16, %s18
        %s220 = smul.u32 16, %s18
        %p221 = scmp.lt.s32.totalorder %s220, 31
        %s222 = scalar_select %p221, %s220, 31
        %s223 = smul.addr %s222, 8
        %s224 = scalar_lea.vmem %s2, %s223
        %s225 = smul.u32 16, %s18
        %s226 = smul.u32 16, %s18
        %p227 = scmp.lt.s32.totalorder %s226, 31
        %s228 = scalar_select %p227, %s226, 31
        %s229 = smul.addr %s228, 7
        %s230 = smul.addr %s229, 8
        %s231 = scalar_lea.vmem %s3, %s230
        %s232 = smul.u32 16, %s18
        %v234 = vld [vmem:[#allocation2] sm:$0xff]
        %v235 = vld [vmem:[#allocation2 + $0x8] sm:$0xff]
        %v236 = vld [vmem:[#allocation2 + $0x10] sm:$0xff]
        %v237 = vld [vmem:[#allocation2 + $0x18] sm:$0xff]
        %v238 = vld [vmem:[#allocation2 + $0x20] sm:$0xff]
        %v239 = vld [vmem:[#allocation2 + $0x28] sm:$0xff]
        %v240 = vld [vmem:[#allocation2 + $0x30] sm:$0xff]
        %v241 = vld [vmem:[#allocation2 + $0x38] sm:$0xff]
        %v242 = vld [vmem:[#allocation2 + $0x40] sm:$0xff]
        %v243 = vld [vmem:[#allocation2 + $0x48] sm:$0xff]
        %v244 = vld [vmem:[#allocation2 + $0x50] sm:$0xff]
        %v245 = vld [vmem:[#allocation2 + $0x58] sm:$0xff]
        %v246 = vld [vmem:[#allocation2 + $0x60] sm:$0xff]
        %v247 = vld [vmem:[#allocation2 + $0x68] sm:$0xff]
        %v248 = vld [vmem:[#allocation2 + $0x70] sm:$0xff]
        %v249 = vld [vmem:[#allocation2 + $0x78] sm:$0xff]
        %v250 = vld [vmem:[#allocation2 + $0x80] sm:$0xff]
        %v251 = vld [vmem:[#allocation2 + $0x88] sm:$0xff]
        %v252 = vld [vmem:[#allocation2 + $0x90] sm:$0xff]
        %v253 = vld [vmem:[#allocation2 + $0x98] sm:$0xff]
        %v254 = vld [vmem:[#allocation2 + $0xa0] sm:$0xff]
        %v255 = vld [vmem:[#allocation2 + $0xa8] sm:$0xff]
        %v256 = vld [vmem:[#allocation2 + $0xb0] sm:$0xff]
        %v257 = vld [vmem:[#allocation2 + $0xb8] sm:$0xff]
        %v258 = vld [vmem:[#allocation2 + $0xc0] sm:$0xff]
        %v259 = vld [vmem:[#allocation2 + $0xc8] sm:$0xff]
        %v260 = vld [vmem:[#allocation2 + $0xd0] sm:$0xff]
        %v261 = vld [vmem:[#allocation2 + $0xd8] sm:$0xff]
        %v262 = vld [vmem:[#allocation2 + $0xe0] sm:$0xff]
        %v263 = vld [vmem:[#allocation2 + $0xe8] sm:$0xff]
        %v264 = vld [vmem:[#allocation2 + $0xf0] sm:$0xff]
        %v265 = vld [vmem:[#allocation2 + $0xf8] sm:$0xff]
        %v266 = vld [vmem:[#allocation2 + $0x100] sm:$0xff]
        %v267 = vld [vmem:[#allocation2 + $0x108] sm:$0xff]
        %v268 = vld [vmem:[#allocation2 + $0x110] sm:$0xff]
        %v269 = vld [vmem:[#allocation2 + $0x118] sm:$0xff]
        %v270 = vld [vmem:[#allocation2 + $0x120] sm:$0xff]
        %v271 = vld [vmem:[#allocation2 + $0x128] sm:$0xff]
        %v272 = vld [vmem:[#allocation2 + $0x130] sm:$0xff]
        %v273 = vld [vmem:[#allocation2 + $0x138] sm:$0xff]
        %v274 = vld [vmem:[#allocation2 + $0x140] sm:$0xff]
        %v275 = vld [vmem:[#allocation2 + $0x148] sm:$0xff]
        %v276 = vld [vmem:[#allocation2 + $0x150] sm:$0xff]
        %v277 = vld [vmem:[#allocation2 + $0x158] sm:$0xff]
        %v278 = vld [vmem:[#allocation2 + $0x160] sm:$0xff]
        %v279 = vld [vmem:[#allocation2 + $0x168] sm:$0xff]
        %v280 = vld [vmem:[#allocation2 + $0x170] sm:$0xff]
        %v281 = vld [vmem:[#allocation2 + $0x178] sm:$0xff]
        %v282 = vld [vmem:[#allocation2 + $0x180] sm:$0xff]
        %v283 = vld [vmem:[#allocation2 + $0x188] sm:$0xff]
        %v284 = vld [vmem:[#allocation2 + $0x190] sm:$0xff]
        %v285 = vld [vmem:[#allocation2 + $0x198] sm:$0xff]
        %v286 = vld [vmem:[#allocation2 + $0x1a0] sm:$0xff]
        %v287 = vld [vmem:[#allocation2 + $0x1a8] sm:$0xff]
        %v288 = vld [vmem:[#allocation2 + $0x1b0] sm:$0xff]
        %v289 = vld [vmem:[#allocation2 + $0x1b8] sm:$0xff]
        %v290 = vld [vmem:[#allocation2 + $0x1c0] sm:$0xff]
        %v291 = vld [vmem:[#allocation2 + $0x1c8] sm:$0xff]
        %v292 = vld [vmem:[#allocation2 + $0x1d0] sm:$0xff]
        %v293 = vld [vmem:[#allocation2 + $0x1d8] sm:$0xff]
        %v294 = vld [vmem:[#allocation2 + $0x1e0] sm:$0xff]
        %v295 = vld [vmem:[#allocation2 + $0x1e8] sm:$0xff]
        %v296 = vld [vmem:[#allocation2 + $0x1f0] sm:$0xff]
        %v297 = vld [vmem:[#allocation2 + $0x1f8] sm:$0xff]
        %v298 = vld [vmem:[#allocation2 + $0x200] sm:$0xff]
        %v299 = vld [vmem:[#allocation2 + $0x208] sm:$0xff]
        %v300 = vld [vmem:[#allocation2 + $0x210] sm:$0xff]
        %v301 = vld [vmem:[#allocation2 + $0x218] sm:$0xff]
        %v302 = vld [vmem:[#allocation2 + $0x220] sm:$0xff]
        %v303 = vld [vmem:[#allocation2 + $0x228] sm:$0xff]
        %v304 = vld [vmem:[#allocation2 + $0x230] sm:$0xff]
        %v305 = vld [vmem:[#allocation2 + $0x238] sm:$0xff]
        %v306 = vld [vmem:[#allocation2 + $0x240] sm:$0xff]
        %v307 = vld [vmem:[#allocation2 + $0x248] sm:$0xff]
        %v308 = vld [vmem:[#allocation2 + $0x250] sm:$0xff]
        %v309 = vld [vmem:[#allocation2 + $0x258] sm:$0xff]
        %v310 = vld [vmem:[#allocation2 + $0x260] sm:$0xff]
        %v311 = vld [vmem:[#allocation2 + $0x268] sm:$0xff]
        %v312 = vld [vmem:[#allocation2 + $0x270] sm:$0xff]
        %v313 = vld [vmem:[#allocation2 + $0x278] sm:$0xff]
        %v314 = vld [vmem:[#allocation2 + $0x280] sm:$0xff]
        %v315 = vld [vmem:[#allocation2 + $0x288] sm:$0xff]
        %v316 = vld [vmem:[#allocation2 + $0x290] sm:$0xff]
        %v317 = vld [vmem:[#allocation2 + $0x298] sm:$0xff]
        %v318 = vld [vmem:[#allocation2 + $0x2a0] sm:$0xff]
        %v319 = vld [vmem:[#allocation2 + $0x2a8] sm:$0xff]
        %v320 = vld [vmem:[#allocation2 + $0x2b0] sm:$0xff]
        %v321 = vld [vmem:[#allocation2 + $0x2b8] sm:$0xff]
        %v322 = vld [vmem:[#allocation2 + $0x2c0] sm:$0xff]
        %v323 = vld [vmem:[#allocation2 + $0x2c8] sm:$0xff]
        %v324 = vld [vmem:[#allocation2 + $0x2d0] sm:$0xff]
        %v325 = vld [vmem:[#allocation2 + $0x2d8] sm:$0xff]
        %v326 = vld [vmem:[#allocation2 + $0x2e0] sm:$0xff]
        %v327 = vld [vmem:[#allocation2 + $0x2e8] sm:$0xff]
        %v328 = vld [vmem:[#allocation2 + $0x2f0] sm:$0xff]
        %v329 = vld [vmem:[#allocation2 + $0x2f8] sm:$0xff]
        %v330 = vld [vmem:[#allocation2 + $0x300] sm:$0xff]
        %v331 = vld [vmem:[#allocation2 + $0x308] sm:$0xff]
        %v332 = vld [vmem:[#allocation2 + $0x310] sm:$0xff]
        %v333 = vld [vmem:[#allocation2 + $0x318] sm:$0xff]
        %v334 = vld [vmem:[#allocation2 + $0x320] sm:$0xff]
        %v335 = vld [vmem:[#allocation2 + $0x328] sm:$0xff]
        %v336 = vld [vmem:[#allocation2 + $0x330] sm:$0xff]
        %v337 = vld [vmem:[#allocation2 + $0x338] sm:$0xff]
        %v338 = vld [vmem:[#allocation2 + $0x340] sm:$0xff]
        %v339 = vld [vmem:[#allocation2 + $0x348] sm:$0xff]
        %v340 = vld [vmem:[#allocation2 + $0x350] sm:$0xff]
        %v341 = vld [vmem:[#allocation2 + $0x358] sm:$0xff]
        %v342 = vld [vmem:[#allocation2 + $0x360] sm:$0xff]
        %v343 = vld [vmem:[#allocation2 + $0x368] sm:$0xff]
        %v344 = vld [vmem:[#allocation2 + $0x370] sm:$0xff]
        %v345 = vld [vmem:[#allocation2 + $0x378] sm:$0xff]
        %v346 = vld [vmem:[#allocation2 + $0x380] sm:$0xff]
        %v347 = vld [vmem:[#allocation2 + $0x388] sm:$0xff]
        %v348 = vld [vmem:[#allocation2 + $0x390] sm:$0xff]
        %v349 = vld [vmem:[#allocation2 + $0x398] sm:$0xff]
        %v350 = vld [vmem:[#allocation2 + $0x3a0] sm:$0xff]
        %v351 = vld [vmem:[#allocation2 + $0x3a8] sm:$0xff]
        %v352 = vld [vmem:[#allocation2 + $0x3b0] sm:$0xff]
        %v353 = vld [vmem:[#allocation2 + $0x3b8] sm:$0xff]
        %v354 = vld [vmem:[#allocation2 + $0x3c0] sm:$0xff]
        %v355 = vld [vmem:[#allocation2 + $0x3c8] sm:$0xff]
        %v356 = vld [vmem:[#allocation2 + $0x3d0] sm:$0xff]
        %v357 = vld [vmem:[#allocation2 + $0x3d8] sm:$0xff]
        %v358 = vld [vmem:[#allocation2 + $0x3e0] sm:$0xff]
        %v359 = vld [vmem:[#allocation2 + $0x3e8] sm:$0xff]
        %v360 = vld [vmem:[#allocation2 + $0x3f0] sm:$0xff]
        %v361 = vld [vmem:[#allocation2 + $0x3f8] sm:$0xff]
        %v362 = vld [vmem:[#allocation2 + $0x400] sm:$0xff]
        %v363 = vld [vmem:[#allocation2 + $0x408] sm:$0xff]
        %v364 = vld [vmem:[#allocation2 + $0x410] sm:$0xff]
        %v365 = vld [vmem:[#allocation2 + $0x418] sm:$0xff]
        %v366 = vld [vmem:[#allocation2 + $0x420] sm:$0xff]
        %v367 = vld [vmem:[#allocation2 + $0x428] sm:$0xff]
        %v368 = vld [vmem:[#allocation2 + $0x430] sm:$0xff]
        %v369 = vld [vmem:[#allocation2 + $0x438] sm:$0xff]
        %v370 = vld [vmem:[#allocation2 + $0x440] sm:$0xff]
        %v371 = vld [vmem:[#allocation2 + $0x448] sm:$0xff]
        %v372 = vld [vmem:[#allocation2 + $0x450] sm:$0xff]
        %v373 = vld [vmem:[#allocation2 + $0x458] sm:$0xff]
        %v374 = vld [vmem:[#allocation2 + $0x460] sm:$0xff]
        %v375 = vld [vmem:[#allocation2 + $0x468] sm:$0xff]
        %v376 = vld [vmem:[#allocation2 + $0x470] sm:$0xff]
        %v377 = vld [vmem:[#allocation2 + $0x478] sm:$0xff]
        %v378 = vld [vmem:[#allocation2 + $0x480] sm:$0xff]
        %v379 = vld [vmem:[#allocation2 + $0x488] sm:$0xff]
        %v380 = vld [vmem:[#allocation2 + $0x490] sm:$0xff]
        %v381 = vld [vmem:[#allocation2 + $0x498] sm:$0xff]
        %v382 = vld [vmem:[#allocation2 + $0x4a0] sm:$0xff]
        %v383 = vld [vmem:[#allocation2 + $0x4a8] sm:$0xff]
        %v384 = vld [vmem:[#allocation2 + $0x4b0] sm:$0xff]
        %v385 = vld [vmem:[#allocation2 + $0x4b8] sm:$0xff]
        %v386 = vld [vmem:[#allocation2 + $0x4c0] sm:$0xff]
        %v387 = vld [vmem:[#allocation2 + $0x4c8] sm:$0xff]
        %v388 = vld [vmem:[#allocation2 + $0x4d0] sm:$0xff]
        %v389 = vld [vmem:[#allocation2 + $0x4d8] sm:$0xff]
        %v390 = vld [vmem:[#allocation2 + $0x4e0] sm:$0xff]
        %v391 = vld [vmem:[#allocation2 + $0x4e8] sm:$0xff]
        %v392 = vld [vmem:[#allocation2 + $0x4f0] sm:$0xff]
        %v393 = vld [vmem:[#allocation2 + $0x4f8] sm:$0xff]
        %v394 = vld [vmem:[#allocation2 + $0x500] sm:$0xff]
        %v395 = vld [vmem:[#allocation2 + $0x508] sm:$0xff]
        %v396 = vld [vmem:[#allocation2 + $0x510] sm:$0xff]
        %v397 = vld [vmem:[#allocation2 + $0x518] sm:$0xff]
        %v398 = vld [vmem:[#allocation2 + $0x520] sm:$0xff]
        %v399 = vld [vmem:[#allocation2 + $0x528] sm:$0xff]
        %v400 = vld [vmem:[#allocation2 + $0x530] sm:$0xff]
        %v401 = vld [vmem:[#allocation2 + $0x538] sm:$0xff]
        %v402 = vld [vmem:[#allocation2 + $0x540] sm:$0xff]
        %v403 = vld [vmem:[#allocation2 + $0x548] sm:$0xff]
        %v404 = vld [vmem:[#allocation2 + $0x550] sm:$0xff]
        %v405 = vld [vmem:[#allocation2 + $0x558] sm:$0xff]
        %v406 = vld [vmem:[#allocation2 + $0x560] sm:$0xff]
        %v407 = vld [vmem:[#allocation2 + $0x568] sm:$0xff]
        %v408 = vld [vmem:[#allocation2 + $0x570] sm:$0xff]
        %v409 = vld [vmem:[#allocation2 + $0x578] sm:$0xff]
        %v410 = vld [vmem:[#allocation2 + $0x580] sm:$0xff]
        %v411 = vld [vmem:[#allocation2 + $0x588] sm:$0xff]
        %v412 = vld [vmem:[#allocation2 + $0x590] sm:$0xff]
        %v413 = vld [vmem:[#allocation2 + $0x598] sm:$0xff]
        %v414 = vld [vmem:[#allocation2 + $0x5a0] sm:$0xff]
        %v415 = vld [vmem:[#allocation2 + $0x5a8] sm:$0xff]
        %v416 = vld [vmem:[#allocation2 + $0x5b0] sm:$0xff]
        %v417 = vld [vmem:[#allocation2 + $0x5b8] sm:$0xff]
        %v418 = vld [vmem:[#allocation2 + $0x5c0] sm:$0xff]
        %v419 = vld [vmem:[#allocation2 + $0x5c8] sm:$0xff]
        %v420 = vld [vmem:[#allocation2 + $0x5d0] sm:$0xff]
        %v421 = vld [vmem:[#allocation2 + $0x5d8] sm:$0xff]
        %v422 = vld [vmem:[#allocation2 + $0x5e0] sm:$0xff]
        %v423 = vld [vmem:[#allocation2 + $0x5e8] sm:$0xff]
        %v424 = vld [vmem:[#allocation2 + $0x5f0] sm:$0xff]
        %v425 = vld [vmem:[#allocation2 + $0x5f8] sm:$0xff]
        %v426 = vld [vmem:[#allocation2 + $0x600] sm:$0xff]
        %v427 = vld [vmem:[#allocation2 + $0x608] sm:$0xff]
        %v428 = vld [vmem:[#allocation2 + $0x610] sm:$0xff]
        %v429 = vld [vmem:[#allocation2 + $0x618] sm:$0xff]
        %v430 = vld [vmem:[#allocation2 + $0x620] sm:$0xff]
        %v431 = vld [vmem:[#allocation2 + $0x628] sm:$0xff]
        %v432 = vld [vmem:[#allocation2 + $0x630] sm:$0xff]
        %v433 = vld [vmem:[#allocation2 + $0x638] sm:$0xff]
        %v434 = vld [vmem:[#allocation2 + $0x640] sm:$0xff]
        %v435 = vld [vmem:[#allocation2 + $0x648] sm:$0xff]
        %v436 = vld [vmem:[#allocation2 + $0x650] sm:$0xff]
        %v437 = vld [vmem:[#allocation2 + $0x658] sm:$0xff]
        %v438 = vld [vmem:[#allocation2 + $0x660] sm:$0xff]
        %v439 = vld [vmem:[#allocation2 + $0x668] sm:$0xff]
        %v440 = vld [vmem:[#allocation2 + $0x670] sm:$0xff]
        %v441 = vld [vmem:[#allocation2 + $0x678] sm:$0xff]
        %v442 = vld [vmem:[#allocation2 + $0x680] sm:$0xff]
        %v443 = vld [vmem:[#allocation2 + $0x688] sm:$0xff]
        %v444 = vld [vmem:[#allocation2 + $0x690] sm:$0xff]
        %v445 = vld [vmem:[#allocation2 + $0x698] sm:$0xff]
        %v446 = vld [vmem:[#allocation2 + $0x6a0] sm:$0xff]
        %v447 = vld [vmem:[#allocation2 + $0x6a8] sm:$0xff]
        %v448 = vld [vmem:[#allocation2 + $0x6b0] sm:$0xff]
        %v449 = vld [vmem:[#allocation2 + $0x6b8] sm:$0xff]
        %v450 = vld [vmem:[#allocation2 + $0x6c0] sm:$0xff]
        %v451 = vld [vmem:[#allocation2 + $0x6c8] sm:$0xff]
        %v452 = vld [vmem:[#allocation2 + $0x6d0] sm:$0xff]
        %v453 = vld [vmem:[#allocation2 + $0x6d8] sm:$0xff]
        %v454 = vld [vmem:[#allocation2 + $0x6e0] sm:$0xff]
        %v455 = vld [vmem:[#allocation2 + $0x6e8] sm:$0xff]
        %v456 = vld [vmem:[#allocation2 + $0x6f0] sm:$0xff]
        %v457 = vld [vmem:[#allocation2 + $0x6f8] sm:$0xff]
        %v458 = vld [vmem:[#allocation2 + $0x700] sm:$0xff]
        %v459 = vld [vmem:[#allocation2 + $0x708] sm:$0xff]
        %v460 = vld [vmem:[#allocation2 + $0x710] sm:$0xff]
        %v461 = vld [vmem:[#allocation2 + $0x718] sm:$0xff]
        %v462 = vld [vmem:[#allocation2 + $0x720] sm:$0xff]
        %v463 = vld [vmem:[#allocation2 + $0x728] sm:$0xff]
        %v464 = vld [vmem:[#allocation2 + $0x730] sm:$0xff]
        %v465 = vld [vmem:[#allocation2 + $0x738] sm:$0xff]
        %v466 = vld [vmem:[#allocation2 + $0x740] sm:$0xff]
        %v467 = vld [vmem:[#allocation2 + $0x748] sm:$0xff]
        %v468 = vld [vmem:[#allocation2 + $0x750] sm:$0xff]
        %v469 = vld [vmem:[#allocation2 + $0x758] sm:$0xff]
        %v470 = vld [vmem:[#allocation2 + $0x760] sm:$0xff]
        %v471 = vld [vmem:[#allocation2 + $0x768] sm:$0xff]
        %v472 = vld [vmem:[#allocation2 + $0x770] sm:$0xff]
        %v473 = vld [vmem:[#allocation2 + $0x778] sm:$0xff]
        %v474 = vld [vmem:[#allocation2 + $0x780] sm:$0xff]
        %v475 = vld [vmem:[#allocation2 + $0x788] sm:$0xff]
        %v476 = vld [vmem:[#allocation2 + $0x790] sm:$0xff]
        %v477 = vld [vmem:[#allocation2 + $0x798] sm:$0xff]
        %v478 = vld [vmem:[#allocation2 + $0x7a0] sm:$0xff]
        %v479 = vld [vmem:[#allocation2 + $0x7a8] sm:$0xff]
        %v480 = vld [vmem:[#allocation2 + $0x7b0] sm:$0xff]
        %v481 = vld [vmem:[#allocation2 + $0x7b8] sm:$0xff]
        %v482 = vld [vmem:[#allocation2 + $0x7c0] sm:$0xff]
        %v483 = vld [vmem:[#allocation2 + $0x7c8] sm:$0xff]
        %v484 = vld [vmem:[#allocation2 + $0x7d0] sm:$0xff]
        %v485 = vld [vmem:[#allocation2 + $0x7d8] sm:$0xff]
        %v486 = vld [vmem:[#allocation2 + $0x7e0] sm:$0xff]
        %v487 = vld [vmem:[#allocation2 + $0x7e8] sm:$0xff]
        %v488 = vld [vmem:[#allocation2 + $0x7f0] sm:$0xff]
        %v489 = vld [vmem:[#allocation2 + $0x7f8] sm:$0xff]
        %v490 = vld [vmem:[#allocation2 + $0x800] sm:$0xff]
        %v491 = vld [vmem:[#allocation2 + $0x808] sm:$0xff]
        %v492 = vld [vmem:[#allocation2 + $0x810] sm:$0xff]
        %v493 = vld [vmem:[#allocation2 + $0x818] sm:$0xff]
        %v494 = vld [vmem:[#allocation2 + $0x820] sm:$0xff]
        %v495 = vld [vmem:[#allocation2 + $0x828] sm:$0xff]
        %v496 = vld [vmem:[#allocation2 + $0x830] sm:$0xff]
        %v497 = vld [vmem:[#allocation2 + $0x838] sm:$0xff]
        %v498 = vld [vmem:[#allocation2 + $0x840] sm:$0xff]
        %v499 = vld [vmem:[#allocation2 + $0x848] sm:$0xff]
        %v500 = vld [vmem:[#allocation2 + $0x850] sm:$0xff]
        %v501 = vld [vmem:[#allocation2 + $0x858] sm:$0xff]
        %v502 = vld [vmem:[#allocation2 + $0x860] sm:$0xff]
        %v503 = vld [vmem:[#allocation2 + $0x868] sm:$0xff]
        %v504 = vld [vmem:[#allocation2 + $0x870] sm:$0xff]
        %v505 = vld [vmem:[#allocation2 + $0x878] sm:$0xff]
        %v506 = vld [vmem:[#allocation2 + $0x880] sm:$0xff]
        %v507 = vld [vmem:[#allocation2 + $0x888] sm:$0xff]
        %v508 = vld [vmem:[#allocation2 + $0x890] sm:$0xff]
        %v509 = vld [vmem:[#allocation2 + $0x898] sm:$0xff]
        %v510 = vld [vmem:[#allocation2 + $0x8a0] sm:$0xff]
        %v511 = vld [vmem:[#allocation2 + $0x8a8] sm:$0xff]
        %v512 = vld [vmem:[#allocation2 + $0x8b0] sm:$0xff]
        %v513 = vld [vmem:[#allocation2 + $0x8b8] sm:$0xff]
        %v514 = vld [vmem:[#allocation2 + $0x8c0] sm:$0xff]
        %v515 = vld [vmem:[#allocation2 + $0x8c8] sm:$0xff]
        %v516 = vld [vmem:[#allocation2 + $0x8d0] sm:$0xff]
        %v517 = vld [vmem:[#allocation2 + $0x8d8] sm:$0xff]
        %v518 = vld [vmem:[#allocation2 + $0x8e0] sm:$0xff]
        %v519 = vld [vmem:[#allocation2 + $0x8e8] sm:$0xff]
        %v520 = vld [vmem:[#allocation2 + $0x8f0] sm:$0xff]
        %v521 = vld [vmem:[#allocation2 + $0x8f8] sm:$0xff]
        %v522 = vld [vmem:[#allocation2 + $0x900] sm:$0xff]
        %v523 = vld [vmem:[#allocation2 + $0x908] sm:$0xff]
        %v524 = vld [vmem:[#allocation2 + $0x910] sm:$0xff]
        %v525 = vld [vmem:[#allocation2 + $0x918] sm:$0xff]
        %v526 = vld [vmem:[#allocation2 + $0x920] sm:$0xff]
        %v527 = vld [vmem:[#allocation2 + $0x928] sm:$0xff]
        %v528 = vld [vmem:[#allocation2 + $0x930] sm:$0xff]
        %v529 = vld [vmem:[#allocation2 + $0x938] sm:$0xff]
        %v530 = vld [vmem:[#allocation2 + $0x940] sm:$0xff]
        %v531 = vld [vmem:[#allocation2 + $0x948] sm:$0xff]
        %v532 = vld [vmem:[#allocation2 + $0x950] sm:$0xff]
        %v533 = vld [vmem:[#allocation2 + $0x958] sm:$0xff]
        %v534 = vld [vmem:[#allocation2 + $0x960] sm:$0xff]
        %v535 = vld [vmem:[#allocation2 + $0x968] sm:$0xff]
        %v536 = vld [vmem:[#allocation2 + $0x970] sm:$0xff]
        %v537 = vld [vmem:[#allocation2 + $0x978] sm:$0xff]
        %v538 = vld [vmem:[#allocation2 + $0x980] sm:$0xff]
        %v539 = vld [vmem:[#allocation2 + $0x988] sm:$0xff]
        %v540 = vld [vmem:[#allocation2 + $0x990] sm:$0xff]
        %v541 = vld [vmem:[#allocation2 + $0x998] sm:$0xff]
        %v542 = vld [vmem:[#allocation2 + $0x9a0] sm:$0xff]
        %v543 = vld [vmem:[#allocation2 + $0x9a8] sm:$0xff]
        %v544 = vld [vmem:[#allocation2 + $0x9b0] sm:$0xff]
        %v545 = vld [vmem:[#allocation2 + $0x9b8] sm:$0xff]
        %v546 = vld [vmem:[#allocation2 + $0x9c0] sm:$0xff]
        %v547 = vld [vmem:[#allocation2 + $0x9c8] sm:$0xff]
        %v548 = vld [vmem:[#allocation2 + $0x9d0] sm:$0xff]
        %v549 = vld [vmem:[#allocation2 + $0x9d8] sm:$0xff]
        %v550 = vld [vmem:[#allocation2 + $0x9e0] sm:$0xff]
        %v551 = vld [vmem:[#allocation2 + $0x9e8] sm:$0xff]
        %v552 = vld [vmem:[#allocation2 + $0x9f0] sm:$0xff]
        %v553 = vld [vmem:[#allocation2 + $0x9f8] sm:$0xff]
        %v554 = vld [vmem:[#allocation2 + $0xa00] sm:$0xff]
        %v555 = vld [vmem:[#allocation2 + $0xa08] sm:$0xff]
        %v556 = vld [vmem:[#allocation2 + $0xa10] sm:$0xff]
        %v557 = vld [vmem:[#allocation2 + $0xa18] sm:$0xff]
        %v558 = vld [vmem:[#allocation2 + $0xa20] sm:$0xff]
        %v559 = vld [vmem:[#allocation2 + $0xa28] sm:$0xff]
        %v560 = vld [vmem:[#allocation2 + $0xa30] sm:$0xff]
        %v561 = vld [vmem:[#allocation2 + $0xa38] sm:$0xff]
        %v562 = vld [vmem:[#allocation2 + $0xa40] sm:$0xff]
        %v563 = vld [vmem:[#allocation2 + $0xa48] sm:$0xff]
        %v564 = vld [vmem:[#allocation2 + $0xa50] sm:$0xff]
        %v565 = vld [vmem:[#allocation2 + $0xa58] sm:$0xff]
        %v566 = vld [vmem:[#allocation2 + $0xa60] sm:$0xff]
        %v567 = vld [vmem:[#allocation2 + $0xa68] sm:$0xff]
        %v568 = vld [vmem:[#allocation2 + $0xa70] sm:$0xff]
        %v569 = vld [vmem:[#allocation2 + $0xa78] sm:$0xff]
        %v570 = vld [vmem:[#allocation2 + $0xa80] sm:$0xff]
        %v571 = vld [vmem:[#allocation2 + $0xa88] sm:$0xff]
        %v572 = vld [vmem:[#allocation2 + $0xa90] sm:$0xff]
        %v573 = vld [vmem:[#allocation2 + $0xa98] sm:$0xff]
        %v574 = vld [vmem:[#allocation2 + $0xaa0] sm:$0xff]
        %v575 = vld [vmem:[#allocation2 + $0xaa8] sm:$0xff]
        %v576 = vld [vmem:[#allocation2 + $0xab0] sm:$0xff]
        %v577 = vld [vmem:[#allocation2 + $0xab8] sm:$0xff]
        %v578 = vld [vmem:[#allocation2 + $0xac0] sm:$0xff]
        %v579 = vld [vmem:[#allocation2 + $0xac8] sm:$0xff]
        %v580 = vld [vmem:[#allocation2 + $0xad0] sm:$0xff]
        %v581 = vld [vmem:[#allocation2 + $0xad8] sm:$0xff]
        %v582 = vld [vmem:[#allocation2 + $0xae0] sm:$0xff]
        %v583 = vld [vmem:[#allocation2 + $0xae8] sm:$0xff]
        %v584 = vld [vmem:[#allocation2 + $0xaf0] sm:$0xff]
        %v585 = vld [vmem:[#allocation2 + $0xaf8] sm:$0xff]
        %v586 = vld [vmem:[#allocation2 + $0xb00] sm:$0xff]
        %v587 = vld [vmem:[#allocation2 + $0xb08] sm:$0xff]
        %v588 = vld [vmem:[#allocation2 + $0xb10] sm:$0xff]
        %v589 = vld [vmem:[#allocation2 + $0xb18] sm:$0xff]
        %v590 = vld [vmem:[#allocation2 + $0xb20] sm:$0xff]
        %v591 = vld [vmem:[#allocation2 + $0xb28] sm:$0xff]
        %v592 = vld [vmem:[#allocation2 + $0xb30] sm:$0xff]
        %v593 = vld [vmem:[#allocation2 + $0xb38] sm:$0xff]
        %v594 = vld [vmem:[#allocation2 + $0xb40] sm:$0xff]
        %v595 = vld [vmem:[#allocation2 + $0xb48] sm:$0xff]
        %v596 = vld [vmem:[#allocation2 + $0xb50] sm:$0xff]
        %v597 = vld [vmem:[#allocation2 + $0xb58] sm:$0xff]
        %v598 = vld [vmem:[#allocation2 + $0xb60] sm:$0xff]
        %v599 = vld [vmem:[#allocation2 + $0xb68] sm:$0xff]
        %v600 = vld [vmem:[#allocation2 + $0xb70] sm:$0xff]
        %v601 = vld [vmem:[#allocation2 + $0xb78] sm:$0xff]
        %v602 = vld [vmem:[#allocation2 + $0xb80] sm:$0xff]
        %v603 = vld [vmem:[#allocation2 + $0xb88] sm:$0xff]
        %v604 = vld [vmem:[#allocation2 + $0xb90] sm:$0xff]
        %v605 = vld [vmem:[#allocation2 + $0xb98] sm:$0xff]
        %v606 = vld [vmem:[#allocation2 + $0xba0] sm:$0xff]
        %v607 = vld [vmem:[#allocation2 + $0xba8] sm:$0xff]
        %v608 = vld [vmem:[#allocation2 + $0xbb0] sm:$0xff]
        %v609 = vld [vmem:[#allocation2 + $0xbb8] sm:$0xff]
        %v610 = vld [vmem:[#allocation2 + $0xbc0] sm:$0xff]
        %v611 = vld [vmem:[#allocation2 + $0xbc8] sm:$0xff]
        %v612 = vld [vmem:[#allocation2 + $0xbd0] sm:$0xff]
        %v613 = vld [vmem:[#allocation2 + $0xbd8] sm:$0xff]
        %v614 = vld [vmem:[#allocation2 + $0xbe0] sm:$0xff]
        %v615 = vld [vmem:[#allocation2 + $0xbe8] sm:$0xff]
        %v616 = vld [vmem:[#allocation2 + $0xbf0] sm:$0xff]
        %v617 = vld [vmem:[#allocation2 + $0xbf8] sm:$0xff]
        %v618 = vld [vmem:[#allocation2 + $0xc00] sm:$0xff]
        %v619 = vld [vmem:[#allocation2 + $0xc08] sm:$0xff]
        %v620 = vld [vmem:[#allocation2 + $0xc10] sm:$0xff]
        %v621 = vld [vmem:[#allocation2 + $0xc18] sm:$0xff]
        %v622 = vld [vmem:[#allocation2 + $0xc20] sm:$0xff]
        %v623 = vld [vmem:[#allocation2 + $0xc28] sm:$0xff]
        %v624 = vld [vmem:[#allocation2 + $0xc30] sm:$0xff]
        %v625 = vld [vmem:[#allocation2 + $0xc38] sm:$0xff]
        %v626 = vld [vmem:[#allocation2 + $0xc40] sm:$0xff]
        %v627 = vld [vmem:[#allocation2 + $0xc48] sm:$0xff]
        %v628 = vld [vmem:[#allocation2 + $0xc50] sm:$0xff]
        %v629 = vld [vmem:[#allocation2 + $0xc58] sm:$0xff]
        %v630 = vld [vmem:[#allocation2 + $0xc60] sm:$0xff]
        %v631 = vld [vmem:[#allocation2 + $0xc68] sm:$0xff]
        %v632 = vld [vmem:[#allocation2 + $0xc70] sm:$0xff]
        %v633 = vld [vmem:[#allocation2 + $0xc78] sm:$0xff]
        %v634 = vld [vmem:[#allocation2 + $0xc80] sm:$0xff]
        %v635 = vld [vmem:[#allocation2 + $0xc88] sm:$0xff]
        %v636 = vld [vmem:[#allocation2 + $0xc90] sm:$0xff]
        %v637 = vld [vmem:[#allocation2 + $0xc98] sm:$0xff]
        %v638 = vld [vmem:[#allocation2 + $0xca0] sm:$0xff]
        %v639 = vld [vmem:[#allocation2 + $0xca8] sm:$0xff]
        %v640 = vld [vmem:[#allocation2 + $0xcb0] sm:$0xff]
        %v641 = vld [vmem:[#allocation2 + $0xcb8] sm:$0xff]
        %v642 = vld [vmem:[#allocation2 + $0xcc0] sm:$0xff]
        %v643 = vld [vmem:[#allocation2 + $0xcc8] sm:$0xff]
        %v644 = vld [vmem:[#allocation2 + $0xcd0] sm:$0xff]
        %v645 = vld [vmem:[#allocation2 + $0xcd8] sm:$0xff]
        %v646 = vld [vmem:[#allocation2 + $0xce0] sm:$0xff]
        %v647 = vld [vmem:[#allocation2 + $0xce8] sm:$0xff]
        %v648 = vld [vmem:[#allocation2 + $0xcf0] sm:$0xff]
        %v649 = vld [vmem:[#allocation2 + $0xcf8] sm:$0xff]
        %v650 = vld [vmem:[#allocation2 + $0xd00] sm:$0xff]
        %v651 = vld [vmem:[#allocation2 + $0xd08] sm:$0xff]
        %v652 = vld [vmem:[#allocation2 + $0xd10] sm:$0xff]
        %v653 = vld [vmem:[#allocation2 + $0xd18] sm:$0xff]
        %v654 = vld [vmem:[#allocation2 + $0xd20] sm:$0xff]
        %v655 = vld [vmem:[#allocation2 + $0xd28] sm:$0xff]
        %v656 = vld [vmem:[#allocation2 + $0xd30] sm:$0xff]
        %v657 = vld [vmem:[#allocation2 + $0xd38] sm:$0xff]
        %v658 = vld [vmem:[#allocation2 + $0xd40] sm:$0xff]
        %v659 = vld [vmem:[#allocation2 + $0xd48] sm:$0xff]
        %v660 = vld [vmem:[#allocation2 + $0xd50] sm:$0xff]
        %v661 = vld [vmem:[#allocation2 + $0xd58] sm:$0xff]
        %v662 = vld [vmem:[#allocation2 + $0xd60] sm:$0xff]
        %v663 = vld [vmem:[#allocation2 + $0xd68] sm:$0xff]
        %v664 = vld [vmem:[#allocation2 + $0xd70] sm:$0xff]
        %v665 = vld [vmem:[#allocation2 + $0xd78] sm:$0xff]
        %v666 = vld [vmem:[#allocation2 + $0xd80] sm:$0xff]
        %v667 = vld [vmem:[#allocation2 + $0xd88] sm:$0xff]
        %v668 = vld [vmem:[#allocation2 + $0xd90] sm:$0xff]
        %v669 = vld [vmem:[#allocation2 + $0xd98] sm:$0xff]
        %v670 = vld [vmem:[#allocation2 + $0xda0] sm:$0xff]
        %v671 = vld [vmem:[#allocation2 + $0xda8] sm:$0xff]
        %v672 = vld [vmem:[#allocation2 + $0xdb0] sm:$0xff]
        %v673 = vld [vmem:[#allocation2 + $0xdb8] sm:$0xff]
        %v674 = vld [vmem:[#allocation2 + $0xdc0] sm:$0xff]
        %v675 = vld [vmem:[#allocation2 + $0xdc8] sm:$0xff]
        %v676 = vld [vmem:[#allocation2 + $0xdd0] sm:$0xff]
        %v677 = vld [vmem:[#allocation2 + $0xdd8] sm:$0xff]
        %v678 = vld [vmem:[#allocation2 + $0xde0] sm:$0xff]
        %v679 = vld [vmem:[#allocation2 + $0xde8] sm:$0xff]
        %v680 = vld [vmem:[#allocation2 + $0xdf0] sm:$0xff]
        %v681 = vld [vmem:[#allocation2 + $0xdf8] sm:$0xff]
        %v682 = vld [vmem:[#allocation2 + $0xe00] sm:$0xff]
        %v683 = vld [vmem:[#allocation2 + $0xe08] sm:$0xff]
        %v684 = vld [vmem:[#allocation2 + $0xe10] sm:$0xff]
        %v685 = vld [vmem:[#allocation2 + $0xe18] sm:$0xff]
        %v686 = vld [vmem:[#allocation2 + $0xe20] sm:$0xff]
        %v687 = vld [vmem:[#allocation2 + $0xe28] sm:$0xff]
        %v688 = vld [vmem:[#allocation2 + $0xe30] sm:$0xff]
        %v689 = vld [vmem:[#allocation2 + $0xe38] sm:$0xff]
        %v690 = vld [vmem:[#allocation2 + $0xe40] sm:$0xff]
        %v691 = vld [vmem:[#allocation2 + $0xe48] sm:$0xff]
        %v692 = vld [vmem:[#allocation2 + $0xe50] sm:$0xff]
        %v693 = vld [vmem:[#allocation2 + $0xe58] sm:$0xff]
        %v694 = vld [vmem:[#allocation2 + $0xe60] sm:$0xff]
        %v695 = vld [vmem:[#allocation2 + $0xe68] sm:$0xff]
        %v696 = vld [vmem:[#allocation2 + $0xe70] sm:$0xff]
        %v697 = vld [vmem:[#allocation2 + $0xe78] sm:$0xff]
        %v698 = vld [vmem:[#allocation2 + $0xe80] sm:$0xff]
        %v699 = vld [vmem:[#allocation2 + $0xe88] sm:$0xff]
        %v700 = vld [vmem:[#allocation2 + $0xe90] sm:$0xff]
        %v701 = vld [vmem:[#allocation2 + $0xe98] sm:$0xff]
        %v702 = vld [vmem:[#allocation2 + $0xea0] sm:$0xff]
        %v703 = vld [vmem:[#allocation2 + $0xea8] sm:$0xff]
        %v704 = vld [vmem:[#allocation2 + $0xeb0] sm:$0xff]
        %v705 = vld [vmem:[#allocation2 + $0xeb8] sm:$0xff]
        %v706 = vld [vmem:[#allocation2 + $0xec0] sm:$0xff]
        %v707 = vld [vmem:[#allocation2 + $0xec8] sm:$0xff]
        %v708 = vld [vmem:[#allocation2 + $0xed0] sm:$0xff]
        %v709 = vld [vmem:[#allocation2 + $0xed8] sm:$0xff]
        %v710 = vld [vmem:[#allocation2 + $0xee0] sm:$0xff]
        %v711 = vld [vmem:[#allocation2 + $0xee8] sm:$0xff]
        %v712 = vld [vmem:[#allocation2 + $0xef0] sm:$0xff]
        %v713 = vld [vmem:[#allocation2 + $0xef8] sm:$0xff]
        %v714 = vld [vmem:[#allocation2 + $0xf00] sm:$0xff]
        %v715 = vld [vmem:[#allocation2 + $0xf08] sm:$0xff]
        %v716 = vld [vmem:[#allocation2 + $0xf10] sm:$0xff]
        %v717 = vld [vmem:[#allocation2 + $0xf18] sm:$0xff]
        %v718 = vld [vmem:[#allocation2 + $0xf20] sm:$0xff]
        %v719 = vld [vmem:[#allocation2 + $0xf28] sm:$0xff]
        %v720 = vld [vmem:[#allocation2 + $0xf30] sm:$0xff]
        %v721 = vld [vmem:[#allocation2 + $0xf38] sm:$0xff]
        %v722 = vld [vmem:[#allocation2 + $0xf40] sm:$0xff]
        %v723 = vld [vmem:[#allocation2 + $0xf48] sm:$0xff]
        %v724 = vld [vmem:[#allocation2 + $0xf50] sm:$0xff]
        %v725 = vld [vmem:[#allocation2 + $0xf58] sm:$0xff]
        %v726 = vld [vmem:[#allocation2 + $0xf60] sm:$0xff]
        %v727 = vld [vmem:[#allocation2 + $0xf68] sm:$0xff]
        %v728 = vld [vmem:[#allocation2 + $0xf70] sm:$0xff]
        %v729 = vld [vmem:[#allocation2 + $0xf78] sm:$0xff]
        %v730 = vld [vmem:[#allocation2 + $0xf80] sm:$0xff]
        %v731 = vld [vmem:[#allocation2 + $0xf88] sm:$0xff]
        %v732 = vld [vmem:[#allocation2 + $0xf90] sm:$0xff]
        %v733 = vld [vmem:[#allocation2 + $0xf98] sm:$0xff]
        %v734 = vld [vmem:[#allocation2 + $0xfa0] sm:$0xff]
        %v735 = vld [vmem:[#allocation2 + $0xfa8] sm:$0xff]
        %v736 = vld [vmem:[#allocation2 + $0xfb0] sm:$0xff]
        %v737 = vld [vmem:[#allocation2 + $0xfb8] sm:$0xff]
        %v738 = vld [vmem:[#allocation2 + $0xfc0] sm:$0xff]
        %v739 = vld [vmem:[#allocation2 + $0xfc8] sm:$0xff]
        %v740 = vld [vmem:[#allocation2 + $0xfd0] sm:$0xff]
        %v741 = vld [vmem:[#allocation2 + $0xfd8] sm:$0xff]
        %v742 = vld [vmem:[#allocation2 + $0xfe0] sm:$0xff]
        %v743 = vld [vmem:[#allocation2 + $0xfe8] sm:$0xff]
        %v744 = vld [vmem:[#allocation2 + $0xff0] sm:$0xff]
        %v745 = vld [vmem:[#allocation2 + $0xff8] sm:$0xff]
        %v746 = vld [vmem:[#allocation2 + $0x1000] sm:$0xff]
        %v747 = vld [vmem:[#allocation2 + $0x1008] sm:$0xff]
        %v748 = vld [vmem:[#allocation2 + $0x1010] sm:$0xff]
        %v749 = vld [vmem:[#allocation2 + $0x1018] sm:$0xff]
        %v750 = vld [vmem:[#allocation2 + $0x1020] sm:$0xff]
        %v751 = vld [vmem:[#allocation2 + $0x1028] sm:$0xff]
        %v752 = vld [vmem:[#allocation2 + $0x1030] sm:$0xff]
        %v753 = vld [vmem:[#allocation2 + $0x1038] sm:$0xff]
        %v754 = vld [vmem:[#allocation2 + $0x1040] sm:$0xff]
        %v755 = vld [vmem:[#allocation2 + $0x1048] sm:$0xff]
        %v756 = vld [vmem:[#allocation2 + $0x1050] sm:$0xff]
        %v757 = vld [vmem:[#allocation2 + $0x1058] sm:$0xff]
        %v758 = vld [vmem:[#allocation2 + $0x1060] sm:$0xff]
        %v759 = vld [vmem:[#allocation2 + $0x1068] sm:$0xff]
        %v760 = vld [vmem:[#allocation2 + $0x1070] sm:$0xff]
        %v761 = vld [vmem:[#allocation2 + $0x1078] sm:$0xff]
        %v762 = vld [vmem:[#allocation2 + $0x1080] sm:$0xff]
        %v763 = vld [vmem:[#allocation2 + $0x1088] sm:$0xff]
        %v764 = vld [vmem:[#allocation2 + $0x1090] sm:$0xff]
        %v765 = vld [vmem:[#allocation2 + $0x1098] sm:$0xff]
        %v766 = vld [vmem:[#allocation2 + $0x10a0] sm:$0xff]
        %v767 = vld [vmem:[#allocation2 + $0x10a8] sm:$0xff]
        %v768 = vld [vmem:[#allocation2 + $0x10b0] sm:$0xff]
        %v769 = vld [vmem:[#allocation2 + $0x10b8] sm:$0xff]
        %v770 = vld [vmem:[#allocation2 + $0x10c0] sm:$0xff]
        %v771 = vld [vmem:[#allocation2 + $0x10c8] sm:$0xff]
        %v772 = vld [vmem:[#allocation2 + $0x10d0] sm:$0xff]
        %v773 = vld [vmem:[#allocation2 + $0x10d8] sm:$0xff]
        %v774 = vld [vmem:[#allocation2 + $0x10e0] sm:$0xff]
        %v775 = vld [vmem:[#allocation2 + $0x10e8] sm:$0xff]
        %v776 = vld [vmem:[#allocation2 + $0x10f0] sm:$0xff]
        %v777 = vld [vmem:[#allocation2 + $0x10f8] sm:$0xff]
        %v778 = vld [vmem:[#allocation2 + $0x1100] sm:$0xff]
        %v779 = vld [vmem:[#allocation2 + $0x1108] sm:$0xff]
        %v780 = vld [vmem:[#allocation2 + $0x1110] sm:$0xff]
        %v781 = vld [vmem:[#allocation2 + $0x1118] sm:$0xff]
        %v782 = vld [vmem:[#allocation2 + $0x1120] sm:$0xff]
        %v783 = vld [vmem:[#allocation2 + $0x1128] sm:$0xff]
        %v784 = vld [vmem:[#allocation2 + $0x1130] sm:$0xff]
        %v785 = vld [vmem:[#allocation2 + $0x1138] sm:$0xff]
        %v786 = vld [vmem:[#allocation2 + $0x1140] sm:$0xff]
        %v787 = vld [vmem:[#allocation2 + $0x1148] sm:$0xff]
        %v788 = vld [vmem:[#allocation2 + $0x1150] sm:$0xff]
        %v789 = vld [vmem:[#allocation2 + $0x1158] sm:$0xff]
        %v790 = vld [vmem:[#allocation2 + $0x1160] sm:$0xff]
        %v791 = vld [vmem:[#allocation2 + $0x1168] sm:$0xff]
        %v792 = vld [vmem:[#allocation2 + $0x1170] sm:$0xff]
        %v793 = vld [vmem:[#allocation2 + $0x1178] sm:$0xff]
        %v794 = vld [vmem:[#allocation2 + $0x1180] sm:$0xff]
        %v795 = vld [vmem:[#allocation2 + $0x1188] sm:$0xff]
        %v796 = vld [vmem:[#allocation2 + $0x1190] sm:$0xff]
        %v797 = vld [vmem:[#allocation2 + $0x1198] sm:$0xff]
        %v798 = vld [vmem:[#allocation2 + $0x11a0] sm:$0xff]
        %v799 = vld [vmem:[#allocation2 + $0x11a8] sm:$0xff]
        %v800 = vld [vmem:[#allocation2 + $0x11b0] sm:$0xff]
        %v801 = vld [vmem:[#allocation2 + $0x11b8] sm:$0xff]
        %v802 = vld [vmem:[#allocation2 + $0x11c0] sm:$0xff]
        %v803 = vld [vmem:[#allocation2 + $0x11c8] sm:$0xff]
        %v804 = vld [vmem:[#allocation2 + $0x11d0] sm:$0xff]
        %v805 = vld [vmem:[#allocation2 + $0x11d8] sm:$0xff]
        %v806 = vld [vmem:[#allocation2 + $0x11e0] sm:$0xff]
        %v807 = vld [vmem:[#allocation2 + $0x11e8] sm:$0xff]
        %v808 = vld [vmem:[#allocation2 + $0x11f0] sm:$0xff]
        %v809 = vld [vmem:[#allocation2 + $0x11f8] sm:$0xff]
        %v810 = vld [vmem:[#allocation2 + $0x1200] sm:$0xff]
        %v811 = vld [vmem:[#allocation2 + $0x1208] sm:$0xff]
        %v812 = vld [vmem:[#allocation2 + $0x1210] sm:$0xff]
        %v813 = vld [vmem:[#allocation2 + $0x1218] sm:$0xff]
        %v814 = vld [vmem:[#allocation2 + $0x1220] sm:$0xff]
        %v815 = vld [vmem:[#allocation2 + $0x1228] sm:$0xff]
        %v816 = vld [vmem:[#allocation2 + $0x1230] sm:$0xff]
        %v817 = vld [vmem:[#allocation2 + $0x1238] sm:$0xff]
        %v818 = vld [vmem:[#allocation2 + $0x1240] sm:$0xff]
        %v819 = vld [vmem:[#allocation2 + $0x1248] sm:$0xff]
        %v820 = vld [vmem:[#allocation2 + $0x1250] sm:$0xff]
        %v821 = vld [vmem:[#allocation2 + $0x1258] sm:$0xff]
        %v822 = vld [vmem:[#allocation2 + $0x1260] sm:$0xff]
        %v823 = vld [vmem:[#allocation2 + $0x1268] sm:$0xff]
        %v824 = vld [vmem:[#allocation2 + $0x1270] sm:$0xff]
        %v825 = vld [vmem:[#allocation2 + $0x1278] sm:$0xff]
        %v826 = vld [vmem:[#allocation2 + $0x1280] sm:$0xff]
        %v827 = vld [vmem:[#allocation2 + $0x1288] sm:$0xff]
        %v828 = vld [vmem:[#allocation2 + $0x1290] sm:$0xff]
        %v829 = vld [vmem:[#allocation2 + $0x1298] sm:$0xff]
        %v830 = vld [vmem:[#allocation2 + $0x12a0] sm:$0xff]
        %v831 = vld [vmem:[#allocation2 + $0x12a8] sm:$0xff]
        %v832 = vld [vmem:[#allocation2 + $0x12b0] sm:$0xff]
        %v833 = vld [vmem:[#allocation2 + $0x12b8] sm:$0xff]
        %v834 = vld [vmem:[#allocation2 + $0x12c0] sm:$0xff]
        %v835 = vld [vmem:[#allocation2 + $0x12c8] sm:$0xff]
        %v836 = vld [vmem:[#allocation2 + $0x12d0] sm:$0xff]
        %v837 = vld [vmem:[#allocation2 + $0x12d8] sm:$0xff]
        %v838 = vld [vmem:[#allocation2 + $0x12e0] sm:$0xff]
        %v839 = vld [vmem:[#allocation2 + $0x12e8] sm:$0xff]
        %v840 = vld [vmem:[#allocation2 + $0x12f0] sm:$0xff]
        %v841 = vld [vmem:[#allocation2 + $0x12f8] sm:$0xff]
        %v842 = vld [vmem:[#allocation2 + $0x1300] sm:$0xff]
        %v843 = vld [vmem:[#allocation2 + $0x1308] sm:$0xff]
        %v844 = vld [vmem:[#allocation2 + $0x1310] sm:$0xff]
        %v845 = vld [vmem:[#allocation2 + $0x1318] sm:$0xff]
        %v846 = vld [vmem:[#allocation2 + $0x1320] sm:$0xff]
        %v847 = vld [vmem:[#allocation2 + $0x1328] sm:$0xff]
        %v848 = vld [vmem:[#allocation2 + $0x1330] sm:$0xff]
        %v849 = vld [vmem:[#allocation2 + $0x1338] sm:$0xff]
        %v850 = vld [vmem:[#allocation2 + $0x1340] sm:$0xff]
        %v851 = vld [vmem:[#allocation2 + $0x1348] sm:$0xff]
        %v852 = vld [vmem:[#allocation2 + $0x1350] sm:$0xff]
        %v853 = vld [vmem:[#allocation2 + $0x1358] sm:$0xff]
        %v854 = vld [vmem:[#allocation2 + $0x1360] sm:$0xff]
        %v855 = vld [vmem:[#allocation2 + $0x1368] sm:$0xff]
        %v856 = vld [vmem:[#allocation2 + $0x1370] sm:$0xff]
        %v857 = vld [vmem:[#allocation2 + $0x1378] sm:$0xff]
        %v858 = vld [vmem:[#allocation2 + $0x1380] sm:$0xff]
        %v859 = vld [vmem:[#allocation2 + $0x1388] sm:$0xff]
        %v860 = vld [vmem:[#allocation2 + $0x1390] sm:$0xff]
        %v861 = vld [vmem:[#allocation2 + $0x1398] sm:$0xff]
        %v862 = vld [vmem:[#allocation2 + $0x13a0] sm:$0xff]
        %v863 = vld [vmem:[#allocation2 + $0x13a8] sm:$0xff]
        %v864 = vld [vmem:[#allocation2 + $0x13b0] sm:$0xff]
        %v865 = vld [vmem:[#allocation2 + $0x13b8] sm:$0xff]
        %v866 = vld [vmem:[#allocation2 + $0x13c0] sm:$0xff]
        %v867 = vld [vmem:[#allocation2 + $0x13c8] sm:$0xff]
        %v868 = vld [vmem:[#allocation2 + $0x13d0] sm:$0xff]
        %v869 = vld [vmem:[#allocation2 + $0x13d8] sm:$0xff]
        %v870 = vld [vmem:[#allocation2 + $0x13e0] sm:$0xff]
        %v871 = vld [vmem:[#allocation2 + $0x13e8] sm:$0xff]
        %v872 = vld [vmem:[#allocation2 + $0x13f0] sm:$0xff]
        %v873 = vld [vmem:[#allocation2 + $0x13f8] sm:$0xff]
        %v874 = vld [vmem:[#allocation2 + $0x1400] sm:$0xff]
        %v875 = vld [vmem:[#allocation2 + $0x1408] sm:$0xff]
        %v876 = vld [vmem:[#allocation2 + $0x1410] sm:$0xff]
        %v877 = vld [vmem:[#allocation2 + $0x1418] sm:$0xff]
        %v878 = vld [vmem:[#allocation2 + $0x1420] sm:$0xff]
        %v879 = vld [vmem:[#allocation2 + $0x1428] sm:$0xff]
        %v880 = vld [vmem:[#allocation2 + $0x1430] sm:$0xff]
        %v881 = vld [vmem:[#allocation2 + $0x1438] sm:$0xff]
        %v882 = vld [vmem:[#allocation2 + $0x1440] sm:$0xff]
        %v883 = vld [vmem:[#allocation2 + $0x1448] sm:$0xff]
        %v884 = vld [vmem:[#allocation2 + $0x1450] sm:$0xff]
        %v885 = vld [vmem:[#allocation2 + $0x1458] sm:$0xff]
        %v886 = vld [vmem:[#allocation2 + $0x1460] sm:$0xff]
        %v887 = vld [vmem:[#allocation2 + $0x1468] sm:$0xff]
        %v888 = vld [vmem:[#allocation2 + $0x1470] sm:$0xff]
        %v889 = vld [vmem:[#allocation2 + $0x1478] sm:$0xff]
        %v890 = vld [vmem:[#allocation2 + $0x1480] sm:$0xff]
        %v891 = vld [vmem:[#allocation2 + $0x1488] sm:$0xff]
        %v892 = vld [vmem:[#allocation2 + $0x1490] sm:$0xff]
        %v893 = vld [vmem:[#allocation2 + $0x1498] sm:$0xff]
        %v894 = vld [vmem:[#allocation2 + $0x14a0] sm:$0xff]
        %v895 = vld [vmem:[#allocation2 + $0x14a8] sm:$0xff]
        %v896 = vld [vmem:[#allocation2 + $0x14b0] sm:$0xff]
        %v897 = vld [vmem:[#allocation2 + $0x14b8] sm:$0xff]
        %v898 = vld [vmem:[#allocation2 + $0x14c0] sm:$0xff]
        %v899 = vld [vmem:[#allocation2 + $0x14c8] sm:$0xff]
        %v900 = vld [vmem:[#allocation2 + $0x14d0] sm:$0xff]
        %v901 = vld [vmem:[#allocation2 + $0x14d8] sm:$0xff]
        %v902 = vld [vmem:[#allocation2 + $0x14e0] sm:$0xff]
        %v903 = vld [vmem:[#allocation2 + $0x14e8] sm:$0xff]
        %v904 = vld [vmem:[#allocation2 + $0x14f0] sm:$0xff]
        %v905 = vld [vmem:[#allocation2 + $0x14f8] sm:$0xff]
        %v906 = vld [vmem:[#allocation2 + $0x1500] sm:$0xff]
        %v907 = vld [vmem:[#allocation2 + $0x1508] sm:$0xff]
        %v908 = vld [vmem:[#allocation2 + $0x1510] sm:$0xff]
        %v909 = vld [vmem:[#allocation2 + $0x1518] sm:$0xff]
        %v910 = vld [vmem:[#allocation2 + $0x1520] sm:$0xff]
        %v911 = vld [vmem:[#allocation2 + $0x1528] sm:$0xff]
        %v912 = vld [vmem:[#allocation2 + $0x1530] sm:$0xff]
        %v913 = vld [vmem:[#allocation2 + $0x1538] sm:$0xff]
        %v914 = vld [vmem:[#allocation2 + $0x1540] sm:$0xff]
        %v915 = vld [vmem:[#allocation2 + $0x1548] sm:$0xff]
        %v916 = vld [vmem:[#allocation2 + $0x1550] sm:$0xff]
        %v917 = vld [vmem:[#allocation2 + $0x1558] sm:$0xff]
        %v918 = vld [vmem:[#allocation2 + $0x1560] sm:$0xff]
        %v919 = vld [vmem:[#allocation2 + $0x1568] sm:$0xff]
        %v920 = vld [vmem:[#allocation2 + $0x1570] sm:$0xff]
        %v921 = vld [vmem:[#allocation2 + $0x1578] sm:$0xff]
        %v922 = vld [vmem:[#allocation2 + $0x1580] sm:$0xff]
        %v923 = vld [vmem:[#allocation2 + $0x1588] sm:$0xff]
        %v924 = vld [vmem:[#allocation2 + $0x1590] sm:$0xff]
        %v925 = vld [vmem:[#allocation2 + $0x1598] sm:$0xff]
        %v926 = vld [vmem:[#allocation2 + $0x15a0] sm:$0xff]
        %v927 = vld [vmem:[#allocation2 + $0x15a8] sm:$0xff]
        %v928 = vld [vmem:[#allocation2 + $0x15b0] sm:$0xff]
        %v929 = vld [vmem:[#allocation2 + $0x15b8] sm:$0xff]
        %v930 = vld [vmem:[#allocation2 + $0x15c0] sm:$0xff]
        %v931 = vld [vmem:[#allocation2 + $0x15c8] sm:$0xff]
        %v932 = vld [vmem:[#allocation2 + $0x15d0] sm:$0xff]
        %v933 = vld [vmem:[#allocation2 + $0x15d8] sm:$0xff]
        %v934 = vld [vmem:[#allocation2 + $0x15e0] sm:$0xff]
        %v935 = vld [vmem:[#allocation2 + $0x15e8] sm:$0xff]
        %v936 = vld [vmem:[#allocation2 + $0x15f0] sm:$0xff]
        %v937 = vld [vmem:[#allocation2 + $0x15f8] sm:$0xff]
        %v938 = vld [vmem:[#allocation2 + $0x1600] sm:$0xff]
        %v939 = vld [vmem:[#allocation2 + $0x1608] sm:$0xff]
        %v940 = vld [vmem:[#allocation2 + $0x1610] sm:$0xff]
        %v941 = vld [vmem:[#allocation2 + $0x1618] sm:$0xff]
        %v942 = vld [vmem:[#allocation2 + $0x1620] sm:$0xff]
        %v943 = vld [vmem:[#allocation2 + $0x1628] sm:$0xff]
        %v944 = vld [vmem:[#allocation2 + $0x1630] sm:$0xff]
        %v945 = vld [vmem:[#allocation2 + $0x1638] sm:$0xff]
        %v946 = vld [vmem:[#allocation2 + $0x1640] sm:$0xff]
        %v947 = vld [vmem:[#allocation2 + $0x1648] sm:$0xff]
        %v948 = vld [vmem:[#allocation2 + $0x1650] sm:$0xff]
        %v949 = vld [vmem:[#allocation2 + $0x1658] sm:$0xff]
        %v950 = vld [vmem:[#allocation2 + $0x1660] sm:$0xff]
        %v951 = vld [vmem:[#allocation2 + $0x1668] sm:$0xff]
        %v952 = vld [vmem:[#allocation2 + $0x1670] sm:$0xff]
        %v953 = vld [vmem:[#allocation2 + $0x1678] sm:$0xff]
        %v954 = vld [vmem:[#allocation2 + $0x1680] sm:$0xff]
        %v955 = vld [vmem:[#allocation2 + $0x1688] sm:$0xff]
        %v956 = vld [vmem:[#allocation2 + $0x1690] sm:$0xff]
        %v957 = vld [vmem:[#allocation2 + $0x1698] sm:$0xff]
        %v958 = vld [vmem:[#allocation2 + $0x16a0] sm:$0xff]
        %v959 = vld [vmem:[#allocation2 + $0x16a8] sm:$0xff]
        %v960 = vld [vmem:[#allocation2 + $0x16b0] sm:$0xff]
        %v961 = vld [vmem:[#allocation2 + $0x16b8] sm:$0xff]
        %v962 = vld [vmem:[#allocation2 + $0x16c0] sm:$0xff]
        %v963 = vld [vmem:[#allocation2 + $0x16c8] sm:$0xff]
        %v964 = vld [vmem:[#allocation2 + $0x16d0] sm:$0xff]
        %v965 = vld [vmem:[#allocation2 + $0x16d8] sm:$0xff]
        %v966 = vld [vmem:[#allocation2 + $0x16e0] sm:$0xff]
        %v967 = vld [vmem:[#allocation2 + $0x16e8] sm:$0xff]
        %v968 = vld [vmem:[#allocation2 + $0x16f0] sm:$0xff]
        %v969 = vld [vmem:[#allocation2 + $0x16f8] sm:$0xff]
        %v970 = vld [vmem:[#allocation2 + $0x1700] sm:$0xff]
        %v971 = vld [vmem:[#allocation2 + $0x1708] sm:$0xff]
        %v972 = vld [vmem:[#allocation2 + $0x1710] sm:$0xff]
        %v973 = vld [vmem:[#allocation2 + $0x1718] sm:$0xff]
        %v974 = vld [vmem:[#allocation2 + $0x1720] sm:$0xff]
        %v975 = vld [vmem:[#allocation2 + $0x1728] sm:$0xff]
        %v976 = vld [vmem:[#allocation2 + $0x1730] sm:$0xff]
        %v977 = vld [vmem:[#allocation2 + $0x1738] sm:$0xff]
        %v978 = vld [vmem:[#allocation2 + $0x1740] sm:$0xff]
        %v979 = vld [vmem:[#allocation2 + $0x1748] sm:$0xff]
        %v980 = vld [vmem:[#allocation2 + $0x1750] sm:$0xff]
        %v981 = vld [vmem:[#allocation2 + $0x1758] sm:$0xff]
        %v982 = vld [vmem:[#allocation2 + $0x1760] sm:$0xff]
        %v983 = vld [vmem:[#allocation2 + $0x1768] sm:$0xff]
        %v984 = vld [vmem:[#allocation2 + $0x1770] sm:$0xff]
        %v985 = vld [vmem:[#allocation2 + $0x1778] sm:$0xff]
        %v986 = vld [vmem:[#allocation2 + $0x1780] sm:$0xff]
        %v987 = vld [vmem:[#allocation2 + $0x1788] sm:$0xff]
        %v988 = vld [vmem:[#allocation2 + $0x1790] sm:$0xff]
        %v989 = vld [vmem:[#allocation2 + $0x1798] sm:$0xff]
        %v990 = vld [vmem:[#allocation2 + $0x17a0] sm:$0xff]
        %v991 = vld [vmem:[#allocation2 + $0x17a8] sm:$0xff]
        %v992 = vld [vmem:[#allocation2 + $0x17b0] sm:$0xff]
        %v993 = vld [vmem:[#allocation2 + $0x17b8] sm:$0xff]
        %v994 = vld [vmem:[#allocation2 + $0x17c0] sm:$0xff]
        %v995 = vld [vmem:[#allocation2 + $0x17c8] sm:$0xff]
        %v996 = vld [vmem:[#allocation2 + $0x17d0] sm:$0xff]
        %v997 = vld [vmem:[#allocation2 + $0x17d8] sm:$0xff]
        %v998 = vld [vmem:[#allocation2 + $0x17e0] sm:$0xff]
        %v999 = vld [vmem:[#allocation2 + $0x17e8] sm:$0xff]
        %v1000 = vld [vmem:[#allocation2 + $0x17f0] sm:$0xff]
        %v1001 = vld [vmem:[#allocation2 + $0x17f8] sm:$0xff]
        %v1002 = vld [vmem:[#allocation2 + $0x1800] sm:$0xff]
        %v1003 = vld [vmem:[#allocation2 + $0x1808] sm:$0xff]
        %v1004 = vld [vmem:[#allocation2 + $0x1810] sm:$0xff]
        %v1005 = vld [vmem:[#allocation2 + $0x1818] sm:$0xff]
        %v1006 = vld [vmem:[#allocation2 + $0x1820] sm:$0xff]
        %v1007 = vld [vmem:[#allocation2 + $0x1828] sm:$0xff]
        %v1008 = vld [vmem:[#allocation2 + $0x1830] sm:$0xff]
        %v1009 = vld [vmem:[#allocation2 + $0x1838] sm:$0xff]
        %v1010 = vld [vmem:[#allocation2 + $0x1840] sm:$0xff]
        %v1011 = vld [vmem:[#allocation2 + $0x1848] sm:$0xff]
        %v1012 = vld [vmem:[#allocation2 + $0x1850] sm:$0xff]
        %v1013 = vld [vmem:[#allocation2 + $0x1858] sm:$0xff]
        %v1014 = vld [vmem:[#allocation2 + $0x1860] sm:$0xff]
        %v1015 = vld [vmem:[#allocation2 + $0x1868] sm:$0xff]
        %v1016 = vld [vmem:[#allocation2 + $0x1870] sm:$0xff]
        %v1017 = vld [vmem:[#allocation2 + $0x1878] sm:$0xff]
        %v1018 = vpack.c.bf16 %v242, %v234
        %v1019 = vpack.c.bf16 %v243, %v235
        %v1020 = vpack.c.bf16 %v244, %v236
        %v1021 = vpack.c.bf16 %v245, %v237
        %v1022 = vpack.c.bf16 %v246, %v238
        %v1023 = vpack.c.bf16 %v247, %v239
        %v1024 = vpack.c.bf16 %v248, %v240
        %v1025 = vpack.c.bf16 %v249, %v241
        %v1026 = vpack.c.bf16 %v258, %v250
        %v1027 = vpack.c.bf16 %v259, %v251
        %v1028 = vpack.c.bf16 %v260, %v252
        %v1029 = vpack.c.bf16 %v261, %v253
        %v1030 = vpack.c.bf16 %v262, %v254
        %v1031 = vpack.c.bf16 %v263, %v255
        %v1032 = vpack.c.bf16 %v264, %v256
        %v1033 = vpack.c.bf16 %v265, %v257
        %v1034 = vpack.c.bf16 %v274, %v266
        %v1035 = vpack.c.bf16 %v275, %v267
        %v1036 = vpack.c.bf16 %v276, %v268
        %v1037 = vpack.c.bf16 %v277, %v269
        %v1038 = vpack.c.bf16 %v278, %v270
        %v1039 = vpack.c.bf16 %v279, %v271
        %v1040 = vpack.c.bf16 %v280, %v272
        %v1041 = vpack.c.bf16 %v281, %v273
        %v1042 = vpack.c.bf16 %v290, %v282
        %v1043 = vpack.c.bf16 %v291, %v283
        %v1044 = vpack.c.bf16 %v292, %v284
        %v1045 = vpack.c.bf16 %v293, %v285
        %v1046 = vpack.c.bf16 %v294, %v286
        %v1047 = vpack.c.bf16 %v295, %v287
        %v1048 = vpack.c.bf16 %v296, %v288
        %v1049 = vpack.c.bf16 %v297, %v289
        %v1050 = vpack.c.bf16 %v306, %v298
        %v1051 = vpack.c.bf16 %v307, %v299
        %v1052 = vpack.c.bf16 %v308, %v300
        %v1053 = vpack.c.bf16 %v309, %v301
        %v1054 = vpack.c.bf16 %v310, %v302
        %v1055 = vpack.c.bf16 %v311, %v303
        %v1056 = vpack.c.bf16 %v312, %v304
        %v1057 = vpack.c.bf16 %v313, %v305
        %v1058 = vpack.c.bf16 %v322, %v314
        %v1059 = vpack.c.bf16 %v323, %v315
        %v1060 = vpack.c.bf16 %v324, %v316
        %v1061 = vpack.c.bf16 %v325, %v317
        %v1062 = vpack.c.bf16 %v326, %v318
        %v1063 = vpack.c.bf16 %v327, %v319
        %v1064 = vpack.c.bf16 %v328, %v320
        %v1065 = vpack.c.bf16 %v329, %v321
        %v1066 = vpack.c.bf16 %v338, %v330
        %v1067 = vpack.c.bf16 %v339, %v331
        %v1068 = vpack.c.bf16 %v340, %v332
        %v1069 = vpack.c.bf16 %v341, %v333
        %v1070 = vpack.c.bf16 %v342, %v334
        %v1071 = vpack.c.bf16 %v343, %v335
        %v1072 = vpack.c.bf16 %v344, %v336
        %v1073 = vpack.c.bf16 %v345, %v337
        %v1074 = vpack.c.bf16 %v354, %v346
        %v1075 = vpack.c.bf16 %v355, %v347
        %v1076 = vpack.c.bf16 %v356, %v348
        %v1077 = vpack.c.bf16 %v357, %v349
        %v1078 = vpack.c.bf16 %v358, %v350
        %v1079 = vpack.c.bf16 %v359, %v351
        %v1080 = vpack.c.bf16 %v360, %v352
        %v1081 = vpack.c.bf16 %v361, %v353
        %v1082 = vpack.c.bf16 %v370, %v362
        %v1083 = vpack.c.bf16 %v371, %v363
        %v1084 = vpack.c.bf16 %v372, %v364
        %v1085 = vpack.c.bf16 %v373, %v365
        %v1086 = vpack.c.bf16 %v374, %v366
        %v1087 = vpack.c.bf16 %v375, %v367
        %v1088 = vpack.c.bf16 %v376, %v368
        %v1089 = vpack.c.bf16 %v377, %v369
        %v1090 = vpack.c.bf16 %v386, %v378
        %v1091 = vpack.c.bf16 %v387, %v379
        %v1092 = vpack.c.bf16 %v388, %v380
        %v1093 = vpack.c.bf16 %v389, %v381
        %v1094 = vpack.c.bf16 %v390, %v382
        %v1095 = vpack.c.bf16 %v391, %v383
        %v1096 = vpack.c.bf16 %v392, %v384
        %v1097 = vpack.c.bf16 %v393, %v385
        %v1098 = vpack.c.bf16 %v402, %v394
        %v1099 = vpack.c.bf16 %v403, %v395
        %v1100 = vpack.c.bf16 %v404, %v396
        %v1101 = vpack.c.bf16 %v405, %v397
        %v1102 = vpack.c.bf16 %v406, %v398
        %v1103 = vpack.c.bf16 %v407, %v399
        %v1104 = vpack.c.bf16 %v408, %v400
        %v1105 = vpack.c.bf16 %v409, %v401
        %v1106 = vpack.c.bf16 %v418, %v410
        %v1107 = vpack.c.bf16 %v419, %v411
        %v1108 = vpack.c.bf16 %v420, %v412
        %v1109 = vpack.c.bf16 %v421, %v413
        %v1110 = vpack.c.bf16 %v422, %v414
        %v1111 = vpack.c.bf16 %v423, %v415
        %v1112 = vpack.c.bf16 %v424, %v416
        %v1113 = vpack.c.bf16 %v425, %v417
        %v1114 = vpack.c.bf16 %v434, %v426
        %v1115 = vpack.c.bf16 %v435, %v427
        %v1116 = vpack.c.bf16 %v436, %v428
        %v1117 = vpack.c.bf16 %v437, %v429
        %v1118 = vpack.c.bf16 %v438, %v430
        %v1119 = vpack.c.bf16 %v439, %v431
        %v1120 = vpack.c.bf16 %v440, %v432
        %v1121 = vpack.c.bf16 %v441, %v433
        %v1122 = vpack.c.bf16 %v450, %v442
        %v1123 = vpack.c.bf16 %v451, %v443
        %v1124 = vpack.c.bf16 %v452, %v444
        %v1125 = vpack.c.bf16 %v453, %v445
        %v1126 = vpack.c.bf16 %v454, %v446
        %v1127 = vpack.c.bf16 %v455, %v447
        %v1128 = vpack.c.bf16 %v456, %v448
        %v1129 = vpack.c.bf16 %v457, %v449
        %v1130 = vpack.c.bf16 %v466, %v458
        %v1131 = vpack.c.bf16 %v467, %v459
        %v1132 = vpack.c.bf16 %v468, %v460
        %v1133 = vpack.c.bf16 %v469, %v461
        %v1134 = vpack.c.bf16 %v470, %v462
        %v1135 = vpack.c.bf16 %v471, %v463
        %v1136 = vpack.c.bf16 %v472, %v464
        %v1137 = vpack.c.bf16 %v473, %v465
        %v1138 = vpack.c.bf16 %v482, %v474
        %v1139 = vpack.c.bf16 %v483, %v475
        %v1140 = vpack.c.bf16 %v484, %v476
        %v1141 = vpack.c.bf16 %v485, %v477
        %v1142 = vpack.c.bf16 %v486, %v478
        %v1143 = vpack.c.bf16 %v487, %v479
        %v1144 = vpack.c.bf16 %v488, %v480
        %v1145 = vpack.c.bf16 %v489, %v481
        %v1146 = vpack.c.bf16 %v498, %v490
        %v1147 = vpack.c.bf16 %v499, %v491
        %v1148 = vpack.c.bf16 %v500, %v492
        %v1149 = vpack.c.bf16 %v501, %v493
        %v1150 = vpack.c.bf16 %v502, %v494
        %v1151 = vpack.c.bf16 %v503, %v495
        %v1152 = vpack.c.bf16 %v504, %v496
        %v1153 = vpack.c.bf16 %v505, %v497
        %v1154 = vpack.c.bf16 %v514, %v506
        %v1155 = vpack.c.bf16 %v515, %v507
        %v1156 = vpack.c.bf16 %v516, %v508
        %v1157 = vpack.c.bf16 %v517, %v509
        %v1158 = vpack.c.bf16 %v518, %v510
        %v1159 = vpack.c.bf16 %v519, %v511
        %v1160 = vpack.c.bf16 %v520, %v512
        %v1161 = vpack.c.bf16 %v521, %v513
        %v1162 = vpack.c.bf16 %v530, %v522
        %v1163 = vpack.c.bf16 %v531, %v523
        %v1164 = vpack.c.bf16 %v532, %v524
        %v1165 = vpack.c.bf16 %v533, %v525
        %v1166 = vpack.c.bf16 %v534, %v526
        %v1167 = vpack.c.bf16 %v535, %v527
        %v1168 = vpack.c.bf16 %v536, %v528
        %v1169 = vpack.c.bf16 %v537, %v529
        %v1170 = vpack.c.bf16 %v546, %v538
        %v1171 = vpack.c.bf16 %v547, %v539
        %v1172 = vpack.c.bf16 %v548, %v540
        %v1173 = vpack.c.bf16 %v549, %v541
        %v1174 = vpack.c.bf16 %v550, %v542
        %v1175 = vpack.c.bf16 %v551, %v543
        %v1176 = vpack.c.bf16 %v552, %v544
        %v1177 = vpack.c.bf16 %v553, %v545
        %v1178 = vpack.c.bf16 %v562, %v554
        %v1179 = vpack.c.bf16 %v563, %v555
        %v1180 = vpack.c.bf16 %v564, %v556
        %v1181 = vpack.c.bf16 %v565, %v557
        %v1182 = vpack.c.bf16 %v566, %v558
        %v1183 = vpack.c.bf16 %v567, %v559
        %v1184 = vpack.c.bf16 %v568, %v560
        %v1185 = vpack.c.bf16 %v569, %v561
        %v1186 = vpack.c.bf16 %v578, %v570
        %v1187 = vpack.c.bf16 %v579, %v571
        %v1188 = vpack.c.bf16 %v580, %v572
        %v1189 = vpack.c.bf16 %v581, %v573
        %v1190 = vpack.c.bf16 %v582, %v574
        %v1191 = vpack.c.bf16 %v583, %v575
        %v1192 = vpack.c.bf16 %v584, %v576
        %v1193 = vpack.c.bf16 %v585, %v577
        %v1194 = vpack.c.bf16 %v594, %v586
        %v1195 = vpack.c.bf16 %v595, %v587
        %v1196 = vpack.c.bf16 %v596, %v588
        %v1197 = vpack.c.bf16 %v597, %v589
        %v1198 = vpack.c.bf16 %v598, %v590
        %v1199 = vpack.c.bf16 %v599, %v591
        %v1200 = vpack.c.bf16 %v600, %v592
        %v1201 = vpack.c.bf16 %v601, %v593
        %v1202 = vpack.c.bf16 %v610, %v602
        %v1203 = vpack.c.bf16 %v611, %v603
        %v1204 = vpack.c.bf16 %v612, %v604
        %v1205 = vpack.c.bf16 %v613, %v605
        %v1206 = vpack.c.bf16 %v614, %v606
        %v1207 = vpack.c.bf16 %v615, %v607
        %v1208 = vpack.c.bf16 %v616, %v608
        %v1209 = vpack.c.bf16 %v617, %v609
        %v1210 = vpack.c.bf16 %v626, %v618
        %v1211 = vpack.c.bf16 %v627, %v619
        %v1212 = vpack.c.bf16 %v628, %v620
        %v1213 = vpack.c.bf16 %v629, %v621
        %v1214 = vpack.c.bf16 %v630, %v622
        %v1215 = vpack.c.bf16 %v631, %v623
        %v1216 = vpack.c.bf16 %v632, %v624
        %v1217 = vpack.c.bf16 %v633, %v625
        %v1218 = vpack.c.bf16 %v642, %v634
        %v1219 = vpack.c.bf16 %v643, %v635
        %v1220 = vpack.c.bf16 %v644, %v636
        %v1221 = vpack.c.bf16 %v645, %v637
        %v1222 = vpack.c.bf16 %v646, %v638
        %v1223 = vpack.c.bf16 %v647, %v639
        %v1224 = vpack.c.bf16 %v648, %v640
        %v1225 = vpack.c.bf16 %v649, %v641
        %v1226 = vpack.c.bf16 %v658, %v650
        %v1227 = vpack.c.bf16 %v659, %v651
        %v1228 = vpack.c.bf16 %v660, %v652
        %v1229 = vpack.c.bf16 %v661, %v653
        %v1230 = vpack.c.bf16 %v662, %v654
        %v1231 = vpack.c.bf16 %v663, %v655
        %v1232 = vpack.c.bf16 %v664, %v656
        %v1233 = vpack.c.bf16 %v665, %v657
        %v1234 = vpack.c.bf16 %v674, %v666
        %v1235 = vpack.c.bf16 %v675, %v667
        %v1236 = vpack.c.bf16 %v676, %v668
        %v1237 = vpack.c.bf16 %v677, %v669
        %v1238 = vpack.c.bf16 %v678, %v670
        %v1239 = vpack.c.bf16 %v679, %v671
        %v1240 = vpack.c.bf16 %v680, %v672
        %v1241 = vpack.c.bf16 %v681, %v673
        %v1242 = vpack.c.bf16 %v690, %v682
        %v1243 = vpack.c.bf16 %v691, %v683
        %v1244 = vpack.c.bf16 %v692, %v684
        %v1245 = vpack.c.bf16 %v693, %v685
        %v1246 = vpack.c.bf16 %v694, %v686
        %v1247 = vpack.c.bf16 %v695, %v687
        %v1248 = vpack.c.bf16 %v696, %v688
        %v1249 = vpack.c.bf16 %v697, %v689
        %v1250 = vpack.c.bf16 %v706, %v698
        %v1251 = vpack.c.bf16 %v707, %v699
        %v1252 = vpack.c.bf16 %v708, %v700
        %v1253 = vpack.c.bf16 %v709, %v701
        %v1254 = vpack.c.bf16 %v710, %v702
        %v1255 = vpack.c.bf16 %v711, %v703
        %v1256 = vpack.c.bf16 %v712, %v704
        %v1257 = vpack.c.bf16 %v713, %v705
        %v1258 = vpack.c.bf16 %v722, %v714
        %v1259 = vpack.c.bf16 %v723, %v715
        %v1260 = vpack.c.bf16 %v724, %v716
        %v1261 = vpack.c.bf16 %v725, %v717
        %v1262 = vpack.c.bf16 %v726, %v718
        %v1263 = vpack.c.bf16 %v727, %v719
        %v1264 = vpack.c.bf16 %v728, %v720
        %v1265 = vpack.c.bf16 %v729, %v721
        %v1266 = vpack.c.bf16 %v738, %v730
        %v1267 = vpack.c.bf16 %v739, %v731
        %v1268 = vpack.c.bf16 %v740, %v732
        %v1269 = vpack.c.bf16 %v741, %v733
        %v1270 = vpack.c.bf16 %v742, %v734
        %v1271 = vpack.c.bf16 %v743, %v735
        %v1272 = vpack.c.bf16 %v744, %v736
        %v1273 = vpack.c.bf16 %v745, %v737
        %v1274 = vpack.c.bf16 %v754, %v746
        %v1275 = vpack.c.bf16 %v755, %v747
        %v1276 = vpack.c.bf16 %v756, %v748
        %v1277 = vpack.c.bf16 %v757, %v749
        %v1278 = vpack.c.bf16 %v758, %v750
        %v1279 = vpack.c.bf16 %v759, %v751
        %v1280 = vpack.c.bf16 %v760, %v752
        %v1281 = vpack.c.bf16 %v761, %v753
        %v1282 = vpack.c.bf16 %v770, %v762
        %v1283 = vpack.c.bf16 %v771, %v763
        %v1284 = vpack.c.bf16 %v772, %v764
        %v1285 = vpack.c.bf16 %v773, %v765
        %v1286 = vpack.c.bf16 %v774, %v766
        %v1287 = vpack.c.bf16 %v775, %v767
        %v1288 = vpack.c.bf16 %v776, %v768
        %v1289 = vpack.c.bf16 %v777, %v769
        %v1290 = vpack.c.bf16 %v786, %v778
        %v1291 = vpack.c.bf16 %v787, %v779
        %v1292 = vpack.c.bf16 %v788, %v780
        %v1293 = vpack.c.bf16 %v789, %v781
        %v1294 = vpack.c.bf16 %v790, %v782
        %v1295 = vpack.c.bf16 %v791, %v783
        %v1296 = vpack.c.bf16 %v792, %v784
        %v1297 = vpack.c.bf16 %v793, %v785
        %v1298 = vpack.c.bf16 %v802, %v794
        %v1299 = vpack.c.bf16 %v803, %v795
        %v1300 = vpack.c.bf16 %v804, %v796
        %v1301 = vpack.c.bf16 %v805, %v797
        %v1302 = vpack.c.bf16 %v806, %v798
        %v1303 = vpack.c.bf16 %v807, %v799
        %v1304 = vpack.c.bf16 %v808, %v800
        %v1305 = vpack.c.bf16 %v809, %v801
        %v1306 = vpack.c.bf16 %v818, %v810
        %v1307 = vpack.c.bf16 %v819, %v811
        %v1308 = vpack.c.bf16 %v820, %v812
        %v1309 = vpack.c.bf16 %v821, %v813
        %v1310 = vpack.c.bf16 %v822, %v814
        %v1311 = vpack.c.bf16 %v823, %v815
        %v1312 = vpack.c.bf16 %v824, %v816
        %v1313 = vpack.c.bf16 %v825, %v817
        %v1314 = vpack.c.bf16 %v834, %v826
        %v1315 = vpack.c.bf16 %v835, %v827
        %v1316 = vpack.c.bf16 %v836, %v828
        %v1317 = vpack.c.bf16 %v837, %v829
        %v1318 = vpack.c.bf16 %v838, %v830
        %v1319 = vpack.c.bf16 %v839, %v831
        %v1320 = vpack.c.bf16 %v840, %v832
        %v1321 = vpack.c.bf16 %v841, %v833
        %v1322 = vpack.c.bf16 %v850, %v842
        %v1323 = vpack.c.bf16 %v851, %v843
        %v1324 = vpack.c.bf16 %v852, %v844
        %v1325 = vpack.c.bf16 %v853, %v845
        %v1326 = vpack.c.bf16 %v854, %v846
        %v1327 = vpack.c.bf16 %v855, %v847
        %v1328 = vpack.c.bf16 %v856, %v848
        %v1329 = vpack.c.bf16 %v857, %v849
        %v1330 = vpack.c.bf16 %v866, %v858
        %v1331 = vpack.c.bf16 %v867, %v859
        %v1332 = vpack.c.bf16 %v868, %v860
        %v1333 = vpack.c.bf16 %v869, %v861
        %v1334 = vpack.c.bf16 %v870, %v862
        %v1335 = vpack.c.bf16 %v871, %v863
        %v1336 = vpack.c.bf16 %v872, %v864
        %v1337 = vpack.c.bf16 %v873, %v865
        %v1338 = vpack.c.bf16 %v882, %v874
        %v1339 = vpack.c.bf16 %v883, %v875
        %v1340 = vpack.c.bf16 %v884, %v876
        %v1341 = vpack.c.bf16 %v885, %v877
        %v1342 = vpack.c.bf16 %v886, %v878
        %v1343 = vpack.c.bf16 %v887, %v879
        %v1344 = vpack.c.bf16 %v888, %v880
        %v1345 = vpack.c.bf16 %v889, %v881
        %v1346 = vpack.c.bf16 %v898, %v890
        %v1347 = vpack.c.bf16 %v899, %v891
        %v1348 = vpack.c.bf16 %v900, %v892
        %v1349 = vpack.c.bf16 %v901, %v893
        %v1350 = vpack.c.bf16 %v902, %v894
        %v1351 = vpack.c.bf16 %v903, %v895
        %v1352 = vpack.c.bf16 %v904, %v896
        %v1353 = vpack.c.bf16 %v905, %v897
        %v1354 = vpack.c.bf16 %v914, %v906
        %v1355 = vpack.c.bf16 %v915, %v907
        %v1356 = vpack.c.bf16 %v916, %v908
        %v1357 = vpack.c.bf16 %v917, %v909
        %v1358 = vpack.c.bf16 %v918, %v910
        %v1359 = vpack.c.bf16 %v919, %v911
        %v1360 = vpack.c.bf16 %v920, %v912
        %v1361 = vpack.c.bf16 %v921, %v913
        %v1362 = vpack.c.bf16 %v930, %v922
        %v1363 = vpack.c.bf16 %v931, %v923
        %v1364 = vpack.c.bf16 %v932, %v924
        %v1365 = vpack.c.bf16 %v933, %v925
        %v1366 = vpack.c.bf16 %v934, %v926
        %v1367 = vpack.c.bf16 %v935, %v927
        %v1368 = vpack.c.bf16 %v936, %v928
        %v1369 = vpack.c.bf16 %v937, %v929
        %v1370 = vpack.c.bf16 %v946, %v938
        %v1371 = vpack.c.bf16 %v947, %v939
        %v1372 = vpack.c.bf16 %v948, %v940
        %v1373 = vpack.c.bf16 %v949, %v941
        %v1374 = vpack.c.bf16 %v950, %v942
        %v1375 = vpack.c.bf16 %v951, %v943
        %v1376 = vpack.c.bf16 %v952, %v944
        %v1377 = vpack.c.bf16 %v953, %v945
        %v1378 = vpack.c.bf16 %v962, %v954
        %v1379 = vpack.c.bf16 %v963, %v955
        %v1380 = vpack.c.bf16 %v964, %v956
        %v1381 = vpack.c.bf16 %v965, %v957
        %v1382 = vpack.c.bf16 %v966, %v958
        %v1383 = vpack.c.bf16 %v967, %v959
        %v1384 = vpack.c.bf16 %v968, %v960
        %v1385 = vpack.c.bf16 %v969, %v961
        %v1386 = vpack.c.bf16 %v978, %v970
        %v1387 = vpack.c.bf16 %v979, %v971
        %v1388 = vpack.c.bf16 %v980, %v972
        %v1389 = vpack.c.bf16 %v981, %v973
        %v1390 = vpack.c.bf16 %v982, %v974
        %v1391 = vpack.c.bf16 %v983, %v975
        %v1392 = vpack.c.bf16 %v984, %v976
        %v1393 = vpack.c.bf16 %v985, %v977
        %v1394 = vpack.c.bf16 %v994, %v986
        %v1395 = vpack.c.bf16 %v995, %v987
        %v1396 = vpack.c.bf16 %v996, %v988
        %v1397 = vpack.c.bf16 %v997, %v989
        %v1398 = vpack.c.bf16 %v998, %v990
        %v1399 = vpack.c.bf16 %v999, %v991
        %v1400 = vpack.c.bf16 %v1000, %v992
        %v1401 = vpack.c.bf16 %v1001, %v993
        %v1402 = vpack.c.bf16 %v1010, %v1002
        %v1403 = vpack.c.bf16 %v1011, %v1003
        %v1404 = vpack.c.bf16 %v1012, %v1004
        %v1405 = vpack.c.bf16 %v1013, %v1005
        %v1406 = vpack.c.bf16 %v1014, %v1006
        %v1407 = vpack.c.bf16 %v1015, %v1007
        %v1408 = vpack.c.bf16 %v1016, %v1008
        %v1409 = vpack.c.bf16 %v1017, %v1009
        %v1410 = vld [vmem:[%s190] sm:$0xff]
        %v1411 = vld [vmem:[%s190 + $0x8] sm:$0xff]
        %v1412 = vld [vmem:[%s190 + $0x10] sm:$0xff]
        %v1413 = vld [vmem:[%s190 + $0x18] sm:$0xff]
        %v1414 = vld [vmem:[%s190 + $0x20] sm:$0xff]
        %v1415 = vld [vmem:[%s190 + $0x28] sm:$0xff]
        %v1416 = vld [vmem:[%s190 + $0x30] sm:$0xff]
        %v1417 = vld [vmem:[%s190 + $0x38] sm:$0xff]
        %v1418 = vld [vmem:[%s190 + $0x40] sm:$0xff]
        %v1419 = vld [vmem:[%s190 + $0x48] sm:$0xff]
        %v1420 = vld [vmem:[%s190 + $0x50] sm:$0xff]
        %v1421 = vld [vmem:[%s190 + $0x58] sm:$0xff]
        %v1422 = vld [vmem:[%s190 + $0x60] sm:$0xff]
        %v1423 = vld [vmem:[%s190 + $0x68] sm:$0xff]
        %v1424 = vld [vmem:[%s190 + $0x70] sm:$0xff]
        %v1425 = vld [vmem:[%s190 + $0x78] sm:$0xff]
        %v1426 = vld [vmem:[%s190 + $0x80] sm:$0xff]
        %v1427 = vld [vmem:[%s190 + $0x88] sm:$0xff]
        %v1428 = vld [vmem:[%s190 + $0x90] sm:$0xff]
        %v1429 = vld [vmem:[%s190 + $0x98] sm:$0xff]
        %v1430 = vld [vmem:[%s190 + $0xa0] sm:$0xff]
        %v1431 = vld [vmem:[%s190 + $0xa8] sm:$0xff]
        %v1432 = vld [vmem:[%s190 + $0xb0] sm:$0xff]
        %v1433 = vld [vmem:[%s190 + $0xb8] sm:$0xff]
        %v1434 = vld [vmem:[%s190 + $0xc0] sm:$0xff]
        %v1435 = vld [vmem:[%s190 + $0xc8] sm:$0xff]
        %v1436 = vld [vmem:[%s190 + $0xd0] sm:$0xff]
        %v1437 = vld [vmem:[%s190 + $0xd8] sm:$0xff]
        %v1438 = vld [vmem:[%s190 + $0xe0] sm:$0xff]
        %v1439 = vld [vmem:[%s190 + $0xe8] sm:$0xff]
        %v1440 = vld [vmem:[%s190 + $0xf0] sm:$0xff]
        %v1441 = vld [vmem:[%s190 + $0xf8] sm:$0xff]
        %v1442 = vld [vmem:[%s190 + $0x100] sm:$0xff]
        %v1443 = vld [vmem:[%s190 + $0x108] sm:$0xff]
        %v1444 = vld [vmem:[%s190 + $0x110] sm:$0xff]
        %v1445 = vld [vmem:[%s190 + $0x118] sm:$0xff]
        %v1446 = vld [vmem:[%s190 + $0x120] sm:$0xff]
        %v1447 = vld [vmem:[%s190 + $0x128] sm:$0xff]
        %v1448 = vld [vmem:[%s190 + $0x130] sm:$0xff]
        %v1449 = vld [vmem:[%s190 + $0x138] sm:$0xff]
        %v1450 = vld [vmem:[%s190 + $0x140] sm:$0xff]
        %v1451 = vld [vmem:[%s190 + $0x148] sm:$0xff]
        %v1452 = vld [vmem:[%s190 + $0x150] sm:$0xff]
        %v1453 = vld [vmem:[%s190 + $0x158] sm:$0xff]
        %v1454 = vld [vmem:[%s190 + $0x160] sm:$0xff]
        %v1455 = vld [vmem:[%s190 + $0x168] sm:$0xff]
        %v1456 = vld [vmem:[%s190 + $0x170] sm:$0xff]
        %v1457 = vld [vmem:[%s190 + $0x178] sm:$0xff]
        %v1458 = vld [vmem:[%s190 + $0x180] sm:$0xff]
        %v1459 = vld [vmem:[%s190 + $0x188] sm:$0xff]
        %v1460 = vld [vmem:[%s190 + $0x190] sm:$0xff]
        %v1461 = vld [vmem:[%s190 + $0x198] sm:$0xff]
        %v1462 = vld [vmem:[%s190 + $0x1a0] sm:$0xff]
        %v1463 = vld [vmem:[%s190 + $0x1a8] sm:$0xff]
        %v1464 = vld [vmem:[%s190 + $0x1b0] sm:$0xff]
        %v1465 = vld [vmem:[%s190 + $0x1b8] sm:$0xff]
        %v1466 = vld [vmem:[%s190 + $0x1c0] sm:$0xff]
        %v1467 = vld [vmem:[%s190 + $0x1c8] sm:$0xff]
        %v1468 = vld [vmem:[%s190 + $0x1d0] sm:$0xff]
        %v1469 = vld [vmem:[%s190 + $0x1d8] sm:$0xff]
        %v1470 = vld [vmem:[%s190 + $0x1e0] sm:$0xff]
        %v1471 = vld [vmem:[%s190 + $0x1e8] sm:$0xff]
        %v1472 = vld [vmem:[%s190 + $0x1f0] sm:$0xff]
        %v1473 = vld [vmem:[%s190 + $0x1f8] sm:$0xff]
        %v1474 = vld [vmem:[%s190 + $0x200] sm:$0xff]
        %v1475 = vld [vmem:[%s190 + $0x208] sm:$0xff]
        %v1476 = vld [vmem:[%s190 + $0x210] sm:$0xff]
        %v1477 = vld [vmem:[%s190 + $0x218] sm:$0xff]
        %v1478 = vld [vmem:[%s190 + $0x220] sm:$0xff]
        %v1479 = vld [vmem:[%s190 + $0x228] sm:$0xff]
        %v1480 = vld [vmem:[%s190 + $0x230] sm:$0xff]
        %v1481 = vld [vmem:[%s190 + $0x238] sm:$0xff]
        %v1482 = vld [vmem:[%s190 + $0x240] sm:$0xff]
        %v1483 = vld [vmem:[%s190 + $0x248] sm:$0xff]
        %v1484 = vld [vmem:[%s190 + $0x250] sm:$0xff]
        %v1485 = vld [vmem:[%s190 + $0x258] sm:$0xff]
        %v1486 = vld [vmem:[%s190 + $0x260] sm:$0xff]
        %v1487 = vld [vmem:[%s190 + $0x268] sm:$0xff]
        %v1488 = vld [vmem:[%s190 + $0x270] sm:$0xff]
        %v1489 = vld [vmem:[%s190 + $0x278] sm:$0xff]
        %v1490 = vld [vmem:[%s190 + $0x280] sm:$0xff]
        %v1491 = vld [vmem:[%s190 + $0x288] sm:$0xff]
        %v1492 = vld [vmem:[%s190 + $0x290] sm:$0xff]
        %v1493 = vld [vmem:[%s190 + $0x298] sm:$0xff]
        %v1494 = vld [vmem:[%s190 + $0x2a0] sm:$0xff]
        %v1495 = vld [vmem:[%s190 + $0x2a8] sm:$0xff]
        %v1496 = vld [vmem:[%s190 + $0x2b0] sm:$0xff]
        %v1497 = vld [vmem:[%s190 + $0x2b8] sm:$0xff]
        %v1498 = vld [vmem:[%s190 + $0x2c0] sm:$0xff]
        %v1499 = vld [vmem:[%s190 + $0x2c8] sm:$0xff]
        %v1500 = vld [vmem:[%s190 + $0x2d0] sm:$0xff]
        %v1501 = vld [vmem:[%s190 + $0x2d8] sm:$0xff]
        %v1502 = vld [vmem:[%s190 + $0x2e0] sm:$0xff]
        %v1503 = vld [vmem:[%s190 + $0x2e8] sm:$0xff]
        %v1504 = vld [vmem:[%s190 + $0x2f0] sm:$0xff]
        %v1505 = vld [vmem:[%s190 + $0x2f8] sm:$0xff]
        %v1506 = vld [vmem:[%s190 + $0x300] sm:$0xff]
        %v1507 = vld [vmem:[%s190 + $0x308] sm:$0xff]
        %v1508 = vld [vmem:[%s190 + $0x310] sm:$0xff]
        %v1509 = vld [vmem:[%s190 + $0x318] sm:$0xff]
        %v1510 = vld [vmem:[%s190 + $0x320] sm:$0xff]
        %v1511 = vld [vmem:[%s190 + $0x328] sm:$0xff]
        %v1512 = vld [vmem:[%s190 + $0x330] sm:$0xff]
        %v1513 = vld [vmem:[%s190 + $0x338] sm:$0xff]
        %v1514 = vld [vmem:[%s190 + $0x340] sm:$0xff]
        %v1515 = vld [vmem:[%s190 + $0x348] sm:$0xff]
        %v1516 = vld [vmem:[%s190 + $0x350] sm:$0xff]
        %v1517 = vld [vmem:[%s190 + $0x358] sm:$0xff]
        %v1518 = vld [vmem:[%s190 + $0x360] sm:$0xff]
        %v1519 = vld [vmem:[%s190 + $0x368] sm:$0xff]
        %v1520 = vld [vmem:[%s190 + $0x370] sm:$0xff]
        %v1521 = vld [vmem:[%s190 + $0x378] sm:$0xff]
        %v1522 = vld [vmem:[%s190 + $0x380] sm:$0xff]
        %v1523 = vld [vmem:[%s190 + $0x388] sm:$0xff]
        %v1524 = vld [vmem:[%s190 + $0x390] sm:$0xff]
        %v1525 = vld [vmem:[%s190 + $0x398] sm:$0xff]
        %v1526 = vld [vmem:[%s190 + $0x3a0] sm:$0xff]
        %v1527 = vld [vmem:[%s190 + $0x3a8] sm:$0xff]
        %v1528 = vld [vmem:[%s190 + $0x3b0] sm:$0xff]
        %v1529 = vld [vmem:[%s190 + $0x3b8] sm:$0xff]
        %v1530 = vld [vmem:[%s190 + $0x3c0] sm:$0xff]
        %v1531 = vld [vmem:[%s190 + $0x3c8] sm:$0xff]
        %v1532 = vld [vmem:[%s190 + $0x3d0] sm:$0xff]
        %v1533 = vld [vmem:[%s190 + $0x3d8] sm:$0xff]
        %v1534 = vld [vmem:[%s190 + $0x3e0] sm:$0xff]
        %v1535 = vld [vmem:[%s190 + $0x3e8] sm:$0xff]
        %v1536 = vld [vmem:[%s190 + $0x3f0] sm:$0xff]
        %v1537 = vld [vmem:[%s190 + $0x3f8] sm:$0xff]
        %v1538 = vpack.c.bf16 %v1418, %v1410
        %v1539 = vpack.c.bf16 %v1419, %v1411
        %v1540 = vpack.c.bf16 %v1420, %v1412
        %v1541 = vpack.c.bf16 %v1421, %v1413
        %v1542 = vpack.c.bf16 %v1422, %v1414
        %v1543 = vpack.c.bf16 %v1423, %v1415
        %v1544 = vpack.c.bf16 %v1424, %v1416
        %v1545 = vpack.c.bf16 %v1425, %v1417
        %v1546 = vpack.c.bf16 %v1434, %v1426
        %v1547 = vpack.c.bf16 %v1435, %v1427
        %v1548 = vpack.c.bf16 %v1436, %v1428
        %v1549 = vpack.c.bf16 %v1437, %v1429
        %v1550 = vpack.c.bf16 %v1438, %v1430
        %v1551 = vpack.c.bf16 %v1439, %v1431
        %v1552 = vpack.c.bf16 %v1440, %v1432
        %v1553 = vpack.c.bf16 %v1441, %v1433
        %v1554 = vpack.c.bf16 %v1450, %v1442
        %v1555 = vpack.c.bf16 %v1451, %v1443
        %v1556 = vpack.c.bf16 %v1452, %v1444
        %v1557 = vpack.c.bf16 %v1453, %v1445
        %v1558 = vpack.c.bf16 %v1454, %v1446
        %v1559 = vpack.c.bf16 %v1455, %v1447
        %v1560 = vpack.c.bf16 %v1456, %v1448
        %v1561 = vpack.c.bf16 %v1457, %v1449
        %v1562 = vpack.c.bf16 %v1466, %v1458
        %v1563 = vpack.c.bf16 %v1467, %v1459
        %v1564 = vpack.c.bf16 %v1468, %v1460
        %v1565 = vpack.c.bf16 %v1469, %v1461
        %v1566 = vpack.c.bf16 %v1470, %v1462
        %v1567 = vpack.c.bf16 %v1471, %v1463
        %v1568 = vpack.c.bf16 %v1472, %v1464
        %v1569 = vpack.c.bf16 %v1473, %v1465
        %v1570 = vpack.c.bf16 %v1482, %v1474
        %v1571 = vpack.c.bf16 %v1483, %v1475
        %v1572 = vpack.c.bf16 %v1484, %v1476
        %v1573 = vpack.c.bf16 %v1485, %v1477
        %v1574 = vpack.c.bf16 %v1486, %v1478
        %v1575 = vpack.c.bf16 %v1487, %v1479
        %v1576 = vpack.c.bf16 %v1488, %v1480
        %v1577 = vpack.c.bf16 %v1489, %v1481
        %v1578 = vpack.c.bf16 %v1498, %v1490
        %v1579 = vpack.c.bf16 %v1499, %v1491
        %v1580 = vpack.c.bf16 %v1500, %v1492
        %v1581 = vpack.c.bf16 %v1501, %v1493
        %v1582 = vpack.c.bf16 %v1502, %v1494
        %v1583 = vpack.c.bf16 %v1503, %v1495
        %v1584 = vpack.c.bf16 %v1504, %v1496
        %v1585 = vpack.c.bf16 %v1505, %v1497
        %v1586 = vpack.c.bf16 %v1514, %v1506
        %v1587 = vpack.c.bf16 %v1515, %v1507
        %v1588 = vpack.c.bf16 %v1516, %v1508
        %v1589 = vpack.c.bf16 %v1517, %v1509
        %v1590 = vpack.c.bf16 %v1518, %v1510
        %v1591 = vpack.c.bf16 %v1519, %v1511
        %v1592 = vpack.c.bf16 %v1520, %v1512
        %v1593 = vpack.c.bf16 %v1521, %v1513
        %v1594 = vpack.c.bf16 %v1530, %v1522
        %v1595 = vpack.c.bf16 %v1531, %v1523
        %v1596 = vpack.c.bf16 %v1532, %v1524
        %v1597 = vpack.c.bf16 %v1533, %v1525
        %v1598 = vpack.c.bf16 %v1534, %v1526
        %v1599 = vpack.c.bf16 %v1535, %v1527
        %v1600 = vpack.c.bf16 %v1536, %v1528
        %v1601 = vpack.c.bf16 %v1537, %v1529
        %v1602 = vld [vmem:[%s224] sm:$0xff]
        %v1603 = vld [vmem:[%s224 + $0x8] sm:$0xff]
        %v1604 = vld [vmem:[%s224 + $0x10] sm:$0xff]
        %v1605 = vld [vmem:[%s224 + $0x18] sm:$0xff]
        %v1606 = vld [vmem:[%s224 + $0x20] sm:$0xff]
        %v1607 = vld [vmem:[%s224 + $0x28] sm:$0xff]
        %v1608 = vld [vmem:[%s224 + $0x30] sm:$0xff]
        %v1609 = vld [vmem:[%s224 + $0x38] sm:$0xff]
        %v1610 = vld [vmem:[%s224 + $0x40] sm:$0xff]
        %v1611 = vld [vmem:[%s224 + $0x48] sm:$0xff]
        %v1612 = vld [vmem:[%s224 + $0x50] sm:$0xff]
        %v1613 = vld [vmem:[%s224 + $0x58] sm:$0xff]
        %v1614 = vld [vmem:[%s224 + $0x60] sm:$0xff]
        %v1615 = vld [vmem:[%s224 + $0x68] sm:$0xff]
        %v1616 = vld [vmem:[%s224 + $0x70] sm:$0xff]
        %v1617 = vld [vmem:[%s224 + $0x78] sm:$0xff]
        %1619 = vset.pattern.permute.xlu0 0
        %1620 = vperm.xlu0 %1619, %v1602
        %v1621 = vpop.permute.xlu0 %1620
        %1624 = vset.pattern.permute.xlu0 0
        %1625 = vperm.xlu0 %1624, %v1603
        %v1626 = vpop.permute.xlu0 %1625
        %1629 = vset.pattern.permute.xlu0 0
        %1630 = vperm.xlu0 %1629, %v1604
        %v1631 = vpop.permute.xlu0 %1630
        %1634 = vset.pattern.permute.xlu0 0
        %1635 = vperm.xlu0 %1634, %v1605
        %v1636 = vpop.permute.xlu0 %1635
        %1639 = vset.pattern.permute.xlu0 0
        %1640 = vperm.xlu0 %1639, %v1606
        %v1641 = vpop.permute.xlu0 %1640
        %1644 = vset.pattern.permute.xlu0 0
        %1645 = vperm.xlu0 %1644, %v1607
        %v1646 = vpop.permute.xlu0 %1645
        %1649 = vset.pattern.permute.xlu0 0
        %1650 = vperm.xlu0 %1649, %v1608
        %v1651 = vpop.permute.xlu0 %1650
        %1654 = vset.pattern.permute.xlu0 0
        %1655 = vperm.xlu0 %1654, %v1609
        %v1656 = vpop.permute.xlu0 %1655
        %1659 = vset.pattern.permute.xlu0 0
        %1660 = vperm.xlu0 %1659, %v1610
        %v1661 = vpop.permute.xlu0 %1660
        %1664 = vset.pattern.permute.xlu0 0
        %1665 = vperm.xlu0 %1664, %v1611
        %v1666 = vpop.permute.xlu0 %1665
        %1669 = vset.pattern.permute.xlu0 0
        %1670 = vperm.xlu0 %1669, %v1612
        %v1671 = vpop.permute.xlu0 %1670
        %1674 = vset.pattern.permute.xlu0 0
        %1675 = vperm.xlu0 %1674, %v1613
        %v1676 = vpop.permute.xlu0 %1675
        %1679 = vset.pattern.permute.xlu0 0
        %1680 = vperm.xlu0 %1679, %v1614
        %v1681 = vpop.permute.xlu0 %1680
        %1684 = vset.pattern.permute.xlu0 0
        %1685 = vperm.xlu0 %1684, %v1615
        %v1686 = vpop.permute.xlu0 %1685
        %1689 = vset.pattern.permute.xlu0 0
        %1690 = vperm.xlu0 %1689, %v1616
        %v1691 = vpop.permute.xlu0 %1690
        %1694 = vset.pattern.permute.xlu0 0
        %1695 = vperm.xlu0 %1694, %v1617
        %v1696 = vpop.permute.xlu0 %1695
        %1698 = vmatprep.subr.bf16.mxu0 %v1075
        %1699 = vmatpush1.bf16.xpose.msra.mxu0 %v1074
        %1700 = vmatprep.subr.bf16.mxu0 %v1067
        %1701 = vmatpush1.bf16.xpose.msra.mxu0 %v1066
        %1702 = vmatprep.subr.bf16.mxu0 %v1059
        %1703 = vmatpush1.bf16.xpose.msra.mxu0 %v1058
        %1704 = vmatprep.subr.bf16.mxu0 %v1051
        %1705 = vmatpush1.bf16.xpose.msra.mxu0 %v1050
        %1706 = vmatprep.subr.bf16.mxu0 %v1043
        %1707 = vmatpush1.bf16.xpose.msra.mxu0 %v1042
        %1708 = vmatprep.subr.bf16.mxu0 %v1035
        %1709 = vmatpush1.bf16.xpose.msra.mxu0 %v1034
        %1710 = vmatprep.subr.bf16.mxu0 %v1027
        %1711 = vmatpush1.bf16.xpose.msra.mxu0 %v1026
        %1712 = vmatprep.subr.bf16.mxu0 %v1019
        %1713 = vmatpush1.bf16.xpose.msra.mxu0 %v1018
        %1714 = vmatprep.subr.bf16.mxu0 %v1139
        %1715 = vmatpush2.bf16.xpose.msra.mxu0 %v1138
        %1716 = vmatprep.subr.bf16.mxu0 %v1131
        %1717 = vmatpush2.bf16.xpose.msra.mxu0 %v1130
        %1718 = vmatprep.subr.bf16.mxu0 %v1123
        %1719 = vmatpush2.bf16.xpose.msra.mxu0 %v1122
        %1720 = vmatprep.subr.bf16.mxu0 %v1115
        %1721 = vmatpush2.bf16.xpose.msra.mxu0 %v1114
        %1722 = vmatprep.subr.bf16.mxu0 %v1107
        %1723 = vmatpush2.bf16.xpose.msra.mxu0 %v1106
        %1724 = vmatprep.subr.bf16.mxu0 %v1099
        %1725 = vmatpush2.bf16.xpose.msra.mxu0 %v1098
        %1726 = vmatprep.subr.bf16.mxu0 %v1091
        %1727 = vmatpush2.bf16.xpose.msra.mxu0 %v1090
        %1728 = vmatprep.subr.bf16.mxu0 %v1083
        %1729 = vmatpush2.bf16.xpose.msra.mxu0 %v1082
        %1730 = vmatprep.mubr.bf16.mxu0 %v1539
        %1731 = vmatmul.mubr.bf16.gmra.mxu0 %v1538
        %v1732 = vpop.f32.mrf.mxu0
        %v1733 = vadd.f32 %v1621, %v1732
        %v1734 = vpop.f32.mrf.mxu0
        %v1735 = vadd.f32 %v1621, %v1734
        %v1736 = vpop.f32.mrf.mxu0
        %v1737 = vadd.f32 %v1626, %v1736
        %v1738 = vpop.f32.mrf.mxu0
        %v1739 = vadd.f32 %v1626, %v1738
        %1740 = vmatprep.mubr.bf16.mxu0 %v1547
        %1741 = vmatmul.mubr.bf16.gmra.mxu0 %v1546
        %v1742 = vpop.f32.mrf.mxu0
        %v1743 = vadd.f32 %v1631, %v1742
        %v1744 = vpop.f32.mrf.mxu0
        %v1745 = vadd.f32 %v1631, %v1744
        %v1746 = vpop.f32.mrf.mxu0
        %v1747 = vadd.f32 %v1636, %v1746
        %v1748 = vpop.f32.mrf.mxu0
        %v1749 = vadd.f32 %v1636, %v1748
        %1750 = vmatprep.mubr.bf16.mxu0 %v1555
        %1751 = vmatmul.mubr.bf16.gmra.mxu0 %v1554
        %v1752 = vpop.f32.mrf.mxu0
        %v1753 = vadd.f32 %v1641, %v1752
        %v1754 = vpop.f32.mrf.mxu0
        %v1755 = vadd.f32 %v1641, %v1754
        %v1756 = vpop.f32.mrf.mxu0
        %v1757 = vadd.f32 %v1646, %v1756
        %v1758 = vpop.f32.mrf.mxu0
        %v1759 = vadd.f32 %v1646, %v1758
        %1760 = vmatprep.mubr.bf16.mxu0 %v1563
        %1761 = vmatmul.mubr.bf16.gmra.mxu0 %v1562
        %v1762 = vpop.f32.mrf.mxu0
        %v1763 = vadd.f32 %v1651, %v1762
        %v1764 = vpop.f32.mrf.mxu0
        %v1765 = vadd.f32 %v1651, %v1764
        %v1766 = vpop.f32.mrf.mxu0
        %v1767 = vadd.f32 %v1656, %v1766
        %v1768 = vpop.f32.mrf.mxu0
        %v1769 = vadd.f32 %v1656, %v1768
        %1770 = vmatprep.mubr.bf16.mxu0 %v1571
        %1771 = vmatmul.mubr.bf16.gmra.mxu0 %v1570
        %v1772 = vpop.f32.mrf.mxu0
        %v1773 = vadd.f32 %v1661, %v1772
        %v1774 = vpop.f32.mrf.mxu0
        %v1775 = vadd.f32 %v1661, %v1774
        %v1776 = vpop.f32.mrf.mxu0
        %v1777 = vadd.f32 %v1666, %v1776
        %v1778 = vpop.f32.mrf.mxu0
        %v1779 = vadd.f32 %v1666, %v1778
        %1780 = vmatprep.mubr.bf16.mxu0 %v1579
        %1781 = vmatmul.mubr.bf16.gmra.mxu0 %v1578
        %v1782 = vpop.f32.mrf.mxu0
        %v1783 = vadd.f32 %v1671, %v1782
        %v1784 = vpop.f32.mrf.mxu0
        %v1785 = vadd.f32 %v1671, %v1784
        %v1786 = vpop.f32.mrf.mxu0
        %v1787 = vadd.f32 %v1676, %v1786
        %v1788 = vpop.f32.mrf.mxu0
        %v1789 = vadd.f32 %v1676, %v1788
        %1790 = vmatprep.mubr.bf16.mxu0 %v1587
        %1791 = vmatmul.mubr.bf16.gmra.mxu0 %v1586
        %v1792 = vpop.f32.mrf.mxu0
        %v1793 = vadd.f32 %v1681, %v1792
        %v1794 = vpop.f32.mrf.mxu0
        %v1795 = vadd.f32 %v1681, %v1794
        %v1796 = vpop.f32.mrf.mxu0
        %v1797 = vadd.f32 %v1686, %v1796
        %v1798 = vpop.f32.mrf.mxu0
        %v1799 = vadd.f32 %v1686, %v1798
        %1800 = vmatprep.mubr.bf16.mxu0 %v1595
        %1801 = vmatmul.mubr.bf16.gmra.mxu0 %v1594
        %v1802 = vpop.f32.mrf.mxu0
        %v1803 = vadd.f32 %v1691, %v1802
        %v1804 = vpop.f32.mrf.mxu0
        %v1805 = vadd.f32 %v1691, %v1804
        %v1806 = vpop.f32.mrf.mxu0
        %v1807 = vadd.f32 %v1696, %v1806
        %v1808 = vpop.f32.mrf.mxu0
        %v1809 = vadd.f32 %v1696, %v1808
        %1810 = vdwg.mxu0
        %1811 = vmatprep.subr.bf16.mxu0 %v1077
        %1812 = vmatpush1.bf16.xpose.msra.mxu0 %v1076
        %1813 = vmatprep.subr.bf16.mxu0 %v1069
        %1814 = vmatpush1.bf16.xpose.msra.mxu0 %v1068
        %1815 = vmatprep.subr.bf16.mxu0 %v1061
        %1816 = vmatpush1.bf16.xpose.msra.mxu0 %v1060
        %1817 = vmatprep.subr.bf16.mxu0 %v1053
        %1818 = vmatpush1.bf16.xpose.msra.mxu0 %v1052
        %1819 = vmatprep.subr.bf16.mxu0 %v1045
        %1820 = vmatpush1.bf16.xpose.msra.mxu0 %v1044
        %1821 = vmatprep.subr.bf16.mxu0 %v1037
        %1822 = vmatpush1.bf16.xpose.msra.mxu0 %v1036
        %1823 = vmatprep.subr.bf16.mxu0 %v1029
        %1824 = vmatpush1.bf16.xpose.msra.mxu0 %v1028
        %1825 = vmatprep.subr.bf16.mxu0 %v1021
        %1826 = vmatpush1.bf16.xpose.msra.mxu0 %v1020
        %1827 = vmatprep.subr.bf16.mxu0 %v1141
        %1828 = vmatpush2.bf16.xpose.msra.mxu0 %v1140
        %1829 = vmatprep.subr.bf16.mxu0 %v1133
        %1830 = vmatpush2.bf16.xpose.msra.mxu0 %v1132
        %1831 = vmatprep.subr.bf16.mxu0 %v1125
        %1832 = vmatpush2.bf16.xpose.msra.mxu0 %v1124
        %1833 = vmatprep.subr.bf16.mxu0 %v1117
        %1834 = vmatpush2.bf16.xpose.msra.mxu0 %v1116
        %1835 = vmatprep.subr.bf16.mxu0 %v1109
        %1836 = vmatpush2.bf16.xpose.msra.mxu0 %v1108
        %1837 = vmatprep.subr.bf16.mxu0 %v1101
        %1838 = vmatpush2.bf16.xpose.msra.mxu0 %v1100
        %1839 = vmatprep.subr.bf16.mxu0 %v1093
        %1840 = vmatpush2.bf16.xpose.msra.mxu0 %v1092
        %1841 = vmatprep.subr.bf16.mxu0 %v1085
        %1842 = vmatpush2.bf16.xpose.msra.mxu0 %v1084
        %1843 = vmatprep.mubr.bf16.mxu0 %v1541
        %1844 = vmatmul.mubr.bf16.gmra.mxu0 %v1540
        %v1845 = vpop.f32.mrf.mxu0
        %v1846 = vadd.f32 %v1733, %v1845
        %v1847 = vpop.f32.mrf.mxu0
        %v1848 = vadd.f32 %v1735, %v1847
        %v1849 = vpop.f32.mrf.mxu0
        %v1850 = vadd.f32 %v1737, %v1849
        %v1851 = vpop.f32.mrf.mxu0
        %v1852 = vadd.f32 %v1739, %v1851
        %1853 = vmatprep.mubr.bf16.mxu0 %v1549
        %1854 = vmatmul.mubr.bf16.gmra.mxu0 %v1548
        %v1855 = vpop.f32.mrf.mxu0
        %v1856 = vadd.f32 %v1743, %v1855
        %v1857 = vpop.f32.mrf.mxu0
        %v1858 = vadd.f32 %v1745, %v1857
        %v1859 = vpop.f32.mrf.mxu0
        %v1860 = vadd.f32 %v1747, %v1859
        %v1861 = vpop.f32.mrf.mxu0
        %v1862 = vadd.f32 %v1749, %v1861
        %1863 = vmatprep.mubr.bf16.mxu0 %v1557
        %1864 = vmatmul.mubr.bf16.gmra.mxu0 %v1556
        %v1865 = vpop.f32.mrf.mxu0
        %v1866 = vadd.f32 %v1753, %v1865
        %v1867 = vpop.f32.mrf.mxu0
        %v1868 = vadd.f32 %v1755, %v1867
        %v1869 = vpop.f32.mrf.mxu0
        %v1870 = vadd.f32 %v1757, %v1869
        %v1871 = vpop.f32.mrf.mxu0
        %v1872 = vadd.f32 %v1759, %v1871
        %1873 = vmatprep.mubr.bf16.mxu0 %v1565
        %1874 = vmatmul.mubr.bf16.gmra.mxu0 %v1564
        %v1875 = vpop.f32.mrf.mxu0
        %v1876 = vadd.f32 %v1763, %v1875
        %v1877 = vpop.f32.mrf.mxu0
        %v1878 = vadd.f32 %v1765, %v1877
        %v1879 = vpop.f32.mrf.mxu0
        %v1880 = vadd.f32 %v1767, %v1879
        %v1881 = vpop.f32.mrf.mxu0
        %v1882 = vadd.f32 %v1769, %v1881
        %1883 = vmatprep.mubr.bf16.mxu0 %v1573
        %1884 = vmatmul.mubr.bf16.gmra.mxu0 %v1572
        %v1885 = vpop.f32.mrf.mxu0
        %v1886 = vadd.f32 %v1773, %v1885
        %v1887 = vpop.f32.mrf.mxu0
        %v1888 = vadd.f32 %v1775, %v1887
        %v1889 = vpop.f32.mrf.mxu0
        %v1890 = vadd.f32 %v1777, %v1889
        %v1891 = vpop.f32.mrf.mxu0
        %v1892 = vadd.f32 %v1779, %v1891
        %1893 = vmatprep.mubr.bf16.mxu0 %v1581
        %1894 = vmatmul.mubr.bf16.gmra.mxu0 %v1580
        %v1895 = vpop.f32.mrf.mxu0
        %v1896 = vadd.f32 %v1783, %v1895
        %v1897 = vpop.f32.mrf.mxu0
        %v1898 = vadd.f32 %v1785, %v1897
        %v1899 = vpop.f32.mrf.mxu0
        %v1900 = vadd.f32 %v1787, %v1899
        %v1901 = vpop.f32.mrf.mxu0
        %v1902 = vadd.f32 %v1789, %v1901
        %1903 = vmatprep.mubr.bf16.mxu0 %v1589
        %1904 = vmatmul.mubr.bf16.gmra.mxu0 %v1588
        %v1905 = vpop.f32.mrf.mxu0
        %v1906 = vadd.f32 %v1793, %v1905
        %v1907 = vpop.f32.mrf.mxu0
        %v1908 = vadd.f32 %v1795, %v1907
        %v1909 = vpop.f32.mrf.mxu0
        %v1910 = vadd.f32 %v1797, %v1909
        %v1911 = vpop.f32.mrf.mxu0
        %v1912 = vadd.f32 %v1799, %v1911
        %1913 = vmatprep.mubr.bf16.mxu0 %v1597
        %1914 = vmatmul.mubr.bf16.gmra.mxu0 %v1596
        %v1915 = vpop.f32.mrf.mxu0
        %v1916 = vadd.f32 %v1803, %v1915
        %v1917 = vpop.f32.mrf.mxu0
        %v1918 = vadd.f32 %v1805, %v1917
        %v1919 = vpop.f32.mrf.mxu0
        %v1920 = vadd.f32 %v1807, %v1919
        %v1921 = vpop.f32.mrf.mxu0
        %v1922 = vadd.f32 %v1809, %v1921
        %1923 = vdwg.mxu0
        %1924 = vmatprep.subr.bf16.mxu0 %v1079
        %1925 = vmatpush1.bf16.xpose.msra.mxu0 %v1078
        %1926 = vmatprep.subr.bf16.mxu0 %v1071
        %1927 = vmatpush1.bf16.xpose.msra.mxu0 %v1070
        %1928 = vmatprep.subr.bf16.mxu0 %v1063
        %1929 = vmatpush1.bf16.xpose.msra.mxu0 %v1062
        %1930 = vmatprep.subr.bf16.mxu0 %v1055
        %1931 = vmatpush1.bf16.xpose.msra.mxu0 %v1054
        %1932 = vmatprep.subr.bf16.mxu0 %v1047
        %1933 = vmatpush1.bf16.xpose.msra.mxu0 %v1046
        %1934 = vmatprep.subr.bf16.mxu0 %v1039
        %1935 = vmatpush1.bf16.xpose.msra.mxu0 %v1038
        %1936 = vmatprep.subr.bf16.mxu0 %v1031
        %1937 = vmatpush1.bf16.xpose.msra.mxu0 %v1030
        %1938 = vmatprep.subr.bf16.mxu0 %v1023
        %1939 = vmatpush1.bf16.xpose.msra.mxu0 %v1022
        %1940 = vmatprep.subr.bf16.mxu0 %v1143
        %1941 = vmatpush2.bf16.xpose.msra.mxu0 %v1142
        %1942 = vmatprep.subr.bf16.mxu0 %v1135
        %1943 = vmatpush2.bf16.xpose.msra.mxu0 %v1134
        %1944 = vmatprep.subr.bf16.mxu0 %v1127
        %1945 = vmatpush2.bf16.xpose.msra.mxu0 %v1126
        %1946 = vmatprep.subr.bf16.mxu0 %v1119
        %1947 = vmatpush2.bf16.xpose.msra.mxu0 %v1118
        %1948 = vmatprep.subr.bf16.mxu0 %v1111
        %1949 = vmatpush2.bf16.xpose.msra.mxu0 %v1110
        %1950 = vmatprep.subr.bf16.mxu0 %v1103
        %1951 = vmatpush2.bf16.xpose.msra.mxu0 %v1102
        %1952 = vmatprep.subr.bf16.mxu0 %v1095
        %1953 = vmatpush2.bf16.xpose.msra.mxu0 %v1094
        %1954 = vmatprep.subr.bf16.mxu0 %v1087
        %1955 = vmatpush2.bf16.xpose.msra.mxu0 %v1086
        %1956 = vmatprep.mubr.bf16.mxu0 %v1543
        %1957 = vmatmul.mubr.bf16.gmra.mxu0 %v1542
        %v1958 = vpop.f32.mrf.mxu0
        %v1959 = vadd.f32 %v1846, %v1958
        %v1960 = vpop.f32.mrf.mxu0
        %v1961 = vadd.f32 %v1848, %v1960
        %v1962 = vpop.f32.mrf.mxu0
        %v1963 = vadd.f32 %v1850, %v1962
        %v1964 = vpop.f32.mrf.mxu0
        %v1965 = vadd.f32 %v1852, %v1964
        %1966 = vmatprep.mubr.bf16.mxu0 %v1551
        %1967 = vmatmul.mubr.bf16.gmra.mxu0 %v1550
        %v1968 = vpop.f32.mrf.mxu0
        %v1969 = vadd.f32 %v1856, %v1968
        %v1970 = vpop.f32.mrf.mxu0
        %v1971 = vadd.f32 %v1858, %v1970
        %v1972 = vpop.f32.mrf.mxu0
        %v1973 = vadd.f32 %v1860, %v1972
        %v1974 = vpop.f32.mrf.mxu0
        %v1975 = vadd.f32 %v1862, %v1974
        %1976 = vmatprep.mubr.bf16.mxu0 %v1559
        %1977 = vmatmul.mubr.bf16.gmra.mxu0 %v1558
        %v1978 = vpop.f32.mrf.mxu0
        %v1979 = vadd.f32 %v1866, %v1978
        %v1980 = vpop.f32.mrf.mxu0
        %v1981 = vadd.f32 %v1868, %v1980
        %v1982 = vpop.f32.mrf.mxu0
        %v1983 = vadd.f32 %v1870, %v1982
        %v1984 = vpop.f32.mrf.mxu0
        %v1985 = vadd.f32 %v1872, %v1984
        %1986 = vmatprep.mubr.bf16.mxu0 %v1567
        %1987 = vmatmul.mubr.bf16.gmra.mxu0 %v1566
        %v1988 = vpop.f32.mrf.mxu0
        %v1989 = vadd.f32 %v1876, %v1988
        %v1990 = vpop.f32.mrf.mxu0
        %v1991 = vadd.f32 %v1878, %v1990
        %v1992 = vpop.f32.mrf.mxu0
        %v1993 = vadd.f32 %v1880, %v1992
        %v1994 = vpop.f32.mrf.mxu0
        %v1995 = vadd.f32 %v1882, %v1994
        %1996 = vmatprep.mubr.bf16.mxu0 %v1575
        %1997 = vmatmul.mubr.bf16.gmra.mxu0 %v1574
        %v1998 = vpop.f32.mrf.mxu0
        %v1999 = vadd.f32 %v1886, %v1998
        %v2000 = vpop.f32.mrf.mxu0
        %v2001 = vadd.f32 %v1888, %v2000
        %v2002 = vpop.f32.mrf.mxu0
        %v2003 = vadd.f32 %v1890, %v2002
        %v2004 = vpop.f32.mrf.mxu0
        %v2005 = vadd.f32 %v1892, %v2004
        %2006 = vmatprep.mubr.bf16.mxu0 %v1583
        %2007 = vmatmul.mubr.bf16.gmra.mxu0 %v1582
        %v2008 = vpop.f32.mrf.mxu0
        %v2009 = vadd.f32 %v1896, %v2008
        %v2010 = vpop.f32.mrf.mxu0
        %v2011 = vadd.f32 %v1898, %v2010
        %v2012 = vpop.f32.mrf.mxu0
        %v2013 = vadd.f32 %v1900, %v2012
        %v2014 = vpop.f32.mrf.mxu0
        %v2015 = vadd.f32 %v1902, %v2014
        %2016 = vmatprep.mubr.bf16.mxu0 %v1591
        %2017 = vmatmul.mubr.bf16.gmra.mxu0 %v1590
        %v2018 = vpop.f32.mrf.mxu0
        %v2019 = vadd.f32 %v1906, %v2018
        %v2020 = vpop.f32.mrf.mxu0
        %v2021 = vadd.f32 %v1908, %v2020
        %v2022 = vpop.f32.mrf.mxu0
        %v2023 = vadd.f32 %v1910, %v2022
        %v2024 = vpop.f32.mrf.mxu0
        %v2025 = vadd.f32 %v1912, %v2024
        %2026 = vmatprep.mubr.bf16.mxu0 %v1599
        %2027 = vmatmul.mubr.bf16.gmra.mxu0 %v1598
        %v2028 = vpop.f32.mrf.mxu0
        %v2029 = vadd.f32 %v1916, %v2028
        %v2030 = vpop.f32.mrf.mxu0
        %v2031 = vadd.f32 %v1918, %v2030
        %v2032 = vpop.f32.mrf.mxu0
        %v2033 = vadd.f32 %v1920, %v2032
        %v2034 = vpop.f32.mrf.mxu0
        %v2035 = vadd.f32 %v1922, %v2034
        %2036 = vdwg.mxu0
        %2037 = vmatprep.subr.bf16.mxu0 %v1081
        %2038 = vmatpush1.bf16.xpose.msra.mxu0 %v1080
        %2039 = vmatprep.subr.bf16.mxu0 %v1073
        %2040 = vmatpush1.bf16.xpose.msra.mxu0 %v1072
        %2041 = vmatprep.subr.bf16.mxu0 %v1065
        %2042 = vmatpush1.bf16.xpose.msra.mxu0 %v1064
        %2043 = vmatprep.subr.bf16.mxu0 %v1057
        %2044 = vmatpush1.bf16.xpose.msra.mxu0 %v1056
        %2045 = vmatprep.subr.bf16.mxu0 %v1049
        %2046 = vmatpush1.bf16.xpose.msra.mxu0 %v1048
        %2047 = vmatprep.subr.bf16.mxu0 %v1041
        %2048 = vmatpush1.bf16.xpose.msra.mxu0 %v1040
        %2049 = vmatprep.subr.bf16.mxu0 %v1033
        %2050 = vmatpush1.bf16.xpose.msra.mxu0 %v1032
        %2051 = vmatprep.subr.bf16.mxu0 %v1025
        %2052 = vmatpush1.bf16.xpose.msra.mxu0 %v1024
        %2053 = vmatprep.subr.bf16.mxu0 %v1145
        %2054 = vmatpush2.bf16.xpose.msra.mxu0 %v1144
        %2055 = vmatprep.subr.bf16.mxu0 %v1137
        %2056 = vmatpush2.bf16.xpose.msra.mxu0 %v1136
        %2057 = vmatprep.subr.bf16.mxu0 %v1129
        %2058 = vmatpush2.bf16.xpose.msra.mxu0 %v1128
        %2059 = vmatprep.subr.bf16.mxu0 %v1121
        %2060 = vmatpush2.bf16.xpose.msra.mxu0 %v1120
        %2061 = vmatprep.subr.bf16.mxu0 %v1113
        %2062 = vmatpush2.bf16.xpose.msra.mxu0 %v1112
        %2063 = vmatprep.subr.bf16.mxu0 %v1105
        %2064 = vmatpush2.bf16.xpose.msra.mxu0 %v1104
        %2065 = vmatprep.subr.bf16.mxu0 %v1097
        %2066 = vmatpush2.bf16.xpose.msra.mxu0 %v1096
        %2067 = vmatprep.subr.bf16.mxu0 %v1089
        %2068 = vmatpush2.bf16.xpose.msra.mxu0 %v1088
        %2069 = vmatprep.mubr.bf16.mxu0 %v1545
        %2070 = vmatmul.mubr.bf16.gmra.mxu0 %v1544
        %v2071 = vpop.f32.mrf.mxu0
        %v2072 = vadd.f32 %v1959, %v2071
        %v2073 = vpop.f32.mrf.mxu0
        %v2074 = vadd.f32 %v1961, %v2073
        %v2075 = vpop.f32.mrf.mxu0
        %v2076 = vadd.f32 %v1963, %v2075
        %v2077 = vpop.f32.mrf.mxu0
        %v2078 = vadd.f32 %v1965, %v2077
        %2079 = vmatprep.mubr.bf16.mxu0 %v1553
        %2080 = vmatmul.mubr.bf16.gmra.mxu0 %v1552
        %v2081 = vpop.f32.mrf.mxu0
        %v2082 = vadd.f32 %v1969, %v2081
        %v2083 = vpop.f32.mrf.mxu0
        %v2084 = vadd.f32 %v1971, %v2083
        %v2085 = vpop.f32.mrf.mxu0
        %v2086 = vadd.f32 %v1973, %v2085
        %v2087 = vpop.f32.mrf.mxu0
        %v2088 = vadd.f32 %v1975, %v2087
        %2089 = vmatprep.mubr.bf16.mxu0 %v1561
        %2090 = vmatmul.mubr.bf16.gmra.mxu0 %v1560
        %v2091 = vpop.f32.mrf.mxu0
        %v2092 = vadd.f32 %v1979, %v2091
        %v2093 = vpop.f32.mrf.mxu0
        %v2094 = vadd.f32 %v1981, %v2093
        %v2095 = vpop.f32.mrf.mxu0
        %v2096 = vadd.f32 %v1983, %v2095
        %v2097 = vpop.f32.mrf.mxu0
        %v2098 = vadd.f32 %v1985, %v2097
        %2099 = vmatprep.mubr.bf16.mxu0 %v1569
        %2100 = vmatmul.mubr.bf16.gmra.mxu0 %v1568
        %v2101 = vpop.f32.mrf.mxu0
        %v2102 = vadd.f32 %v1989, %v2101
        %v2103 = vpop.f32.mrf.mxu0
        %v2104 = vadd.f32 %v1991, %v2103
        %v2105 = vpop.f32.mrf.mxu0
        %v2106 = vadd.f32 %v1993, %v2105
        %v2107 = vpop.f32.mrf.mxu0
        %v2108 = vadd.f32 %v1995, %v2107
        %2109 = vmatprep.mubr.bf16.mxu0 %v1577
        %2110 = vmatmul.mubr.bf16.gmra.mxu0 %v1576
        %v2111 = vpop.f32.mrf.mxu0
        %v2112 = vadd.f32 %v1999, %v2111
        %v2113 = vpop.f32.mrf.mxu0
        %v2114 = vadd.f32 %v2001, %v2113
        %v2115 = vpop.f32.mrf.mxu0
        %v2116 = vadd.f32 %v2003, %v2115
        %v2117 = vpop.f32.mrf.mxu0
        %v2118 = vadd.f32 %v2005, %v2117
        %2119 = vmatprep.mubr.bf16.mxu0 %v1585
        %2120 = vmatmul.mubr.bf16.gmra.mxu0 %v1584
        %v2121 = vpop.f32.mrf.mxu0
        %v2122 = vadd.f32 %v2009, %v2121
        %v2123 = vpop.f32.mrf.mxu0
        %v2124 = vadd.f32 %v2011, %v2123
        %v2125 = vpop.f32.mrf.mxu0
        %v2126 = vadd.f32 %v2013, %v2125
        %v2127 = vpop.f32.mrf.mxu0
        %v2128 = vadd.f32 %v2015, %v2127
        %2129 = vmatprep.mubr.bf16.mxu0 %v1593
        %2130 = vmatmul.mubr.bf16.gmra.mxu0 %v1592
        %v2131 = vpop.f32.mrf.mxu0
        %v2132 = vadd.f32 %v2019, %v2131
        %v2133 = vpop.f32.mrf.mxu0
        %v2134 = vadd.f32 %v2021, %v2133
        %v2135 = vpop.f32.mrf.mxu0
        %v2136 = vadd.f32 %v2023, %v2135
        %v2137 = vpop.f32.mrf.mxu0
        %v2138 = vadd.f32 %v2025, %v2137
        %2139 = vmatprep.mubr.bf16.mxu0 %v1601
        %2140 = vmatmul.mubr.bf16.gmra.mxu0 %v1600
        %v2141 = vpop.f32.mrf.mxu0
        %v2142 = vadd.f32 %v2029, %v2141
        %v2143 = vpop.f32.mrf.mxu0
        %v2144 = vadd.f32 %v2031, %v2143
        %v2145 = vpop.f32.mrf.mxu0
        %v2146 = vadd.f32 %v2033, %v2145
        %v2147 = vpop.f32.mrf.mxu0
        %v2148 = vadd.f32 %v2035, %v2147
        %2149 = vdwg.mxu0
        %2150 = vmatprep.subr.bf16.mxu0 %v1203
        %2151 = vmatpush1.bf16.xpose.msra.mxu0 %v1202
        %2152 = vmatprep.subr.bf16.mxu0 %v1195
        %2153 = vmatpush1.bf16.xpose.msra.mxu0 %v1194
        %2154 = vmatprep.subr.bf16.mxu0 %v1187
        %2155 = vmatpush1.bf16.xpose.msra.mxu0 %v1186
        %2156 = vmatprep.subr.bf16.mxu0 %v1179
        %2157 = vmatpush1.bf16.xpose.msra.mxu0 %v1178
        %2158 = vmatprep.subr.bf16.mxu0 %v1171
        %2159 = vmatpush1.bf16.xpose.msra.mxu0 %v1170
        %2160 = vmatprep.subr.bf16.mxu0 %v1163
        %2161 = vmatpush1.bf16.xpose.msra.mxu0 %v1162
        %2162 = vmatprep.subr.bf16.mxu0 %v1155
        %2163 = vmatpush1.bf16.xpose.msra.mxu0 %v1154
        %2164 = vmatprep.subr.bf16.mxu0 %v1147
        %2165 = vmatpush1.bf16.xpose.msra.mxu0 %v1146
        %2166 = vmatprep.subr.bf16.mxu0 %v1267
        %2167 = vmatpush2.bf16.xpose.msra.mxu0 %v1266
        %2168 = vmatprep.subr.bf16.mxu0 %v1259
        %2169 = vmatpush2.bf16.xpose.msra.mxu0 %v1258
        %2170 = vmatprep.subr.bf16.mxu0 %v1251
        %2171 = vmatpush2.bf16.xpose.msra.mxu0 %v1250
        %2172 = vmatprep.subr.bf16.mxu0 %v1243
        %2173 = vmatpush2.bf16.xpose.msra.mxu0 %v1242
        %2174 = vmatprep.subr.bf16.mxu0 %v1235
        %2175 = vmatpush2.bf16.xpose.msra.mxu0 %v1234
        %2176 = vmatprep.subr.bf16.mxu0 %v1227
        %2177 = vmatpush2.bf16.xpose.msra.mxu0 %v1226
        %2178 = vmatprep.subr.bf16.mxu0 %v1219
        %2179 = vmatpush2.bf16.xpose.msra.mxu0 %v1218
        %2180 = vmatprep.subr.bf16.mxu0 %v1211
        %2181 = vmatpush2.bf16.xpose.msra.mxu0 %v1210
        %2182 = vmatprep.mubr.bf16.mxu0 %v1539
        %2183 = vmatmul.mubr.bf16.gmra.mxu0 %v1538
        %v2184 = vpop.f32.mrf.mxu0
        %v2185 = vadd.f32 %v1621, %v2184
        %v2186 = vpop.f32.mrf.mxu0
        %v2187 = vadd.f32 %v1621, %v2186
        %v2188 = vpop.f32.mrf.mxu0
        %v2189 = vadd.f32 %v1626, %v2188
        %v2190 = vpop.f32.mrf.mxu0
        %v2191 = vadd.f32 %v1626, %v2190
        %2192 = vmatprep.mubr.bf16.mxu0 %v1547
        %2193 = vmatmul.mubr.bf16.gmra.mxu0 %v1546
        %v2194 = vpop.f32.mrf.mxu0
        %v2195 = vadd.f32 %v1631, %v2194
        %v2196 = vpop.f32.mrf.mxu0
        %v2197 = vadd.f32 %v1631, %v2196
        %v2198 = vpop.f32.mrf.mxu0
        %v2199 = vadd.f32 %v1636, %v2198
        %v2200 = vpop.f32.mrf.mxu0
        %v2201 = vadd.f32 %v1636, %v2200
        %2202 = vmatprep.mubr.bf16.mxu0 %v1555
        %2203 = vmatmul.mubr.bf16.gmra.mxu0 %v1554
        %v2204 = vpop.f32.mrf.mxu0
        %v2205 = vadd.f32 %v1641, %v2204
        %v2206 = vpop.f32.mrf.mxu0
        %v2207 = vadd.f32 %v1641, %v2206
        %v2208 = vpop.f32.mrf.mxu0
        %v2209 = vadd.f32 %v1646, %v2208
        %v2210 = vpop.f32.mrf.mxu0
        %v2211 = vadd.f32 %v1646, %v2210
        %2212 = vmatprep.mubr.bf16.mxu0 %v1563
        %2213 = vmatmul.mubr.bf16.gmra.mxu0 %v1562
        %v2214 = vpop.f32.mrf.mxu0
        %v2215 = vadd.f32 %v1651, %v2214
        %v2216 = vpop.f32.mrf.mxu0
        %v2217 = vadd.f32 %v1651, %v2216
        %v2218 = vpop.f32.mrf.mxu0
        %v2219 = vadd.f32 %v1656, %v2218
        %v2220 = vpop.f32.mrf.mxu0
        %v2221 = vadd.f32 %v1656, %v2220
        %2222 = vmatprep.mubr.bf16.mxu0 %v1571
        %2223 = vmatmul.mubr.bf16.gmra.mxu0 %v1570
        %v2224 = vpop.f32.mrf.mxu0
        %v2225 = vadd.f32 %v1661, %v2224
        %v2226 = vpop.f32.mrf.mxu0
        %v2227 = vadd.f32 %v1661, %v2226
        %v2228 = vpop.f32.mrf.mxu0
        %v2229 = vadd.f32 %v1666, %v2228
        %v2230 = vpop.f32.mrf.mxu0
        %v2231 = vadd.f32 %v1666, %v2230
        %2232 = vmatprep.mubr.bf16.mxu0 %v1579
        %2233 = vmatmul.mubr.bf16.gmra.mxu0 %v1578
        %v2234 = vpop.f32.mrf.mxu0
        %v2235 = vadd.f32 %v1671, %v2234
        %v2236 = vpop.f32.mrf.mxu0
        %v2237 = vadd.f32 %v1671, %v2236
        %v2238 = vpop.f32.mrf.mxu0
        %v2239 = vadd.f32 %v1676, %v2238
        %v2240 = vpop.f32.mrf.mxu0
        %v2241 = vadd.f32 %v1676, %v2240
        %2242 = vmatprep.mubr.bf16.mxu0 %v1587
        %2243 = vmatmul.mubr.bf16.gmra.mxu0 %v1586
        %v2244 = vpop.f32.mrf.mxu0
        %v2245 = vadd.f32 %v1681, %v2244
        %v2246 = vpop.f32.mrf.mxu0
        %v2247 = vadd.f32 %v1681, %v2246
        %v2248 = vpop.f32.mrf.mxu0
        %v2249 = vadd.f32 %v1686, %v2248
        %v2250 = vpop.f32.mrf.mxu0
        %v2251 = vadd.f32 %v1686, %v2250
        %2252 = vmatprep.mubr.bf16.mxu0 %v1595
        %2253 = vmatmul.mubr.bf16.gmra.mxu0 %v1594
        %v2254 = vpop.f32.mrf.mxu0
        %v2255 = vadd.f32 %v1691, %v2254
        %v2256 = vpop.f32.mrf.mxu0
        %v2257 = vadd.f32 %v1691, %v2256
        %v2258 = vpop.f32.mrf.mxu0
        %v2259 = vadd.f32 %v1696, %v2258
        %v2260 = vpop.f32.mrf.mxu0
        %v2261 = vadd.f32 %v1696, %v2260
        %2262 = vdwg.mxu0
        %2263 = vmatprep.subr.bf16.mxu0 %v1205
        %2264 = vmatpush1.bf16.xpose.msra.mxu0 %v1204
        %2265 = vmatprep.subr.bf16.mxu0 %v1197
        %2266 = vmatpush1.bf16.xpose.msra.mxu0 %v1196
        %2267 = vmatprep.subr.bf16.mxu0 %v1189
        %2268 = vmatpush1.bf16.xpose.msra.mxu0 %v1188
        %2269 = vmatprep.subr.bf16.mxu0 %v1181
        %2270 = vmatpush1.bf16.xpose.msra.mxu0 %v1180
        %2271 = vmatprep.subr.bf16.mxu0 %v1173
        %2272 = vmatpush1.bf16.xpose.msra.mxu0 %v1172
        %2273 = vmatprep.subr.bf16.mxu0 %v1165
        %2274 = vmatpush1.bf16.xpose.msra.mxu0 %v1164
        %2275 = vmatprep.subr.bf16.mxu0 %v1157
        %2276 = vmatpush1.bf16.xpose.msra.mxu0 %v1156
        %2277 = vmatprep.subr.bf16.mxu0 %v1149
        %2278 = vmatpush1.bf16.xpose.msra.mxu0 %v1148
        %2279 = vmatprep.subr.bf16.mxu0 %v1269
        %2280 = vmatpush2.bf16.xpose.msra.mxu0 %v1268
        %2281 = vmatprep.subr.bf16.mxu0 %v1261
        %2282 = vmatpush2.bf16.xpose.msra.mxu0 %v1260
        %2283 = vmatprep.subr.bf16.mxu0 %v1253
        %2284 = vmatpush2.bf16.xpose.msra.mxu0 %v1252
        %2285 = vmatprep.subr.bf16.mxu0 %v1245
        %2286 = vmatpush2.bf16.xpose.msra.mxu0 %v1244
        %2287 = vmatprep.subr.bf16.mxu0 %v1237
        %2288 = vmatpush2.bf16.xpose.msra.mxu0 %v1236
        %2289 = vmatprep.subr.bf16.mxu0 %v1229
        %2290 = vmatpush2.bf16.xpose.msra.mxu0 %v1228
        %2291 = vmatprep.subr.bf16.mxu0 %v1221
        %2292 = vmatpush2.bf16.xpose.msra.mxu0 %v1220
        %2293 = vmatprep.subr.bf16.mxu0 %v1213
        %2294 = vmatpush2.bf16.xpose.msra.mxu0 %v1212
        %2295 = vmatprep.mubr.bf16.mxu0 %v1541
        %2296 = vmatmul.mubr.bf16.gmra.mxu0 %v1540
        %v2297 = vpop.f32.mrf.mxu0
        %v2298 = vadd.f32 %v2185, %v2297
        %v2299 = vpop.f32.mrf.mxu0
        %v2300 = vadd.f32 %v2187, %v2299
        %v2301 = vpop.f32.mrf.mxu0
        %v2302 = vadd.f32 %v2189, %v2301
        %v2303 = vpop.f32.mrf.mxu0
        %v2304 = vadd.f32 %v2191, %v2303
        %2305 = vmatprep.mubr.bf16.mxu0 %v1549
        %2306 = vmatmul.mubr.bf16.gmra.mxu0 %v1548
        %v2307 = vpop.f32.mrf.mxu0
        %v2308 = vadd.f32 %v2195, %v2307
        %v2309 = vpop.f32.mrf.mxu0
        %v2310 = vadd.f32 %v2197, %v2309
        %v2311 = vpop.f32.mrf.mxu0
        %v2312 = vadd.f32 %v2199, %v2311
        %v2313 = vpop.f32.mrf.mxu0
        %v2314 = vadd.f32 %v2201, %v2313
        %2315 = vmatprep.mubr.bf16.mxu0 %v1557
        %2316 = vmatmul.mubr.bf16.gmra.mxu0 %v1556
        %v2317 = vpop.f32.mrf.mxu0
        %v2318 = vadd.f32 %v2205, %v2317
        %v2319 = vpop.f32.mrf.mxu0
        %v2320 = vadd.f32 %v2207, %v2319
        %v2321 = vpop.f32.mrf.mxu0
        %v2322 = vadd.f32 %v2209, %v2321
        %v2323 = vpop.f32.mrf.mxu0
        %v2324 = vadd.f32 %v2211, %v2323
        %2325 = vmatprep.mubr.bf16.mxu0 %v1565
        %2326 = vmatmul.mubr.bf16.gmra.mxu0 %v1564
        %v2327 = vpop.f32.mrf.mxu0
        %v2328 = vadd.f32 %v2215, %v2327
        %v2329 = vpop.f32.mrf.mxu0
        %v2330 = vadd.f32 %v2217, %v2329
        %v2331 = vpop.f32.mrf.mxu0
        %v2332 = vadd.f32 %v2219, %v2331
        %v2333 = vpop.f32.mrf.mxu0
        %v2334 = vadd.f32 %v2221, %v2333
        %2335 = vmatprep.mubr.bf16.mxu0 %v1573
        %2336 = vmatmul.mubr.bf16.gmra.mxu0 %v1572
        %v2337 = vpop.f32.mrf.mxu0
        %v2338 = vadd.f32 %v2225, %v2337
        %v2339 = vpop.f32.mrf.mxu0
        %v2340 = vadd.f32 %v2227, %v2339
        %v2341 = vpop.f32.mrf.mxu0
        %v2342 = vadd.f32 %v2229, %v2341
        %v2343 = vpop.f32.mrf.mxu0
        %v2344 = vadd.f32 %v2231, %v2343
        %2345 = vmatprep.mubr.bf16.mxu0 %v1581
        %2346 = vmatmul.mubr.bf16.gmra.mxu0 %v1580
        %v2347 = vpop.f32.mrf.mxu0
        %v2348 = vadd.f32 %v2235, %v2347
        %v2349 = vpop.f32.mrf.mxu0
        %v2350 = vadd.f32 %v2237, %v2349
        %v2351 = vpop.f32.mrf.mxu0
        %v2352 = vadd.f32 %v2239, %v2351
        %v2353 = vpop.f32.mrf.mxu0
        %v2354 = vadd.f32 %v2241, %v2353
        %2355 = vmatprep.mubr.bf16.mxu0 %v1589
        %2356 = vmatmul.mubr.bf16.gmra.mxu0 %v1588
        %v2357 = vpop.f32.mrf.mxu0
        %v2358 = vadd.f32 %v2245, %v2357
        %v2359 = vpop.f32.mrf.mxu0
        %v2360 = vadd.f32 %v2247, %v2359
        %v2361 = vpop.f32.mrf.mxu0
        %v2362 = vadd.f32 %v2249, %v2361
        %v2363 = vpop.f32.mrf.mxu0
        %v2364 = vadd.f32 %v2251, %v2363
        %2365 = vmatprep.mubr.bf16.mxu0 %v1597
        %2366 = vmatmul.mubr.bf16.gmra.mxu0 %v1596
        %v2367 = vpop.f32.mrf.mxu0
        %v2368 = vadd.f32 %v2255, %v2367
        %v2369 = vpop.f32.mrf.mxu0
        %v2370 = vadd.f32 %v2257, %v2369
        %v2371 = vpop.f32.mrf.mxu0
        %v2372 = vadd.f32 %v2259, %v2371
        %v2373 = vpop.f32.mrf.mxu0
        %v2374 = vadd.f32 %v2261, %v2373
        %2375 = vdwg.mxu0
        %2376 = vmatprep.subr.bf16.mxu0 %v1207
        %2377 = vmatpush1.bf16.xpose.msra.mxu0 %v1206
        %2378 = vmatprep.subr.bf16.mxu0 %v1199
        %2379 = vmatpush1.bf16.xpose.msra.mxu0 %v1198
        %2380 = vmatprep.subr.bf16.mxu0 %v1191
        %2381 = vmatpush1.bf16.xpose.msra.mxu0 %v1190
        %2382 = vmatprep.subr.bf16.mxu0 %v1183
        %2383 = vmatpush1.bf16.xpose.msra.mxu0 %v1182
        %2384 = vmatprep.subr.bf16.mxu0 %v1175
        %2385 = vmatpush1.bf16.xpose.msra.mxu0 %v1174
        %2386 = vmatprep.subr.bf16.mxu0 %v1167
        %2387 = vmatpush1.bf16.xpose.msra.mxu0 %v1166
        %2388 = vmatprep.subr.bf16.mxu0 %v1159
        %2389 = vmatpush1.bf16.xpose.msra.mxu0 %v1158
        %2390 = vmatprep.subr.bf16.mxu0 %v1151
        %2391 = vmatpush1.bf16.xpose.msra.mxu0 %v1150
        %2392 = vmatprep.subr.bf16.mxu0 %v1271
        %2393 = vmatpush2.bf16.xpose.msra.mxu0 %v1270
        %2394 = vmatprep.subr.bf16.mxu0 %v1263
        %2395 = vmatpush2.bf16.xpose.msra.mxu0 %v1262
        %2396 = vmatprep.subr.bf16.mxu0 %v1255
        %2397 = vmatpush2.bf16.xpose.msra.mxu0 %v1254
        %2398 = vmatprep.subr.bf16.mxu0 %v1247
        %2399 = vmatpush2.bf16.xpose.msra.mxu0 %v1246
        %2400 = vmatprep.subr.bf16.mxu0 %v1239
        %2401 = vmatpush2.bf16.xpose.msra.mxu0 %v1238
        %2402 = vmatprep.subr.bf16.mxu0 %v1231
        %2403 = vmatpush2.bf16.xpose.msra.mxu0 %v1230
        %2404 = vmatprep.subr.bf16.mxu0 %v1223
        %2405 = vmatpush2.bf16.xpose.msra.mxu0 %v1222
        %2406 = vmatprep.subr.bf16.mxu0 %v1215
        %2407 = vmatpush2.bf16.xpose.msra.mxu0 %v1214
        %2408 = vmatprep.mubr.bf16.mxu0 %v1543
        %2409 = vmatmul.mubr.bf16.gmra.mxu0 %v1542
        %v2410 = vpop.f32.mrf.mxu0
        %v2411 = vadd.f32 %v2298, %v2410
        %v2412 = vpop.f32.mrf.mxu0
        %v2413 = vadd.f32 %v2300, %v2412
        %v2414 = vpop.f32.mrf.mxu0
        %v2415 = vadd.f32 %v2302, %v2414
        %v2416 = vpop.f32.mrf.mxu0
        %v2417 = vadd.f32 %v2304, %v2416
        %2418 = vmatprep.mubr.bf16.mxu0 %v1551
        %2419 = vmatmul.mubr.bf16.gmra.mxu0 %v1550
        %v2420 = vpop.f32.mrf.mxu0
        %v2421 = vadd.f32 %v2308, %v2420
        %v2422 = vpop.f32.mrf.mxu0
        %v2423 = vadd.f32 %v2310, %v2422
        %v2424 = vpop.f32.mrf.mxu0
        %v2425 = vadd.f32 %v2312, %v2424
        %v2426 = vpop.f32.mrf.mxu0
        %v2427 = vadd.f32 %v2314, %v2426
        %2428 = vmatprep.mubr.bf16.mxu0 %v1559
        %2429 = vmatmul.mubr.bf16.gmra.mxu0 %v1558
        %v2430 = vpop.f32.mrf.mxu0
        %v2431 = vadd.f32 %v2318, %v2430
        %v2432 = vpop.f32.mrf.mxu0
        %v2433 = vadd.f32 %v2320, %v2432
        %v2434 = vpop.f32.mrf.mxu0
        %v2435 = vadd.f32 %v2322, %v2434
        %v2436 = vpop.f32.mrf.mxu0
        %v2437 = vadd.f32 %v2324, %v2436
        %2438 = vmatprep.mubr.bf16.mxu0 %v1567
        %2439 = vmatmul.mubr.bf16.gmra.mxu0 %v1566
        %v2440 = vpop.f32.mrf.mxu0
        %v2441 = vadd.f32 %v2328, %v2440
        %v2442 = vpop.f32.mrf.mxu0
        %v2443 = vadd.f32 %v2330, %v2442
        %v2444 = vpop.f32.mrf.mxu0
        %v2445 = vadd.f32 %v2332, %v2444
        %v2446 = vpop.f32.mrf.mxu0
        %v2447 = vadd.f32 %v2334, %v2446
        %2448 = vmatprep.mubr.bf16.mxu0 %v1575
        %2449 = vmatmul.mubr.bf16.gmra.mxu0 %v1574
        %v2450 = vpop.f32.mrf.mxu0
        %v2451 = vadd.f32 %v2338, %v2450
        %v2452 = vpop.f32.mrf.mxu0
        %v2453 = vadd.f32 %v2340, %v2452
        %v2454 = vpop.f32.mrf.mxu0
        %v2455 = vadd.f32 %v2342, %v2454
        %v2456 = vpop.f32.mrf.mxu0
        %v2457 = vadd.f32 %v2344, %v2456
        %2458 = vmatprep.mubr.bf16.mxu0 %v1583
        %2459 = vmatmul.mubr.bf16.gmra.mxu0 %v1582
        %v2460 = vpop.f32.mrf.mxu0
        %v2461 = vadd.f32 %v2348, %v2460
        %v2462 = vpop.f32.mrf.mxu0
        %v2463 = vadd.f32 %v2350, %v2462
        %v2464 = vpop.f32.mrf.mxu0
        %v2465 = vadd.f32 %v2352, %v2464
        %v2466 = vpop.f32.mrf.mxu0
        %v2467 = vadd.f32 %v2354, %v2466
        %2468 = vmatprep.mubr.bf16.mxu0 %v1591
        %2469 = vmatmul.mubr.bf16.gmra.mxu0 %v1590
        %v2470 = vpop.f32.mrf.mxu0
        %v2471 = vadd.f32 %v2358, %v2470
        %v2472 = vpop.f32.mrf.mxu0
        %v2473 = vadd.f32 %v2360, %v2472
        %v2474 = vpop.f32.mrf.mxu0
        %v2475 = vadd.f32 %v2362, %v2474
        %v2476 = vpop.f32.mrf.mxu0
        %v2477 = vadd.f32 %v2364, %v2476
        %2478 = vmatprep.mubr.bf16.mxu0 %v1599
        %2479 = vmatmul.mubr.bf16.gmra.mxu0 %v1598
        %v2480 = vpop.f32.mrf.mxu0
        %v2481 = vadd.f32 %v2368, %v2480
        %v2482 = vpop.f32.mrf.mxu0
        %v2483 = vadd.f32 %v2370, %v2482
        %v2484 = vpop.f32.mrf.mxu0
        %v2485 = vadd.f32 %v2372, %v2484
        %v2486 = vpop.f32.mrf.mxu0
        %v2487 = vadd.f32 %v2374, %v2486
        %2488 = vdwg.mxu0
        %2489 = vmatprep.subr.bf16.mxu0 %v1209
        %2490 = vmatpush1.bf16.xpose.msra.mxu0 %v1208
        %2491 = vmatprep.subr.bf16.mxu0 %v1201
        %2492 = vmatpush1.bf16.xpose.msra.mxu0 %v1200
        %2493 = vmatprep.subr.bf16.mxu0 %v1193
        %2494 = vmatpush1.bf16.xpose.msra.mxu0 %v1192
        %2495 = vmatprep.subr.bf16.mxu0 %v1185
        %2496 = vmatpush1.bf16.xpose.msra.mxu0 %v1184
        %2497 = vmatprep.subr.bf16.mxu0 %v1177
        %2498 = vmatpush1.bf16.xpose.msra.mxu0 %v1176
        %2499 = vmatprep.subr.bf16.mxu0 %v1169
        %2500 = vmatpush1.bf16.xpose.msra.mxu0 %v1168
        %2501 = vmatprep.subr.bf16.mxu0 %v1161
        %2502 = vmatpush1.bf16.xpose.msra.mxu0 %v1160
        %2503 = vmatprep.subr.bf16.mxu0 %v1153
        %2504 = vmatpush1.bf16.xpose.msra.mxu0 %v1152
        %2505 = vmatprep.subr.bf16.mxu0 %v1273
        %2506 = vmatpush2.bf16.xpose.msra.mxu0 %v1272
        %2507 = vmatprep.subr.bf16.mxu0 %v1265
        %2508 = vmatpush2.bf16.xpose.msra.mxu0 %v1264
        %2509 = vmatprep.subr.bf16.mxu0 %v1257
        %2510 = vmatpush2.bf16.xpose.msra.mxu0 %v1256
        %2511 = vmatprep.subr.bf16.mxu0 %v1249
        %2512 = vmatpush2.bf16.xpose.msra.mxu0 %v1248
        %2513 = vmatprep.subr.bf16.mxu0 %v1241
        %2514 = vmatpush2.bf16.xpose.msra.mxu0 %v1240
        %2515 = vmatprep.subr.bf16.mxu0 %v1233
        %2516 = vmatpush2.bf16.xpose.msra.mxu0 %v1232
        %2517 = vmatprep.subr.bf16.mxu0 %v1225
        %2518 = vmatpush2.bf16.xpose.msra.mxu0 %v1224
        %2519 = vmatprep.subr.bf16.mxu0 %v1217
        %2520 = vmatpush2.bf16.xpose.msra.mxu0 %v1216
        %2521 = vmatprep.mubr.bf16.mxu0 %v1545
        %2522 = vmatmul.mubr.bf16.gmra.mxu0 %v1544
        %v2523 = vpop.f32.mrf.mxu0
        %v2524 = vadd.f32 %v2411, %v2523
        %v2525 = vpop.f32.mrf.mxu0
        %v2526 = vadd.f32 %v2413, %v2525
        %v2527 = vpop.f32.mrf.mxu0
        %v2528 = vadd.f32 %v2415, %v2527
        %v2529 = vpop.f32.mrf.mxu0
        %v2530 = vadd.f32 %v2417, %v2529
        %2531 = vmatprep.mubr.bf16.mxu0 %v1553
        %2532 = vmatmul.mubr.bf16.gmra.mxu0 %v1552
        %v2533 = vpop.f32.mrf.mxu0
        %v2534 = vadd.f32 %v2421, %v2533
        %v2535 = vpop.f32.mrf.mxu0
        %v2536 = vadd.f32 %v2423, %v2535
        %v2537 = vpop.f32.mrf.mxu0
        %v2538 = vadd.f32 %v2425, %v2537
        %v2539 = vpop.f32.mrf.mxu0
        %v2540 = vadd.f32 %v2427, %v2539
        %2541 = vmatprep.mubr.bf16.mxu0 %v1561
        %2542 = vmatmul.mubr.bf16.gmra.mxu0 %v1560
        %v2543 = vpop.f32.mrf.mxu0
        %v2544 = vadd.f32 %v2431, %v2543
        %v2545 = vpop.f32.mrf.mxu0
        %v2546 = vadd.f32 %v2433, %v2545
        %v2547 = vpop.f32.mrf.mxu0
        %v2548 = vadd.f32 %v2435, %v2547
        %v2549 = vpop.f32.mrf.mxu0
        %v2550 = vadd.f32 %v2437, %v2549
        %2551 = vmatprep.mubr.bf16.mxu0 %v1569
        %2552 = vmatmul.mubr.bf16.gmra.mxu0 %v1568
        %v2553 = vpop.f32.mrf.mxu0
        %v2554 = vadd.f32 %v2441, %v2553
        %v2555 = vpop.f32.mrf.mxu0
        %v2556 = vadd.f32 %v2443, %v2555
        %v2557 = vpop.f32.mrf.mxu0
        %v2558 = vadd.f32 %v2445, %v2557
        %v2559 = vpop.f32.mrf.mxu0
        %v2560 = vadd.f32 %v2447, %v2559
        %2561 = vmatprep.mubr.bf16.mxu0 %v1577
        %2562 = vmatmul.mubr.bf16.gmra.mxu0 %v1576
        %v2563 = vpop.f32.mrf.mxu0
        %v2564 = vadd.f32 %v2451, %v2563
        %v2565 = vpop.f32.mrf.mxu0
        %v2566 = vadd.f32 %v2453, %v2565
        %v2567 = vpop.f32.mrf.mxu0
        %v2568 = vadd.f32 %v2455, %v2567
        %v2569 = vpop.f32.mrf.mxu0
        %v2570 = vadd.f32 %v2457, %v2569
        %2571 = vmatprep.mubr.bf16.mxu0 %v1585
        %2572 = vmatmul.mubr.bf16.gmra.mxu0 %v1584
        %v2573 = vpop.f32.mrf.mxu0
        %v2574 = vadd.f32 %v2461, %v2573
        %v2575 = vpop.f32.mrf.mxu0
        %v2576 = vadd.f32 %v2463, %v2575
        %v2577 = vpop.f32.mrf.mxu0
        %v2578 = vadd.f32 %v2465, %v2577
        %v2579 = vpop.f32.mrf.mxu0
        %v2580 = vadd.f32 %v2467, %v2579
        %2581 = vmatprep.mubr.bf16.mxu0 %v1593
        %2582 = vmatmul.mubr.bf16.gmra.mxu0 %v1592
        %v2583 = vpop.f32.mrf.mxu0
        %v2584 = vadd.f32 %v2471, %v2583
        %v2585 = vpop.f32.mrf.mxu0
        %v2586 = vadd.f32 %v2473, %v2585
        %v2587 = vpop.f32.mrf.mxu0
        %v2588 = vadd.f32 %v2475, %v2587
        %v2589 = vpop.f32.mrf.mxu0
        %v2590 = vadd.f32 %v2477, %v2589
        %2591 = vmatprep.mubr.bf16.mxu0 %v1601
        %2592 = vmatmul.mubr.bf16.gmra.mxu0 %v1600
        %v2593 = vpop.f32.mrf.mxu0
        %v2594 = vadd.f32 %v2481, %v2593
        %v2595 = vpop.f32.mrf.mxu0
        %v2596 = vadd.f32 %v2483, %v2595
        %v2597 = vpop.f32.mrf.mxu0
        %v2598 = vadd.f32 %v2485, %v2597
        %v2599 = vpop.f32.mrf.mxu0
        %v2600 = vadd.f32 %v2487, %v2599
        %2601 = vdwg.mxu0
        %2602 = vmatprep.subr.bf16.mxu0 %v1331
        %2603 = vmatpush1.bf16.xpose.msra.mxu0 %v1330
        %2604 = vmatprep.subr.bf16.mxu0 %v1323
        %2605 = vmatpush1.bf16.xpose.msra.mxu0 %v1322
        %2606 = vmatprep.subr.bf16.mxu0 %v1315
        %2607 = vmatpush1.bf16.xpose.msra.mxu0 %v1314
        %2608 = vmatprep.subr.bf16.mxu0 %v1307
        %2609 = vmatpush1.bf16.xpose.msra.mxu0 %v1306
        %2610 = vmatprep.subr.bf16.mxu0 %v1299
        %2611 = vmatpush1.bf16.xpose.msra.mxu0 %v1298
        %2612 = vmatprep.subr.bf16.mxu0 %v1291
        %2613 = vmatpush1.bf16.xpose.msra.mxu0 %v1290
        %2614 = vmatprep.subr.bf16.mxu0 %v1283
        %2615 = vmatpush1.bf16.xpose.msra.mxu0 %v1282
        %2616 = vmatprep.subr.bf16.mxu0 %v1275
        %2617 = vmatpush1.bf16.xpose.msra.mxu0 %v1274
        %2618 = vmatprep.subr.bf16.mxu0 %v1395
        %2619 = vmatpush2.bf16.xpose.msra.mxu0 %v1394
        %2620 = vmatprep.subr.bf16.mxu0 %v1387
        %2621 = vmatpush2.bf16.xpose.msra.mxu0 %v1386
        %2622 = vmatprep.subr.bf16.mxu0 %v1379
        %2623 = vmatpush2.bf16.xpose.msra.mxu0 %v1378
        %2624 = vmatprep.subr.bf16.mxu0 %v1371
        %2625 = vmatpush2.bf16.xpose.msra.mxu0 %v1370
        %2626 = vmatprep.subr.bf16.mxu0 %v1363
        %2627 = vmatpush2.bf16.xpose.msra.mxu0 %v1362
        %2628 = vmatprep.subr.bf16.mxu0 %v1355
        %2629 = vmatpush2.bf16.xpose.msra.mxu0 %v1354
        %2630 = vmatprep.subr.bf16.mxu0 %v1347
        %2631 = vmatpush2.bf16.xpose.msra.mxu0 %v1346
        %2632 = vmatprep.subr.bf16.mxu0 %v1339
        %2633 = vmatpush2.bf16.xpose.msra.mxu0 %v1338
        %2634 = vmatprep.mubr.bf16.mxu0 %v1539
        %2635 = vmatmul.mubr.bf16.gmra.mxu0 %v1538
        %v2636 = vpop.f32.mrf.mxu0
        %v2637 = vadd.f32 %v1621, %v2636
        %v2638 = vpop.f32.mrf.mxu0
        %v2639 = vadd.f32 %v1621, %v2638
        %v2640 = vpop.f32.mrf.mxu0
        %v2641 = vadd.f32 %v1626, %v2640
        %v2642 = vpop.f32.mrf.mxu0
        %v2643 = vadd.f32 %v1626, %v2642
        %2644 = vmatprep.mubr.bf16.mxu0 %v1547
        %2645 = vmatmul.mubr.bf16.gmra.mxu0 %v1546
        %v2646 = vpop.f32.mrf.mxu0
        %v2647 = vadd.f32 %v1631, %v2646
        %v2648 = vpop.f32.mrf.mxu0
        %v2649 = vadd.f32 %v1631, %v2648
        %v2650 = vpop.f32.mrf.mxu0
        %v2651 = vadd.f32 %v1636, %v2650
        %v2652 = vpop.f32.mrf.mxu0
        %v2653 = vadd.f32 %v1636, %v2652
        %2654 = vmatprep.mubr.bf16.mxu0 %v1555
        %2655 = vmatmul.mubr.bf16.gmra.mxu0 %v1554
        %v2656 = vpop.f32.mrf.mxu0
        %v2657 = vadd.f32 %v1641, %v2656
        %v2658 = vpop.f32.mrf.mxu0
        %v2659 = vadd.f32 %v1641, %v2658
        %v2660 = vpop.f32.mrf.mxu0
        %v2661 = vadd.f32 %v1646, %v2660
        %v2662 = vpop.f32.mrf.mxu0
        %v2663 = vadd.f32 %v1646, %v2662
        %2664 = vmatprep.mubr.bf16.mxu0 %v1563
        %2665 = vmatmul.mubr.bf16.gmra.mxu0 %v1562
        %v2666 = vpop.f32.mrf.mxu0
        %v2667 = vadd.f32 %v1651, %v2666
        %v2668 = vpop.f32.mrf.mxu0
        %v2669 = vadd.f32 %v1651, %v2668
        %v2670 = vpop.f32.mrf.mxu0
        %v2671 = vadd.f32 %v1656, %v2670
        %v2672 = vpop.f32.mrf.mxu0
        %v2673 = vadd.f32 %v1656, %v2672
        %2674 = vmatprep.mubr.bf16.mxu0 %v1571
        %2675 = vmatmul.mubr.bf16.gmra.mxu0 %v1570
        %v2676 = vpop.f32.mrf.mxu0
        %v2677 = vadd.f32 %v1661, %v2676
        %v2678 = vpop.f32.mrf.mxu0
        %v2679 = vadd.f32 %v1661, %v2678
        %v2680 = vpop.f32.mrf.mxu0
        %v2681 = vadd.f32 %v1666, %v2680
        %v2682 = vpop.f32.mrf.mxu0
        %v2683 = vadd.f32 %v1666, %v2682
        %2684 = vmatprep.mubr.bf16.mxu0 %v1579
        %2685 = vmatmul.mubr.bf16.gmra.mxu0 %v1578
        %v2686 = vpop.f32.mrf.mxu0
        %v2687 = vadd.f32 %v1671, %v2686
        %v2688 = vpop.f32.mrf.mxu0
        %v2689 = vadd.f32 %v1671, %v2688
        %v2690 = vpop.f32.mrf.mxu0
        %v2691 = vadd.f32 %v1676, %v2690
        %v2692 = vpop.f32.mrf.mxu0
        %v2693 = vadd.f32 %v1676, %v2692
        %2694 = vmatprep.mubr.bf16.mxu0 %v1587
        %2695 = vmatmul.mubr.bf16.gmra.mxu0 %v1586
        %v2696 = vpop.f32.mrf.mxu0
        %v2697 = vadd.f32 %v1681, %v2696
        %v2698 = vpop.f32.mrf.mxu0
        %v2699 = vadd.f32 %v1681, %v2698
        %v2700 = vpop.f32.mrf.mxu0
        %v2701 = vadd.f32 %v1686, %v2700
        %v2702 = vpop.f32.mrf.mxu0
        %v2703 = vadd.f32 %v1686, %v2702
        %2704 = vmatprep.mubr.bf16.mxu0 %v1595
        %2705 = vmatmul.mubr.bf16.gmra.mxu0 %v1594
        %v2706 = vpop.f32.mrf.mxu0
        %v2707 = vadd.f32 %v1691, %v2706
        %v2708 = vpop.f32.mrf.mxu0
        %v2709 = vadd.f32 %v1691, %v2708
        %v2710 = vpop.f32.mrf.mxu0
        %v2711 = vadd.f32 %v1696, %v2710
        %v2712 = vpop.f32.mrf.mxu0
        %v2713 = vadd.f32 %v1696, %v2712
        %2714 = vdwg.mxu0
        %2715 = vmatprep.subr.bf16.mxu0 %v1333
        %2716 = vmatpush1.bf16.xpose.msra.mxu0 %v1332
        %2717 = vmatprep.subr.bf16.mxu0 %v1325
        %2718 = vmatpush1.bf16.xpose.msra.mxu0 %v1324
        %2719 = vmatprep.subr.bf16.mxu0 %v1317
        %2720 = vmatpush1.bf16.xpose.msra.mxu0 %v1316
        %2721 = vmatprep.subr.bf16.mxu0 %v1309
        %2722 = vmatpush1.bf16.xpose.msra.mxu0 %v1308
        %2723 = vmatprep.subr.bf16.mxu0 %v1301
        %2724 = vmatpush1.bf16.xpose.msra.mxu0 %v1300
        %2725 = vmatprep.subr.bf16.mxu0 %v1293
        %2726 = vmatpush1.bf16.xpose.msra.mxu0 %v1292
        %2727 = vmatprep.subr.bf16.mxu0 %v1285
        %2728 = vmatpush1.bf16.xpose.msra.mxu0 %v1284
        %2729 = vmatprep.subr.bf16.mxu0 %v1277
        %2730 = vmatpush1.bf16.xpose.msra.mxu0 %v1276
        %2731 = vmatprep.subr.bf16.mxu0 %v1397
        %2732 = vmatpush2.bf16.xpose.msra.mxu0 %v1396
        %2733 = vmatprep.subr.bf16.mxu0 %v1389
        %2734 = vmatpush2.bf16.xpose.msra.mxu0 %v1388
        %2735 = vmatprep.subr.bf16.mxu0 %v1381
        %2736 = vmatpush2.bf16.xpose.msra.mxu0 %v1380
        %2737 = vmatprep.subr.bf16.mxu0 %v1373
        %2738 = vmatpush2.bf16.xpose.msra.mxu0 %v1372
        %2739 = vmatprep.subr.bf16.mxu0 %v1365
        %2740 = vmatpush2.bf16.xpose.msra.mxu0 %v1364
        %2741 = vmatprep.subr.bf16.mxu0 %v1357
        %2742 = vmatpush2.bf16.xpose.msra.mxu0 %v1356
        %2743 = vmatprep.subr.bf16.mxu0 %v1349
        %2744 = vmatpush2.bf16.xpose.msra.mxu0 %v1348
        %2745 = vmatprep.subr.bf16.mxu0 %v1341
        %2746 = vmatpush2.bf16.xpose.msra.mxu0 %v1340
        %2747 = vmatprep.mubr.bf16.mxu0 %v1541
        %2748 = vmatmul.mubr.bf16.gmra.mxu0 %v1540
        %v2749 = vpop.f32.mrf.mxu0
        %v2750 = vadd.f32 %v2637, %v2749
        %v2751 = vpop.f32.mrf.mxu0
        %v2752 = vadd.f32 %v2639, %v2751
        %v2753 = vpop.f32.mrf.mxu0
        %v2754 = vadd.f32 %v2641, %v2753
        %v2755 = vpop.f32.mrf.mxu0
        %v2756 = vadd.f32 %v2643, %v2755
        %2757 = vmatprep.mubr.bf16.mxu0 %v1549
        %2758 = vmatmul.mubr.bf16.gmra.mxu0 %v1548
        %v2759 = vpop.f32.mrf.mxu0
        %v2760 = vadd.f32 %v2647, %v2759
        %v2761 = vpop.f32.mrf.mxu0
        %v2762 = vadd.f32 %v2649, %v2761
        %v2763 = vpop.f32.mrf.mxu0
        %v2764 = vadd.f32 %v2651, %v2763
        %v2765 = vpop.f32.mrf.mxu0
        %v2766 = vadd.f32 %v2653, %v2765
        %2767 = vmatprep.mubr.bf16.mxu0 %v1557
        %2768 = vmatmul.mubr.bf16.gmra.mxu0 %v1556
        %v2769 = vpop.f32.mrf.mxu0
        %v2770 = vadd.f32 %v2657, %v2769
        %v2771 = vpop.f32.mrf.mxu0
        %v2772 = vadd.f32 %v2659, %v2771
        %v2773 = vpop.f32.mrf.mxu0
        %v2774 = vadd.f32 %v2661, %v2773
        %v2775 = vpop.f32.mrf.mxu0
        %v2776 = vadd.f32 %v2663, %v2775
        %2777 = vmatprep.mubr.bf16.mxu0 %v1565
        %2778 = vmatmul.mubr.bf16.gmra.mxu0 %v1564
        %v2779 = vpop.f32.mrf.mxu0
        %v2780 = vadd.f32 %v2667, %v2779
        %v2781 = vpop.f32.mrf.mxu0
        %v2782 = vadd.f32 %v2669, %v2781
        %v2783 = vpop.f32.mrf.mxu0
        %v2784 = vadd.f32 %v2671, %v2783
        %v2785 = vpop.f32.mrf.mxu0
        %v2786 = vadd.f32 %v2673, %v2785
        %2787 = vmatprep.mubr.bf16.mxu0 %v1573
        %2788 = vmatmul.mubr.bf16.gmra.mxu0 %v1572
        %v2789 = vpop.f32.mrf.mxu0
        %v2790 = vadd.f32 %v2677, %v2789
        %v2791 = vpop.f32.mrf.mxu0
        %v2792 = vadd.f32 %v2679, %v2791
        %v2793 = vpop.f32.mrf.mxu0
        %v2794 = vadd.f32 %v2681, %v2793
        %v2795 = vpop.f32.mrf.mxu0
        %v2796 = vadd.f32 %v2683, %v2795
        %2797 = vmatprep.mubr.bf16.mxu0 %v1581
        %2798 = vmatmul.mubr.bf16.gmra.mxu0 %v1580
        %v2799 = vpop.f32.mrf.mxu0
        %v2800 = vadd.f32 %v2687, %v2799
        %v2801 = vpop.f32.mrf.mxu0
        %v2802 = vadd.f32 %v2689, %v2801
        %v2803 = vpop.f32.mrf.mxu0
        %v2804 = vadd.f32 %v2691, %v2803
        %v2805 = vpop.f32.mrf.mxu0
        %v2806 = vadd.f32 %v2693, %v2805
        %2807 = vmatprep.mubr.bf16.mxu0 %v1589
        %2808 = vmatmul.mubr.bf16.gmra.mxu0 %v1588
        %v2809 = vpop.f32.mrf.mxu0
        %v2810 = vadd.f32 %v2697, %v2809
        %v2811 = vpop.f32.mrf.mxu0
        %v2812 = vadd.f32 %v2699, %v2811
        %v2813 = vpop.f32.mrf.mxu0
        %v2814 = vadd.f32 %v2701, %v2813
        %v2815 = vpop.f32.mrf.mxu0
        %v2816 = vadd.f32 %v2703, %v2815
        %2817 = vmatprep.mubr.bf16.mxu0 %v1597
        %2818 = vmatmul.mubr.bf16.gmra.mxu0 %v1596
        %v2819 = vpop.f32.mrf.mxu0
        %v2820 = vadd.f32 %v2707, %v2819
        %v2821 = vpop.f32.mrf.mxu0
        %v2822 = vadd.f32 %v2709, %v2821
        %v2823 = vpop.f32.mrf.mxu0
        %v2824 = vadd.f32 %v2711, %v2823
        %v2825 = vpop.f32.mrf.mxu0
        %v2826 = vadd.f32 %v2713, %v2825
        %2827 = vdwg.mxu0
        %2828 = vmatprep.subr.bf16.mxu0 %v1335
        %2829 = vmatpush1.bf16.xpose.msra.mxu0 %v1334
        %2830 = vmatprep.subr.bf16.mxu0 %v1327
        %2831 = vmatpush1.bf16.xpose.msra.mxu0 %v1326
        %2832 = vmatprep.subr.bf16.mxu0 %v1319
        %2833 = vmatpush1.bf16.xpose.msra.mxu0 %v1318
        %2834 = vmatprep.subr.bf16.mxu0 %v1311
        %2835 = vmatpush1.bf16.xpose.msra.mxu0 %v1310
        %2836 = vmatprep.subr.bf16.mxu0 %v1303
        %2837 = vmatpush1.bf16.xpose.msra.mxu0 %v1302
        %2838 = vmatprep.subr.bf16.mxu0 %v1295
        %2839 = vmatpush1.bf16.xpose.msra.mxu0 %v1294
        %2840 = vmatprep.subr.bf16.mxu0 %v1287
        %2841 = vmatpush1.bf16.xpose.msra.mxu0 %v1286
        %2842 = vmatprep.subr.bf16.mxu0 %v1279
        %2843 = vmatpush1.bf16.xpose.msra.mxu0 %v1278
        %2844 = vmatprep.subr.bf16.mxu0 %v1399
        %2845 = vmatpush2.bf16.xpose.msra.mxu0 %v1398
        %2846 = vmatprep.subr.bf16.mxu0 %v1391
        %2847 = vmatpush2.bf16.xpose.msra.mxu0 %v1390
        %2848 = vmatprep.subr.bf16.mxu0 %v1383
        %2849 = vmatpush2.bf16.xpose.msra.mxu0 %v1382
        %2850 = vmatprep.subr.bf16.mxu0 %v1375
        %2851 = vmatpush2.bf16.xpose.msra.mxu0 %v1374
        %2852 = vmatprep.subr.bf16.mxu0 %v1367
        %2853 = vmatpush2.bf16.xpose.msra.mxu0 %v1366
        %2854 = vmatprep.subr.bf16.mxu0 %v1359
        %2855 = vmatpush2.bf16.xpose.msra.mxu0 %v1358
        %2856 = vmatprep.subr.bf16.mxu0 %v1351
        %2857 = vmatpush2.bf16.xpose.msra.mxu0 %v1350
        %2858 = vmatprep.subr.bf16.mxu0 %v1343
        %2859 = vmatpush2.bf16.xpose.msra.mxu0 %v1342
        %2860 = vmatprep.mubr.bf16.mxu0 %v1543
        %2861 = vmatmul.mubr.bf16.gmra.mxu0 %v1542
        %v2862 = vpop.f32.mrf.mxu0
        %v2863 = vadd.f32 %v2750, %v2862
        %v2864 = vpop.f32.mrf.mxu0
        %v2865 = vadd.f32 %v2752, %v2864
        %v2866 = vpop.f32.mrf.mxu0
        %v2867 = vadd.f32 %v2754, %v2866
        %v2868 = vpop.f32.mrf.mxu0
        %v2869 = vadd.f32 %v2756, %v2868
        %2870 = vmatprep.mubr.bf16.mxu0 %v1551
        %2871 = vmatmul.mubr.bf16.gmra.mxu0 %v1550
        %v2872 = vpop.f32.mrf.mxu0
        %v2873 = vadd.f32 %v2760, %v2872
        %v2874 = vpop.f32.mrf.mxu0
        %v2875 = vadd.f32 %v2762, %v2874
        %v2876 = vpop.f32.mrf.mxu0
        %v2877 = vadd.f32 %v2764, %v2876
        %v2878 = vpop.f32.mrf.mxu0
        %v2879 = vadd.f32 %v2766, %v2878
        %2880 = vmatprep.mubr.bf16.mxu0 %v1559
        %2881 = vmatmul.mubr.bf16.gmra.mxu0 %v1558
        %v2882 = vpop.f32.mrf.mxu0
        %v2883 = vadd.f32 %v2770, %v2882
        %v2884 = vpop.f32.mrf.mxu0
        %v2885 = vadd.f32 %v2772, %v2884
        %v2886 = vpop.f32.mrf.mxu0
        %v2887 = vadd.f32 %v2774, %v2886
        %v2888 = vpop.f32.mrf.mxu0
        %v2889 = vadd.f32 %v2776, %v2888
        %2890 = vmatprep.mubr.bf16.mxu0 %v1567
        %2891 = vmatmul.mubr.bf16.gmra.mxu0 %v1566
        %v2892 = vpop.f32.mrf.mxu0
        %v2893 = vadd.f32 %v2780, %v2892
        %v2894 = vpop.f32.mrf.mxu0
        %v2895 = vadd.f32 %v2782, %v2894
        %v2896 = vpop.f32.mrf.mxu0
        %v2897 = vadd.f32 %v2784, %v2896
        %v2898 = vpop.f32.mrf.mxu0
        %v2899 = vadd.f32 %v2786, %v2898
        %2900 = vmatprep.mubr.bf16.mxu0 %v1575
        %2901 = vmatmul.mubr.bf16.gmra.mxu0 %v1574
        %v2902 = vpop.f32.mrf.mxu0
        %v2903 = vadd.f32 %v2790, %v2902
        %v2904 = vpop.f32.mrf.mxu0
        %v2905 = vadd.f32 %v2792, %v2904
        %v2906 = vpop.f32.mrf.mxu0
        %v2907 = vadd.f32 %v2794, %v2906
        %v2908 = vpop.f32.mrf.mxu0
        %v2909 = vadd.f32 %v2796, %v2908
        %2910 = vmatprep.mubr.bf16.mxu0 %v1583
        %2911 = vmatmul.mubr.bf16.gmra.mxu0 %v1582
        %v2912 = vpop.f32.mrf.mxu0
        %v2913 = vadd.f32 %v2800, %v2912
        %v2914 = vpop.f32.mrf.mxu0
        %v2915 = vadd.f32 %v2802, %v2914
        %v2916 = vpop.f32.mrf.mxu0
        %v2917 = vadd.f32 %v2804, %v2916
        %v2918 = vpop.f32.mrf.mxu0
        %v2919 = vadd.f32 %v2806, %v2918
        %2920 = vmatprep.mubr.bf16.mxu0 %v1591
        %2921 = vmatmul.mubr.bf16.gmra.mxu0 %v1590
        %v2922 = vpop.f32.mrf.mxu0
        %v2923 = vadd.f32 %v2810, %v2922
        %v2924 = vpop.f32.mrf.mxu0
        %v2925 = vadd.f32 %v2812, %v2924
        %v2926 = vpop.f32.mrf.mxu0
        %v2927 = vadd.f32 %v2814, %v2926
        %v2928 = vpop.f32.mrf.mxu0
        %v2929 = vadd.f32 %v2816, %v2928
        %2930 = vmatprep.mubr.bf16.mxu0 %v1599
        %2931 = vmatmul.mubr.bf16.gmra.mxu0 %v1598
        %v2932 = vpop.f32.mrf.mxu0
        %v2933 = vadd.f32 %v2820, %v2932
        %v2934 = vpop.f32.mrf.mxu0
        %v2935 = vadd.f32 %v2822, %v2934
        %v2936 = vpop.f32.mrf.mxu0
        %v2937 = vadd.f32 %v2824, %v2936
        %v2938 = vpop.f32.mrf.mxu0
        %v2939 = vadd.f32 %v2826, %v2938
        %2940 = vdwg.mxu0
        %2941 = vmatprep.subr.bf16.mxu0 %v1337
        %2942 = vmatpush1.bf16.xpose.msra.mxu0 %v1336
        %2943 = vmatprep.subr.bf16.mxu0 %v1329
        %2944 = vmatpush1.bf16.xpose.msra.mxu0 %v1328
        %2945 = vmatprep.subr.bf16.mxu0 %v1321
        %2946 = vmatpush1.bf16.xpose.msra.mxu0 %v1320
        %2947 = vmatprep.subr.bf16.mxu0 %v1313
        %2948 = vmatpush1.bf16.xpose.msra.mxu0 %v1312
        %2949 = vmatprep.subr.bf16.mxu0 %v1305
        %2950 = vmatpush1.bf16.xpose.msra.mxu0 %v1304
        %2951 = vmatprep.subr.bf16.mxu0 %v1297
        %2952 = vmatpush1.bf16.xpose.msra.mxu0 %v1296
        %2953 = vmatprep.subr.bf16.mxu0 %v1289
        %2954 = vmatpush1.bf16.xpose.msra.mxu0 %v1288
        %2955 = vmatprep.subr.bf16.mxu0 %v1281
        %2956 = vmatpush1.bf16.xpose.msra.mxu0 %v1280
        %2957 = vmatprep.subr.bf16.mxu0 %v1401
        %2958 = vmatpush2.bf16.xpose.msra.mxu0 %v1400
        %2959 = vmatprep.subr.bf16.mxu0 %v1393
        %2960 = vmatpush2.bf16.xpose.msra.mxu0 %v1392
        %2961 = vmatprep.subr.bf16.mxu0 %v1385
        %2962 = vmatpush2.bf16.xpose.msra.mxu0 %v1384
        %2963 = vmatprep.subr.bf16.mxu0 %v1377
        %2964 = vmatpush2.bf16.xpose.msra.mxu0 %v1376
        %2965 = vmatprep.subr.bf16.mxu0 %v1369
        %2966 = vmatpush2.bf16.xpose.msra.mxu0 %v1368
        %2967 = vmatprep.subr.bf16.mxu0 %v1361
        %2968 = vmatpush2.bf16.xpose.msra.mxu0 %v1360
        %2969 = vmatprep.subr.bf16.mxu0 %v1353
        %2970 = vmatpush2.bf16.xpose.msra.mxu0 %v1352
        %2971 = vmatprep.subr.bf16.mxu0 %v1345
        %2972 = vmatpush2.bf16.xpose.msra.mxu0 %v1344
        %2973 = vmatprep.mubr.bf16.mxu0 %v1545
        %2974 = vmatmul.mubr.bf16.gmra.mxu0 %v1544
        %v2975 = vpop.f32.mrf.mxu0
        %v2976 = vadd.f32 %v2863, %v2975
        %v2977 = vpop.f32.mrf.mxu0
        %v2978 = vadd.f32 %v2865, %v2977
        %v2979 = vpop.f32.mrf.mxu0
        %v2980 = vadd.f32 %v2867, %v2979
        %v2981 = vpop.f32.mrf.mxu0
        %v2982 = vadd.f32 %v2869, %v2981
        %2983 = vmatprep.mubr.bf16.mxu0 %v1553
        %2984 = vmatmul.mubr.bf16.gmra.mxu0 %v1552
        %v2985 = vpop.f32.mrf.mxu0
        %v2986 = vadd.f32 %v2873, %v2985
        %v2987 = vpop.f32.mrf.mxu0
        %v2988 = vadd.f32 %v2875, %v2987
        %v2989 = vpop.f32.mrf.mxu0
        %v2990 = vadd.f32 %v2877, %v2989
        %v2991 = vpop.f32.mrf.mxu0
        %v2992 = vadd.f32 %v2879, %v2991
        %2993 = vmatprep.mubr.bf16.mxu0 %v1561
        %2994 = vmatmul.mubr.bf16.gmra.mxu0 %v1560
        %v2995 = vpop.f32.mrf.mxu0
        %v2996 = vadd.f32 %v2883, %v2995
        %v2997 = vpop.f32.mrf.mxu0
        %v2998 = vadd.f32 %v2885, %v2997
        %v2999 = vpop.f32.mrf.mxu0
        %v3000 = vadd.f32 %v2887, %v2999
        %v3001 = vpop.f32.mrf.mxu0
        %v3002 = vadd.f32 %v2889, %v3001
        %3003 = vmatprep.mubr.bf16.mxu0 %v1569
        %3004 = vmatmul.mubr.bf16.gmra.mxu0 %v1568
        %v3005 = vpop.f32.mrf.mxu0
        %v3006 = vadd.f32 %v2893, %v3005
        %v3007 = vpop.f32.mrf.mxu0
        %v3008 = vadd.f32 %v2895, %v3007
        %v3009 = vpop.f32.mrf.mxu0
        %v3010 = vadd.f32 %v2897, %v3009
        %v3011 = vpop.f32.mrf.mxu0
        %v3012 = vadd.f32 %v2899, %v3011
        %3013 = vmatprep.mubr.bf16.mxu0 %v1577
        %3014 = vmatmul.mubr.bf16.gmra.mxu0 %v1576
        %v3015 = vpop.f32.mrf.mxu0
        %v3016 = vadd.f32 %v2903, %v3015
        %v3017 = vpop.f32.mrf.mxu0
        %v3018 = vadd.f32 %v2905, %v3017
        %v3019 = vpop.f32.mrf.mxu0
        %v3020 = vadd.f32 %v2907, %v3019
        %v3021 = vpop.f32.mrf.mxu0
        %v3022 = vadd.f32 %v2909, %v3021
        %3023 = vmatprep.mubr.bf16.mxu0 %v1585
        %3024 = vmatmul.mubr.bf16.gmra.mxu0 %v1584
        %v3025 = vpop.f32.mrf.mxu0
        %v3026 = vadd.f32 %v2913, %v3025
        %v3027 = vpop.f32.mrf.mxu0
        %v3028 = vadd.f32 %v2915, %v3027
        %v3029 = vpop.f32.mrf.mxu0
        %v3030 = vadd.f32 %v2917, %v3029
        %v3031 = vpop.f32.mrf.mxu0
        %v3032 = vadd.f32 %v2919, %v3031
        %3033 = vmatprep.mubr.bf16.mxu0 %v1593
        %3034 = vmatmul.mubr.bf16.gmra.mxu0 %v1592
        %v3035 = vpop.f32.mrf.mxu0
        %v3036 = vadd.f32 %v2923, %v3035
        %v3037 = vpop.f32.mrf.mxu0
        %v3038 = vadd.f32 %v2925, %v3037
        %v3039 = vpop.f32.mrf.mxu0
        %v3040 = vadd.f32 %v2927, %v3039
        %v3041 = vpop.f32.mrf.mxu0
        %v3042 = vadd.f32 %v2929, %v3041
        %3043 = vmatprep.mubr.bf16.mxu0 %v1601
        %3044 = vmatmul.mubr.bf16.gmra.mxu0 %v1600
        %v3045 = vpop.f32.mrf.mxu0
        %v3046 = vadd.f32 %v2933, %v3045
        %v3047 = vpop.f32.mrf.mxu0
        %v3048 = vadd.f32 %v2935, %v3047
        %v3049 = vpop.f32.mrf.mxu0
        %v3050 = vadd.f32 %v2937, %v3049
        %v3051 = vpop.f32.mrf.mxu0
        %v3052 = vadd.f32 %v2939, %v3051
        %3053 = vdwg.mxu0
        %3054 = vmatprep.subr.bf16.mxu0 0
        %3055 = vmatpush1.bf16.xpose.msra.mxu0 0
        %3056 = vmatprep.subr.bf16.mxu0 0
        %3057 = vmatpush1.bf16.xpose.msra.mxu0 0
        %3058 = vmatprep.subr.bf16.mxu0 0
        %3059 = vmatpush1.bf16.xpose.msra.mxu0 0
        %3060 = vmatprep.subr.bf16.mxu0 0
        %3061 = vmatpush1.bf16.xpose.msra.mxu0 0
        %3062 = vmatprep.subr.bf16.mxu0 0
        %3063 = vmatpush1.bf16.xpose.msra.mxu0 0
        %3064 = vmatprep.subr.bf16.mxu0 0
        %3065 = vmatpush1.bf16.xpose.msra.mxu0 0
        %3066 = vmatprep.subr.bf16.mxu0 0
        %3067 = vmatpush1.bf16.xpose.msra.mxu0 0
        %3068 = vmatprep.subr.bf16.mxu0 %v1403
        %3069 = vmatpush1.bf16.xpose.msra.mxu0 %v1402
        %3070 = vmatprep.subr.bf16.mxu0 0
        %3071 = vmatpush2.bf16.xpose.msra.mxu0 0
        %3072 = vmatprep.subr.bf16.mxu0 0
        %3073 = vmatpush2.bf16.xpose.msra.mxu0 0
        %3074 = vmatprep.subr.bf16.mxu0 0
        %3075 = vmatpush2.bf16.xpose.msra.mxu0 0
        %3076 = vmatprep.subr.bf16.mxu0 0
        %3077 = vmatpush2.bf16.xpose.msra.mxu0 0
        %3078 = vmatprep.subr.bf16.mxu0 0
        %3079 = vmatpush2.bf16.xpose.msra.mxu0 0
        %3080 = vmatprep.subr.bf16.mxu0 0
        %3081 = vmatpush2.bf16.xpose.msra.mxu0 0
        %3082 = vmatprep.subr.bf16.mxu0 0
        %3083 = vmatpush2.bf16.xpose.msra.mxu0 0
        %3084 = vmatprep.subr.bf16.mxu0 0
        %3085 = vmatpush2.bf16.xpose.msra.mxu0 0
        %3086 = vmatprep.mubr.bf16.mxu0 %v1539
        %3087 = vmatmul.mubr.bf16.gmra.mxu0 %v1538
        %v3088 = vpop.f32.mrf.mxu0
        %v3089 = vadd.f32 %v1621, %v3088
        %v3090 = vpop.f32.mrf.mxu0
        %v3091 = vpop.f32.mrf.mxu0
        %v3092 = vadd.f32 %v1626, %v3091
        %v3093 = vpop.f32.mrf.mxu0
        %3094 = vmatprep.mubr.bf16.mxu0 %v1547
        %3095 = vmatmul.mubr.bf16.gmra.mxu0 %v1546
        %v3096 = vpop.f32.mrf.mxu0
        %v3097 = vadd.f32 %v1631, %v3096
        %v3098 = vpop.f32.mrf.mxu0
        %v3099 = vpop.f32.mrf.mxu0
        %v3100 = vadd.f32 %v1636, %v3099
        %v3101 = vpop.f32.mrf.mxu0
        %3102 = vmatprep.mubr.bf16.mxu0 %v1555
        %3103 = vmatmul.mubr.bf16.gmra.mxu0 %v1554
        %v3104 = vpop.f32.mrf.mxu0
        %v3105 = vadd.f32 %v1641, %v3104
        %v3106 = vpop.f32.mrf.mxu0
        %v3107 = vpop.f32.mrf.mxu0
        %v3108 = vadd.f32 %v1646, %v3107
        %v3109 = vpop.f32.mrf.mxu0
        %3110 = vmatprep.mubr.bf16.mxu0 %v1563
        %3111 = vmatmul.mubr.bf16.gmra.mxu0 %v1562
        %v3112 = vpop.f32.mrf.mxu0
        %v3113 = vadd.f32 %v1651, %v3112
        %v3114 = vpop.f32.mrf.mxu0
        %v3115 = vpop.f32.mrf.mxu0
        %v3116 = vadd.f32 %v1656, %v3115
        %v3117 = vpop.f32.mrf.mxu0
        %3118 = vmatprep.mubr.bf16.mxu0 %v1571
        %3119 = vmatmul.mubr.bf16.gmra.mxu0 %v1570
        %v3120 = vpop.f32.mrf.mxu0
        %v3121 = vadd.f32 %v1661, %v3120
        %v3122 = vpop.f32.mrf.mxu0
        %v3123 = vpop.f32.mrf.mxu0
        %v3124 = vadd.f32 %v1666, %v3123
        %v3125 = vpop.f32.mrf.mxu0
        %3126 = vmatprep.mubr.bf16.mxu0 %v1579
        %3127 = vmatmul.mubr.bf16.gmra.mxu0 %v1578
        %v3128 = vpop.f32.mrf.mxu0
        %v3129 = vadd.f32 %v1671, %v3128
        %v3130 = vpop.f32.mrf.mxu0
        %v3131 = vpop.f32.mrf.mxu0
        %v3132 = vadd.f32 %v1676, %v3131
        %v3133 = vpop.f32.mrf.mxu0
        %3134 = vmatprep.mubr.bf16.mxu0 %v1587
        %3135 = vmatmul.mubr.bf16.gmra.mxu0 %v1586
        %v3136 = vpop.f32.mrf.mxu0
        %v3137 = vadd.f32 %v1681, %v3136
        %v3138 = vpop.f32.mrf.mxu0
        %v3139 = vpop.f32.mrf.mxu0
        %v3140 = vadd.f32 %v1686, %v3139
        %v3141 = vpop.f32.mrf.mxu0
        %3142 = vmatprep.mubr.bf16.mxu0 %v1595
        %3143 = vmatmul.mubr.bf16.gmra.mxu0 %v1594
        %v3144 = vpop.f32.mrf.mxu0
        %v3145 = vadd.f32 %v1691, %v3144
        %v3146 = vpop.f32.mrf.mxu0
        %v3147 = vpop.f32.mrf.mxu0
        %v3148 = vadd.f32 %v1696, %v3147
        %v3149 = vpop.f32.mrf.mxu0
        %3150 = vdwg.mxu0
        %3151 = vmatprep.subr.bf16.mxu0 0
        %3152 = vmatpush1.bf16.xpose.msra.mxu0 0
        %3153 = vmatprep.subr.bf16.mxu0 0
        %3154 = vmatpush1.bf16.xpose.msra.mxu0 0
        %3155 = vmatprep.subr.bf16.mxu0 0
        %3156 = vmatpush1.bf16.xpose.msra.mxu0 0
        %3157 = vmatprep.subr.bf16.mxu0 0
        %3158 = vmatpush1.bf16.xpose.msra.mxu0 0
        %3159 = vmatprep.subr.bf16.mxu0 0
        %3160 = vmatpush1.bf16.xpose.msra.mxu0 0
        %3161 = vmatprep.subr.bf16.mxu0 0
        %3162 = vmatpush1.bf16.xpose.msra.mxu0 0
        %3163 = vmatprep.subr.bf16.mxu0 0
        %3164 = vmatpush1.bf16.xpose.msra.mxu0 0
        %3165 = vmatprep.subr.bf16.mxu0 %v1405
        %3166 = vmatpush1.bf16.xpose.msra.mxu0 %v1404
        %3167 = vmatprep.subr.bf16.mxu0 0
        %3168 = vmatpush2.bf16.xpose.msra.mxu0 0
        %3169 = vmatprep.subr.bf16.mxu0 0
        %3170 = vmatpush2.bf16.xpose.msra.mxu0 0
        %3171 = vmatprep.subr.bf16.mxu0 0
        %3172 = vmatpush2.bf16.xpose.msra.mxu0 0
        %3173 = vmatprep.subr.bf16.mxu0 0
        %3174 = vmatpush2.bf16.xpose.msra.mxu0 0
        %3175 = vmatprep.subr.bf16.mxu0 0
        %3176 = vmatpush2.bf16.xpose.msra.mxu0 0
        %3177 = vmatprep.subr.bf16.mxu0 0
        %3178 = vmatpush2.bf16.xpose.msra.mxu0 0
        %3179 = vmatprep.subr.bf16.mxu0 0
        %3180 = vmatpush2.bf16.xpose.msra.mxu0 0
        %3181 = vmatprep.subr.bf16.mxu0 0
        %3182 = vmatpush2.bf16.xpose.msra.mxu0 0
        %3183 = vmatprep.mubr.bf16.mxu0 %v1541
        %3184 = vmatmul.mubr.bf16.gmra.mxu0 %v1540
        %v3185 = vpop.f32.mrf.mxu0
        %v3186 = vadd.f32 %v3089, %v3185
        %v3187 = vpop.f32.mrf.mxu0
        %v3188 = vpop.f32.mrf.mxu0
        %v3189 = vadd.f32 %v3092, %v3188
        %v3190 = vpop.f32.mrf.mxu0
        %3191 = vmatprep.mubr.bf16.mxu0 %v1549
        %3192 = vmatmul.mubr.bf16.gmra.mxu0 %v1548
        %v3193 = vpop.f32.mrf.mxu0
        %v3194 = vadd.f32 %v3097, %v3193
        %v3195 = vpop.f32.mrf.mxu0
        %v3196 = vpop.f32.mrf.mxu0
        %v3197 = vadd.f32 %v3100, %v3196
        %v3198 = vpop.f32.mrf.mxu0
        %3199 = vmatprep.mubr.bf16.mxu0 %v1557
        %3200 = vmatmul.mubr.bf16.gmra.mxu0 %v1556
        %v3201 = vpop.f32.mrf.mxu0
        %v3202 = vadd.f32 %v3105, %v3201
        %v3203 = vpop.f32.mrf.mxu0
        %v3204 = vpop.f32.mrf.mxu0
        %v3205 = vadd.f32 %v3108, %v3204
        %v3206 = vpop.f32.mrf.mxu0
        %3207 = vmatprep.mubr.bf16.mxu0 %v1565
        %3208 = vmatmul.mubr.bf16.gmra.mxu0 %v1564
        %v3209 = vpop.f32.mrf.mxu0
        %v3210 = vadd.f32 %v3113, %v3209
        %v3211 = vpop.f32.mrf.mxu0
        %v3212 = vpop.f32.mrf.mxu0
        %v3213 = vadd.f32 %v3116, %v3212
        %v3214 = vpop.f32.mrf.mxu0
        %3215 = vmatprep.mubr.bf16.mxu0 %v1573
        %3216 = vmatmul.mubr.bf16.gmra.mxu0 %v1572
        %v3217 = vpop.f32.mrf.mxu0
        %v3218 = vadd.f32 %v3121, %v3217
        %v3219 = vpop.f32.mrf.mxu0
        %v3220 = vpop.f32.mrf.mxu0
        %v3221 = vadd.f32 %v3124, %v3220
        %v3222 = vpop.f32.mrf.mxu0
        %3223 = vmatprep.mubr.bf16.mxu0 %v1581
        %3224 = vmatmul.mubr.bf16.gmra.mxu0 %v1580
        %v3225 = vpop.f32.mrf.mxu0
        %v3226 = vadd.f32 %v3129, %v3225
        %v3227 = vpop.f32.mrf.mxu0
        %v3228 = vpop.f32.mrf.mxu0
        %v3229 = vadd.f32 %v3132, %v3228
        %v3230 = vpop.f32.mrf.mxu0
        %3231 = vmatprep.mubr.bf16.mxu0 %v1589
        %3232 = vmatmul.mubr.bf16.gmra.mxu0 %v1588
        %v3233 = vpop.f32.mrf.mxu0
        %v3234 = vadd.f32 %v3137, %v3233
        %v3235 = vpop.f32.mrf.mxu0
        %v3236 = vpop.f32.mrf.mxu0
        %v3237 = vadd.f32 %v3140, %v3236
        %v3238 = vpop.f32.mrf.mxu0
        %3239 = vmatprep.mubr.bf16.mxu0 %v1597
        %3240 = vmatmul.mubr.bf16.gmra.mxu0 %v1596
        %v3241 = vpop.f32.mrf.mxu0
        %v3242 = vadd.f32 %v3145, %v3241
        %v3243 = vpop.f32.mrf.mxu0
        %v3244 = vpop.f32.mrf.mxu0
        %v3245 = vadd.f32 %v3148, %v3244
        %v3246 = vpop.f32.mrf.mxu0
        %3247 = vdwg.mxu0
        %3248 = vmatprep.subr.bf16.mxu0 0
        %3249 = vmatpush1.bf16.xpose.msra.mxu0 0
        %3250 = vmatprep.subr.bf16.mxu0 0
        %3251 = vmatpush1.bf16.xpose.msra.mxu0 0
        %3252 = vmatprep.subr.bf16.mxu0 0
        %3253 = vmatpush1.bf16.xpose.msra.mxu0 0
        %3254 = vmatprep.subr.bf16.mxu0 0
        %3255 = vmatpush1.bf16.xpose.msra.mxu0 0
        %3256 = vmatprep.subr.bf16.mxu0 0
        %3257 = vmatpush1.bf16.xpose.msra.mxu0 0
        %3258 = vmatprep.subr.bf16.mxu0 0
        %3259 = vmatpush1.bf16.xpose.msra.mxu0 0
        %3260 = vmatprep.subr.bf16.mxu0 0
        %3261 = vmatpush1.bf16.xpose.msra.mxu0 0
        %3262 = vmatprep.subr.bf16.mxu0 %v1407
        %3263 = vmatpush1.bf16.xpose.msra.mxu0 %v1406
        %3264 = vmatprep.subr.bf16.mxu0 0
        %3265 = vmatpush2.bf16.xpose.msra.mxu0 0
        %3266 = vmatprep.subr.bf16.mxu0 0
        %3267 = vmatpush2.bf16.xpose.msra.mxu0 0
        %3268 = vmatprep.subr.bf16.mxu0 0
        %3269 = vmatpush2.bf16.xpose.msra.mxu0 0
        %3270 = vmatprep.subr.bf16.mxu0 0
        %3271 = vmatpush2.bf16.xpose.msra.mxu0 0
        %3272 = vmatprep.subr.bf16.mxu0 0
        %3273 = vmatpush2.bf16.xpose.msra.mxu0 0
        %3274 = vmatprep.subr.bf16.mxu0 0
        %3275 = vmatpush2.bf16.xpose.msra.mxu0 0
        %3276 = vmatprep.subr.bf16.mxu0 0
        %3277 = vmatpush2.bf16.xpose.msra.mxu0 0
        %3278 = vmatprep.subr.bf16.mxu0 0
        %3279 = vmatpush2.bf16.xpose.msra.mxu0 0
        %3280 = vmatprep.mubr.bf16.mxu0 %v1543
        %3281 = vmatmul.mubr.bf16.gmra.mxu0 %v1542
        %v3282 = vpop.f32.mrf.mxu0
        %v3283 = vadd.f32 %v3186, %v3282
        %v3284 = vpop.f32.mrf.mxu0
        %v3285 = vpop.f32.mrf.mxu0
        %v3286 = vadd.f32 %v3189, %v3285
        %v3287 = vpop.f32.mrf.mxu0
        %3288 = vmatprep.mubr.bf16.mxu0 %v1551
        %3289 = vmatmul.mubr.bf16.gmra.mxu0 %v1550
        %v3290 = vpop.f32.mrf.mxu0
        %v3291 = vadd.f32 %v3194, %v3290
        %v3292 = vpop.f32.mrf.mxu0
        %v3293 = vpop.f32.mrf.mxu0
        %v3294 = vadd.f32 %v3197, %v3293
        %v3295 = vpop.f32.mrf.mxu0
        %3296 = vmatprep.mubr.bf16.mxu0 %v1559
        %3297 = vmatmul.mubr.bf16.gmra.mxu0 %v1558
        %v3298 = vpop.f32.mrf.mxu0
        %v3299 = vadd.f32 %v3202, %v3298
        %v3300 = vpop.f32.mrf.mxu0
        %v3301 = vpop.f32.mrf.mxu0
        %v3302 = vadd.f32 %v3205, %v3301
        %v3303 = vpop.f32.mrf.mxu0
        %3304 = vmatprep.mubr.bf16.mxu0 %v1567
        %3305 = vmatmul.mubr.bf16.gmra.mxu0 %v1566
        %v3306 = vpop.f32.mrf.mxu0
        %v3307 = vadd.f32 %v3210, %v3306
        %v3308 = vpop.f32.mrf.mxu0
        %v3309 = vpop.f32.mrf.mxu0
        %v3310 = vadd.f32 %v3213, %v3309
        %v3311 = vpop.f32.mrf.mxu0
        %3312 = vmatprep.mubr.bf16.mxu0 %v1575
        %3313 = vmatmul.mubr.bf16.gmra.mxu0 %v1574
        %v3314 = vpop.f32.mrf.mxu0
        %v3315 = vadd.f32 %v3218, %v3314
        %v3316 = vpop.f32.mrf.mxu0
        %v3317 = vpop.f32.mrf.mxu0
        %v3318 = vadd.f32 %v3221, %v3317
        %v3319 = vpop.f32.mrf.mxu0
        %3320 = vmatprep.mubr.bf16.mxu0 %v1583
        %3321 = vmatmul.mubr.bf16.gmra.mxu0 %v1582
        %v3322 = vpop.f32.mrf.mxu0
        %v3323 = vadd.f32 %v3226, %v3322
        %v3324 = vpop.f32.mrf.mxu0
        %v3325 = vpop.f32.mrf.mxu0
        %v3326 = vadd.f32 %v3229, %v3325
        %v3327 = vpop.f32.mrf.mxu0
        %3328 = vmatprep.mubr.bf16.mxu0 %v1591
        %3329 = vmatmul.mubr.bf16.gmra.mxu0 %v1590
        %v3330 = vpop.f32.mrf.mxu0
        %v3331 = vadd.f32 %v3234, %v3330
        %v3332 = vpop.f32.mrf.mxu0
        %v3333 = vpop.f32.mrf.mxu0
        %v3334 = vadd.f32 %v3237, %v3333
        %v3335 = vpop.f32.mrf.mxu0
        %3336 = vmatprep.mubr.bf16.mxu0 %v1599
        %3337 = vmatmul.mubr.bf16.gmra.mxu0 %v1598
        %v3338 = vpop.f32.mrf.mxu0
        %v3339 = vadd.f32 %v3242, %v3338
        %v3340 = vpop.f32.mrf.mxu0
        %v3341 = vpop.f32.mrf.mxu0
        %v3342 = vadd.f32 %v3245, %v3341
        %v3343 = vpop.f32.mrf.mxu0
        %3344 = vdwg.mxu0
        %3345 = vmatprep.subr.bf16.mxu0 0
        %3346 = vmatpush1.bf16.xpose.msra.mxu0 0
        %3347 = vmatprep.subr.bf16.mxu0 0
        %3348 = vmatpush1.bf16.xpose.msra.mxu0 0
        %3349 = vmatprep.subr.bf16.mxu0 0
        %3350 = vmatpush1.bf16.xpose.msra.mxu0 0
        %3351 = vmatprep.subr.bf16.mxu0 0
        %3352 = vmatpush1.bf16.xpose.msra.mxu0 0
        %3353 = vmatprep.subr.bf16.mxu0 0
        %3354 = vmatpush1.bf16.xpose.msra.mxu0 0
        %3355 = vmatprep.subr.bf16.mxu0 0
        %3356 = vmatpush1.bf16.xpose.msra.mxu0 0
        %3357 = vmatprep.subr.bf16.mxu0 0
        %3358 = vmatpush1.bf16.xpose.msra.mxu0 0
        %3359 = vmatprep.subr.bf16.mxu0 %v1409
        %3360 = vmatpush1.bf16.xpose.msra.mxu0 %v1408
        %3361 = vmatprep.subr.bf16.mxu0 0
        %3362 = vmatpush2.bf16.xpose.msra.mxu0 0
        %3363 = vmatprep.subr.bf16.mxu0 0
        %3364 = vmatpush2.bf16.xpose.msra.mxu0 0
        %3365 = vmatprep.subr.bf16.mxu0 0
        %3366 = vmatpush2.bf16.xpose.msra.mxu0 0
        %3367 = vmatprep.subr.bf16.mxu0 0
        %3368 = vmatpush2.bf16.xpose.msra.mxu0 0
        %3369 = vmatprep.subr.bf16.mxu0 0
        %3370 = vmatpush2.bf16.xpose.msra.mxu0 0
        %3371 = vmatprep.subr.bf16.mxu0 0
        %3372 = vmatpush2.bf16.xpose.msra.mxu0 0
        %3373 = vmatprep.subr.bf16.mxu0 0
        %3374 = vmatpush2.bf16.xpose.msra.mxu0 0
        %3375 = vmatprep.subr.bf16.mxu0 0
        %3376 = vmatpush2.bf16.xpose.msra.mxu0 0
        %3377 = vmatprep.mubr.bf16.mxu0 %v1545
        %3378 = vmatmul.mubr.bf16.gmra.mxu0 %v1544
        %v3379 = vpop.f32.mrf.mxu0
        %v3380 = vadd.f32 %v3283, %v3379
        %v3381 = vpop.f32.mrf.mxu0
        %v3382 = vpop.f32.mrf.mxu0
        %v3383 = vadd.f32 %v3286, %v3382
        %v3384 = vpop.f32.mrf.mxu0
        %3385 = vmatprep.mubr.bf16.mxu0 %v1553
        %3386 = vmatmul.mubr.bf16.gmra.mxu0 %v1552
        %v3387 = vpop.f32.mrf.mxu0
        %v3388 = vadd.f32 %v3291, %v3387
        %v3389 = vpop.f32.mrf.mxu0
        %v3390 = vpop.f32.mrf.mxu0
        %v3391 = vadd.f32 %v3294, %v3390
        %v3392 = vpop.f32.mrf.mxu0
        %3393 = vmatprep.mubr.bf16.mxu0 %v1561
        %3394 = vmatmul.mubr.bf16.gmra.mxu0 %v1560
        %v3395 = vpop.f32.mrf.mxu0
        %v3396 = vadd.f32 %v3299, %v3395
        %v3397 = vpop.f32.mrf.mxu0
        %v3398 = vpop.f32.mrf.mxu0
        %v3399 = vadd.f32 %v3302, %v3398
        %v3400 = vpop.f32.mrf.mxu0
        %3401 = vmatprep.mubr.bf16.mxu0 %v1569
        %3402 = vmatmul.mubr.bf16.gmra.mxu0 %v1568
        %v3403 = vpop.f32.mrf.mxu0
        %v3404 = vadd.f32 %v3307, %v3403
        %v3405 = vpop.f32.mrf.mxu0
        %v3406 = vpop.f32.mrf.mxu0
        %v3407 = vadd.f32 %v3310, %v3406
        %v3408 = vpop.f32.mrf.mxu0
        %3409 = vmatprep.mubr.bf16.mxu0 %v1577
        %3410 = vmatmul.mubr.bf16.gmra.mxu0 %v1576
        %v3411 = vpop.f32.mrf.mxu0
        %v3412 = vadd.f32 %v3315, %v3411
        %v3413 = vpop.f32.mrf.mxu0
        %v3414 = vpop.f32.mrf.mxu0
        %v3415 = vadd.f32 %v3318, %v3414
        %v3416 = vpop.f32.mrf.mxu0
        %3417 = vmatprep.mubr.bf16.mxu0 %v1585
        %3418 = vmatmul.mubr.bf16.gmra.mxu0 %v1584
        %v3419 = vpop.f32.mrf.mxu0
        %v3420 = vadd.f32 %v3323, %v3419
        %v3421 = vpop.f32.mrf.mxu0
        %v3422 = vpop.f32.mrf.mxu0
        %v3423 = vadd.f32 %v3326, %v3422
        %v3424 = vpop.f32.mrf.mxu0
        %3425 = vmatprep.mubr.bf16.mxu0 %v1593
        %3426 = vmatmul.mubr.bf16.gmra.mxu0 %v1592
        %v3427 = vpop.f32.mrf.mxu0
        %v3428 = vadd.f32 %v3331, %v3427
        %v3429 = vpop.f32.mrf.mxu0
        %v3430 = vpop.f32.mrf.mxu0
        %v3431 = vadd.f32 %v3334, %v3430
        %v3432 = vpop.f32.mrf.mxu0
        %3433 = vmatprep.mubr.bf16.mxu0 %v1601
        %3434 = vmatmul.mubr.bf16.gmra.mxu0 %v1600
        %v3435 = vpop.f32.mrf.mxu0
        %v3436 = vadd.f32 %v3339, %v3435
        %v3437 = vpop.f32.mrf.mxu0
        %v3438 = vpop.f32.mrf.mxu0
        %v3439 = vadd.f32 %v3342, %v3438
        %v3440 = vpop.f32.mrf.mxu0
        %3441 = vdwg.mxu0
        %3442 = vst [vmem:[%s231] sm:$0xff] %v2072
        %3443 = vst [vmem:[%s231 + $0x8] sm:$0xff] %v2074
        %3444 = vst [vmem:[%s231 + $0x10] sm:$0xff] %v2524
        %3445 = vst [vmem:[%s231 + $0x18] sm:$0xff] %v2526
        %3446 = vst [vmem:[%s231 + $0x20] sm:$0xff] %v2976
        %3447 = vst [vmem:[%s231 + $0x28] sm:$0xff] %v2978
        %vm3448 = vcmask 130048
        %3449 = vst.msk [vmem:[%s231 + $0x30] sm:$0xff] %vm3448, %v3380
        %3450 = vst [vmem:[%s231 + $0x38] sm:$0xff] %v2076
        %3451 = vst [vmem:[%s231 + $0x40] sm:$0xff] %v2078
        %3452 = vst [vmem:[%s231 + $0x48] sm:$0xff] %v2528
        %3453 = vst [vmem:[%s231 + $0x50] sm:$0xff] %v2530
        %3454 = vst [vmem:[%s231 + $0x58] sm:$0xff] %v2980
        %3455 = vst [vmem:[%s231 + $0x60] sm:$0xff] %v2982
        %3456 = vst.msk [vmem:[%s231 + $0x68] sm:$0xff] %vm3448, %v3383
        %3457 = vst [vmem:[%s231 + $0x70] sm:$0xff] %v2082
        %3458 = vst [vmem:[%s231 + $0x78] sm:$0xff] %v2084
        %3459 = vst [vmem:[%s231 + $0x80] sm:$0xff] %v2534
        %3460 = vst [vmem:[%s231 + $0x88] sm:$0xff] %v2536
        %3461 = vst [vmem:[%s231 + $0x90] sm:$0xff] %v2986
        %3462 = vst [vmem:[%s231 + $0x98] sm:$0xff] %v2988
        %3463 = vst.msk [vmem:[%s231 + $0xa0] sm:$0xff] %vm3448, %v3388
        %3464 = vst [vmem:[%s231 + $0xa8] sm:$0xff] %v2086
        %3465 = vst [vmem:[%s231 + $0xb0] sm:$0xff] %v2088
        %3466 = vst [vmem:[%s231 + $0xb8] sm:$0xff] %v2538
        %3467 = vst [vmem:[%s231 + $0xc0] sm:$0xff] %v2540
        %3468 = vst [vmem:[%s231 + $0xc8] sm:$0xff] %v2990
        %3469 = vst [vmem:[%s231 + $0xd0] sm:$0xff] %v2992
        %3470 = vst.msk [vmem:[%s231 + $0xd8] sm:$0xff] %vm3448, %v3391
        %3471 = vst [vmem:[%s231 + $0xe0] sm:$0xff] %v2092
        %3472 = vst [vmem:[%s231 + $0xe8] sm:$0xff] %v2094
        %3473 = vst [vmem:[%s231 + $0xf0] sm:$0xff] %v2544
        %3474 = vst [vmem:[%s231 + $0xf8] sm:$0xff] %v2546
        %3475 = vst [vmem:[%s231 + $0x100] sm:$0xff] %v2996
        %3476 = vst [vmem:[%s231 + $0x108] sm:$0xff] %v2998
        %3477 = vst.msk [vmem:[%s231 + $0x110] sm:$0xff] %vm3448, %v3396
        %3478 = vst [vmem:[%s231 + $0x118] sm:$0xff] %v2096
        %3479 = vst [vmem:[%s231 + $0x120] sm:$0xff] %v2098
        %3480 = vst [vmem:[%s231 + $0x128] sm:$0xff] %v2548
        %3481 = vst [vmem:[%s231 + $0x130] sm:$0xff] %v2550
        %3482 = vst [vmem:[%s231 + $0x138] sm:$0xff] %v3000
        %3483 = vst [vmem:[%s231 + $0x140] sm:$0xff] %v3002
        %3484 = vst.msk [vmem:[%s231 + $0x148] sm:$0xff] %vm3448, %v3399
        %3485 = vst [vmem:[%s231 + $0x150] sm:$0xff] %v2102
        %3486 = vst [vmem:[%s231 + $0x158] sm:$0xff] %v2104
        %3487 = vst [vmem:[%s231 + $0x160] sm:$0xff] %v2554
        %3488 = vst [vmem:[%s231 + $0x168] sm:$0xff] %v2556
        %3489 = vst [vmem:[%s231 + $0x170] sm:$0xff] %v3006
        %3490 = vst [vmem:[%s231 + $0x178] sm:$0xff] %v3008
        %3491 = vst.msk [vmem:[%s231 + $0x180] sm:$0xff] %vm3448, %v3404
        %3492 = vst [vmem:[%s231 + $0x188] sm:$0xff] %v2106
        %3493 = vst [vmem:[%s231 + $0x190] sm:$0xff] %v2108
        %3494 = vst [vmem:[%s231 + $0x198] sm:$0xff] %v2558
        %3495 = vst [vmem:[%s231 + $0x1a0] sm:$0xff] %v2560
        %3496 = vst [vmem:[%s231 + $0x1a8] sm:$0xff] %v3010
        %3497 = vst [vmem:[%s231 + $0x1b0] sm:$0xff] %v3012
        %3498 = vst.msk [vmem:[%s231 + $0x1b8] sm:$0xff] %vm3448, %v3407
        %3499 = vst [vmem:[%s231 + $0x1c0] sm:$0xff] %v2112
        %3500 = vst [vmem:[%s231 + $0x1c8] sm:$0xff] %v2114
        %3501 = vst [vmem:[%s231 + $0x1d0] sm:$0xff] %v2564
        %3502 = vst [vmem:[%s231 + $0x1d8] sm:$0xff] %v2566
        %3503 = vst [vmem:[%s231 + $0x1e0] sm:$0xff] %v3016
        %3504 = vst [vmem:[%s231 + $0x1e8] sm:$0xff] %v3018
        %3505 = vst.msk [vmem:[%s231 + $0x1f0] sm:$0xff] %vm3448, %v3412
        %3506 = vst [vmem:[%s231 + $0x1f8] sm:$0xff] %v2116
        %3507 = vst [vmem:[%s231 + $0x200] sm:$0xff] %v2118
        %3508 = vst [vmem:[%s231 + $0x208] sm:$0xff] %v2568
        %3509 = vst [vmem:[%s231 + $0x210] sm:$0xff] %v2570
        %3510 = vst [vmem:[%s231 + $0x218] sm:$0xff] %v3020
        %3511 = vst [vmem:[%s231 + $0x220] sm:$0xff] %v3022
        %3512 = vst.msk [vmem:[%s231 + $0x228] sm:$0xff] %vm3448, %v3415
        %3513 = vst [vmem:[%s231 + $0x230] sm:$0xff] %v2122
        %3514 = vst [vmem:[%s231 + $0x238] sm:$0xff] %v2124
        %3515 = vst [vmem:[%s231 + $0x240] sm:$0xff] %v2574
        %3516 = vst [vmem:[%s231 + $0x248] sm:$0xff] %v2576
        %3517 = vst [vmem:[%s231 + $0x250] sm:$0xff] %v3026
        %3518 = vst [vmem:[%s231 + $0x258] sm:$0xff] %v3028
        %3519 = vst.msk [vmem:[%s231 + $0x260] sm:$0xff] %vm3448, %v3420
        %3520 = vst [vmem:[%s231 + $0x268] sm:$0xff] %v2126
        %3521 = vst [vmem:[%s231 + $0x270] sm:$0xff] %v2128
        %3522 = vst [vmem:[%s231 + $0x278] sm:$0xff] %v2578
        %3523 = vst [vmem:[%s231 + $0x280] sm:$0xff] %v2580
        %3524 = vst [vmem:[%s231 + $0x288] sm:$0xff] %v3030
        %3525 = vst [vmem:[%s231 + $0x290] sm:$0xff] %v3032
        %3526 = vst.msk [vmem:[%s231 + $0x298] sm:$0xff] %vm3448, %v3423
        %3527 = vst [vmem:[%s231 + $0x2a0] sm:$0xff] %v2132
        %3528 = vst [vmem:[%s231 + $0x2a8] sm:$0xff] %v2134
        %3529 = vst [vmem:[%s231 + $0x2b0] sm:$0xff] %v2584
        %3530 = vst [vmem:[%s231 + $0x2b8] sm:$0xff] %v2586
        %3531 = vst [vmem:[%s231 + $0x2c0] sm:$0xff] %v3036
        %3532 = vst [vmem:[%s231 + $0x2c8] sm:$0xff] %v3038
        %3533 = vst.msk [vmem:[%s231 + $0x2d0] sm:$0xff] %vm3448, %v3428
        %3534 = vst [vmem:[%s231 + $0x2d8] sm:$0xff] %v2136
        %3535 = vst [vmem:[%s231 + $0x2e0] sm:$0xff] %v2138
        %3536 = vst [vmem:[%s231 + $0x2e8] sm:$0xff] %v2588
        %3537 = vst [vmem:[%s231 + $0x2f0] sm:$0xff] %v2590
        %3538 = vst [vmem:[%s231 + $0x2f8] sm:$0xff] %v3040
        %3539 = vst [vmem:[%s231 + $0x300] sm:$0xff] %v3042
        %3540 = vst.msk [vmem:[%s231 + $0x308] sm:$0xff] %vm3448, %v3431
        %3541 = vst [vmem:[%s231 + $0x310] sm:$0xff] %v2142
        %3542 = vst [vmem:[%s231 + $0x318] sm:$0xff] %v2144
        %3543 = vst [vmem:[%s231 + $0x320] sm:$0xff] %v2594
        %3544 = vst [vmem:[%s231 + $0x328] sm:$0xff] %v2596
        %3545 = vst [vmem:[%s231 + $0x330] sm:$0xff] %v3046
        %3546 = vst [vmem:[%s231 + $0x338] sm:$0xff] %v3048
        %3547 = vst.msk [vmem:[%s231 + $0x340] sm:$0xff] %vm3448, %v3436
        %3548 = vst [vmem:[%s231 + $0x348] sm:$0xff] %v2146
        %3549 = vst [vmem:[%s231 + $0x350] sm:$0xff] %v2148
        %3550 = vst [vmem:[%s231 + $0x358] sm:$0xff] %v2598
        %3551 = vst [vmem:[%s231 + $0x360] sm:$0xff] %v2600
        %3552 = vst [vmem:[%s231 + $0x368] sm:$0xff] %v3050
        %3553 = vst [vmem:[%s231 + $0x370] sm:$0xff] %v3052
        %3554 = vst.msk [vmem:[%s231 + $0x378] sm:$0xff] %vm3448, %v3439
        %s3555 = smul.u32 16, %s18
        %p3556 = scmp.lt.s32.totalorder %s3555, 31
        %s3557 = scalar_select %p3556, %s3555, 31
        %s3558 = smul.addr %s3557, 7
        %s3559 = smul.addr %s3558, 8
        %s3560 = scalar_lea.vmem %s3, %s3559
        // Predicated region
        $region41: #{tpu_custom_call.1} parent=31 // pred_check
          %p3561 = pneg %p109
        $region42: #{tpu_custom_call.1} parent=31 // pred_check_branch
          %3563 = sbr.rel (%p3561) target = $region44
        $region43: #{tpu_custom_call.1} parent=31 // pred_region
          %s3564 = smul.u32 16, %s18
        $region44: #{tpu_custom_call.1} parent=31 // pred_fallthru
          _
      $region32: #{tpu_custom_call.1} parent=5 // pred_fallthru
        _
      %p3565 = scmp.le.s32.totalorder 2, %s13
      // Predicated region
      $region45: #{tpu_custom_call.1} parent=5 // pred_check
        %p3566 = pneg %p3565
      $region46: #{tpu_custom_call.1} parent=5 // pred_check_branch
        %3568 = sbr.rel (%p3566) target = $region48
      $region47: #{tpu_custom_call.1} parent=5 // pred_region
        %s3569 = ssub.s32 %s13, 2
        // Predicated region
        $region49: #{tpu_custom_call.1} parent=47 // pred_check
          %p3570 = pneg %p115
        $region50: #{tpu_custom_call.1} parent=47 // pred_check_branch
          %3572 = sbr.rel (%p3570) target = $region52
        $region51: #{tpu_custom_call.1} parent=47 // pred_region
          %s3573 = smul.u32 16, %s19
          %p3574 = scmp.lt.s32.totalorder %s3573, 31
          %s3575 = scalar_select %p3574, %s3573, 31
          %s3576 = smul.addr %s3575, 7
          %s3577 = smul.addr %s3576, 8
          %s3578 = scalar_lea.vmem %s3, %s3577
        $region52: #{tpu_custom_call.1} parent=47 // pred_fallthru
          _
      $region48: #{tpu_custom_call.1} parent=5 // pred_fallthru
        _
    $region6: #{tpu_custom_call.1} parent=1 // loop_footer
      %s17 = sadd.s32 1, %s13
    $region7: #{tpu_custom_call.1} parent=1 // loop_footer_branch
      %12 = sbr.rel target = $region3
    $region8: #{tpu_custom_call.1} parent=1 // loop_exit
      _
    %3579 = vsyncpa [#allocation3], 1
    %s3580 = scalar_lea.sflag [#allocation3], 1
    %3581 = vsyncpa %s3580, 1
    %3582 = vsyncpa [#allocation5], 1
    %s3583 = scalar_lea.sflag [#allocation5], 1
    %3584 = vsyncpa %s3583, 1

</llo_original>
